<compile_context>
chip_gen: v7x
topology: tpu7x:2x2x1
jax: 0.10.0
libtpu: 0.0.40
codegen_flags: <defaults>
</compile_context>

<pallas_src>
import functools
import math

import jax
import jax.numpy as jnp
from jax import lax
from jax.experimental import pallas as pl
from jax.experimental.pallas import tpu as pltpu


def _round_up(x, m):
    return ((x + m - 1) // m) * m


# -----------------------------------------------------------------------------
# Pallas kernel: implicit-GEMM conv + fused eval-mode BN + ReLU[6] epilogue.
#   x_ref     : (1, Hp, Wp, Cin)   bf16  full padded NHWC image of batch b
#                                        (resident across the row-tile axis)
#   w_ref     : (kh*kw*Cin, Cout)  bf16  conv weight with BN scale folded in
#   shift_ref : (1, Cout)          f32   folded BN shift
#   o_ref     : (1, TH, Wo, Cout)  f32
# -----------------------------------------------------------------------------
def _conv_bn_relu_kernel(x_ref, w_ref, shift_ref, o_ref, *,
                         kh, kw, stride, dilation, th, wo, relu6):
    cin = x_ref.shape[-1]
    cout = w_ref.shape[-1]
    t = pl.program_id(1)
    row0 = t * (th * stride)          # first input row of this output-row tile

    # Implicit GEMM: accumulate kh*kw shifted taps x per-tap weight slices.
    acc = jnp.zeros((th * wo, cout), jnp.float32)
    for i in range(kh):
        hs = row0 + i * dilation
        for j in range(kw):
            ws = j * dilation
            if stride == 1:
                tap = x_ref[0, pl.ds(hs, th), pl.ds(ws, wo), :]
            else:
                # TODO(synk): stride > 1 uses strided in-kernel tap loads; it
                # is functional by construction but not exercised below.
                tap = x_ref[0, pl.ds(hs, th, stride=stride),
                            pl.ds(ws, wo, stride=stride), :]
            wk = w_ref[pl.ds((i * kw + j) * cin, cin), :]          # (cin, cout)
            acc += jnp.dot(tap.reshape(th * wo, cin), wk,
                           preferred_element_type=jnp.float32)

    y = acc + shift_ref[...]          # fused eval-mode BN (scale folded into w)
    y = jnp.maximum(y, 0.0)           # fused ReLU
    if relu6:
        y = jnp.minimum(y, 6.0)       # fused ReLU6 clamp
    o_ref[...] = y.reshape(1, th, wo, cout).astype(o_ref.dtype)


@functools.lru_cache(maxsize=None)
def _build_conv_bn_relu(Nb, Hp, Wp, Cin, Ho_pad, Wo, Cout, K,
                        kh, kw, stride, dilation, th, relu6, vmem_limit):
    grid = (Nb, Ho_pad // th)
    kernel = functools.partial(
        _conv_bn_relu_kernel, kh=kh, kw=kw, stride=stride, dilation=dilation,
        th=th, wo=Wo, relu6=relu6)
    return pl.pallas_call(
        kernel,
        out_shape=jax.ShapeDtypeStruct((Nb, Ho_pad, Wo, Cout), jnp.float32),
        grid_spec=pltpu.PrefetchScalarGridSpec(
            num_scalar_prefetch=0,
            grid=grid,
            in_specs=[
                # Full padded image of one batch element; block index constant
                # across the row-tile axis -> DMA'd into VMEM once per image.
                pl.BlockSpec((1, Hp, Wp, Cin), lambda b, t: (b, 0, 0, 0)),
                # Folded (BN-scale * conv) weight, fully resident (no K pad).
                pl.BlockSpec((K, Cout), lambda b, t: (0, 0)),
                # Folded BN shift, fully resident.
                pl.BlockSpec((1, Cout), lambda b, t: (0, 0)),
            ],
            out_specs=pl.BlockSpec((1, th, Wo, Cout), lambda b, t: (b, t, 0, 0)),
        ),
        compiler_params=pltpu.CompilerParams(
            dimension_semantics=("parallel", "parallel"),
            vmem_limit_bytes=vmem_limit,
        ),
    )


def _pick_th(Ho, Wo, Nb):
    # Target ~1024 output pixels (M = TH*Wo) per grid step, bounded by Ho.
    th = max(1, min(Ho, max(1, 1024 // max(Wo, 1))))
    # v7x has two TensorCores: keep at least two parallel grid tiles.
    if Nb * ((Ho + th - 1) // th) < 2 and Ho >= 2:
        th = (Ho + 1) // 2
    return th


# -----------------------------------------------------------------------------
# _ConvBNReLU parameters: conv weight + BN stats, folded ONCE for the kernel.
# -----------------------------------------------------------------------------
def init_conv_bn_relu_params(key, in_channels, out_channels, kernel_size,
                             stride=1, padding=0, dilation=1, groups=1,
                             relu6=False, eps=1e-5):
    if groups != 1:
        # TODO(synk): grouped conv (groups > 1) is not lowered to the implicit GEMM.
        raise NotImplementedError("groups != 1 not supported")
    kh = kw = kernel_size
    k1, k2, k3, k4, k5 = jax.random.split(key, 5)
    fan_in = in_channels * kh * kw
    w = jax.random.normal(k1, (out_channels, in_channels, kh, kw),
                          jnp.float32) / math.sqrt(fan_in)
    gamma = 1.0 + 0.1 * jax.random.normal(k2, (out_channels,), jnp.float32)
    beta = 0.1 * jax.random.normal(k3, (out_channels,), jnp.float32)
    r_mean = 0.1 * jax.random.normal(k4, (out_channels,), jnp.float32)
    r_var = 1.0 + 0.1 * jax.random.uniform(k5, (out_channels,), jnp.float32)

    # Fold eval-mode BN into per-channel scale/shift; fold the scale into the
    # GEMM weight so the kernel epilogue is just (+ shift, clamp).
    scale = gamma * lax.rsqrt(r_var + eps)
    shift = beta - r_mean * scale
    K = kh * kw * in_channels
    # (kh, kw, Cin, Cout) flattening matches the in-kernel tap ordering.
    B = jnp.transpose(w, (2, 3, 1, 0)).reshape(K, out_channels)
    Bp = (B * scale[None, :]).astype(jnp.bfloat16)
    shift_p = shift.reshape(1, out_channels).astype(jnp.float32)

    return {
        'wshape': (out_channels, in_channels, kh, kw),
        'conv': (stride, padding, dilation),
        'relu6': relu6,
        'Bp': Bp, 'shift_p': shift_p, 'K': K,
        # kept only for the pure-JAX f32 reference check:
        'w_f32': w, 'bn_scale': scale, 'bn_shift': shift,
    }


# -----------------------------------------------------------------------------
# Forward: bf16 NHWC pad (only XLA prep) -> implicit-GEMM Pallas kernel -> NCHW
# -----------------------------------------------------------------------------
def conv_bn_relu_forward(p, x):
    """x: (N, Cin, H, W) f32 -> (N, Cout, Ho, Wo) f32 (== _ConvBNReLU.forward, eval BN)."""
    Nb, Cin, H, W = x.shape
    Cout, Cin_w, kh, kw = p['wshape']
    stride, padding, dilation = p['conv']
    assert Cin == Cin_w
    Ho = (H + 2 * padding - dilation * (kh - 1) - 1) // stride + 1
    Wo = (W + 2 * padding - dilation * (kw - 1) - 1) // stride + 1

    th = _pick_th(Ho, Wo, Nb)
    Ho_pad = _round_up(Ho, th)

    # Only XLA-side prep: bf16 cast + NCHW->NHWC transpose + zero pad.  Extra
    # bottom rows cover the Ho -> Ho_pad row-tile rounding (outputs sliced off).
    Wp = W + 2 * padding
    Hp = max((Ho_pad - 1) * stride + dilation * (kh - 1) + 1, H + 2 * padding)
    xh = jnp.transpose(x.astype(jnp.bfloat16), (0, 2, 3, 1))
    xh = jnp.pad(xh, ((0, 0), (padding, Hp - H - padding),
                      (padding, padding), (0, 0)))

    # VMEM budget: double-buffered image + output blocks, resident weights,
    # and in-flight tap / accumulator values.
    K = p['K']
    x_blk = Hp * Wp * Cin * 2
    out_blk = th * Wo * Cout * 4
    w_bytes = K * Cout * 2 + Cout * 4
    work = th * Wo * (4 * Cin + 4 * Cout)
    need = 2 * x_blk + 2 * out_blk + w_bytes + work
    if need > 36 * 1024 * 1024:
        # TODO(synk): very large images need halo'd row-tile DMA instead of the
        # resident full-image block used here.
        raise NotImplementedError("image too large for resident-image kernel")
    vmem_limit = int(min(max(2 * need, 32 * 1024 * 1024), 48 * 1024 * 1024))

    fn = _build_conv_bn_relu(Nb, Hp, Wp, Cin, Ho_pad, Wo, Cout, K,
                             kh, kw, stride, dilation, th, p['relu6'],
                             vmem_limit)
    out = fn(xh, p['Bp'], p['shift_p'])            # (Nb, Ho_pad, Wo, Cout) NHWC
    out = out[:, :Ho, :, :]
    # NCHW to match the PyTorch module; NHWC consumers should take `out` as-is.
    return jnp.transpose(out, (0, 3, 1, 2))


# -----------------------------------------------------------------------------
# Pure-JAX f32 reference (conv -> eval-mode BN -> ReLU[6]) for validation
# -----------------------------------------------------------------------------
def _reference(p, x):
    stride, padding, dilation = p['conv']
    y = lax.conv_general_dilated(
        x, p['w_f32'], (stride, stride),
        ((padding, padding), (padding, padding)),
        rhs_dilation=(dilation, dilation),
        dimension_numbers=('NCHW', 'OIHW', 'NCHW'))
    y = y * p['bn_scale'][None, :, None, None] + p['bn_shift'][None, :, None, None]
    y = jnp.maximum(y, 0.0)
    if p['relu6']:
        y = jnp.minimum(y, 6.0)
    return y


def _check(p, x, expect_shape):
    out = jax.block_until_ready(conv_bn_relu_forward(p, x))
    assert out.shape == expect_shape, out.shape
    assert bool(jnp.all(jnp.isfinite(out)))
    ref = _reference(p, x)
    rel_err = float(jnp.max(jnp.abs(out - ref)) /
                    (jnp.max(jnp.abs(ref)) + 1e-6))
    assert rel_err < 5e-2, rel_err
    return out


# -----------------------------------------------------------------------------
# Main
# -----------------------------------------------------------------------------
if __name__ == "__main__":
    key = jax.random.PRNGKey(0)
    kx, kp1, kp2, kp3 = jax.random.split(key, 4)

    x = jax.random.normal(kx, (2, 4, 16, 16), jnp.float32)

    # _ConvBNReLU(4, 32, kernel_size=3, stride=1, padding=1)  -- ReLU
    p1 = init_conv_bn_relu_params(kp1, 4, 32, 3, stride=1, padding=1,
                                  relu6=False)
    _check(p1, x, (2, 32, 16, 16))

    # _ConvBNReLU(4, 32, kernel_size=3, stride=1, padding=1, relu6=True)
    p2 = init_conv_bn_relu_params(kp2, 4, 32, 3, stride=1, padding=1,
                                  relu6=True)
    _check(p2, x, (2, 32, 16, 16))

    # _ConvBNReLU(4, 16, kernel_size=1)  -- 1x1 projection
    p3 = init_conv_bn_relu_params(kp3, 4, 16, 1, stride=1, padding=0,
                                  relu6=False)
    _check(p3, x, (2, 16, 16, 16))

    print("KERNEL_OK")
</pallas_src>

<mosaic_0001>
module attributes {stable_mosaic.version = 11 : i64} {
  func.func @_conv_bn_relu_kernel(%arg0: i32, %arg1: i32, %arg2: memref<1x18x18x4xbf16, #tpu.memory_space<vmem>>, %arg3: memref<36x32xbf16, #tpu.memory_space<vmem>>, %arg4: memref<1x32xf32, #tpu.memory_space<vmem>>, %arg5: memref<1x16x16x32xf32, #tpu.memory_space<vmem>>) attributes {dimension_semantics = [#tpu.dimension_semantics<parallel>, #tpu.dimension_semantics<parallel>], iteration_bounds = array<i64: 2, 1>, scalar_prefetch = 0 : i64, scratch_operands = 0 : i64, tpu.core_type = #tpu.core_type<tc>, window_params = [{transform_indices = @transform_0, window_bounds = array<i64: 1, 18, 18, 4>}, {pipeline_mode = #tpu.pipeline_mode<synchronous>, transform_indices = @transform_1, window_bounds = array<i64: 36, 32>}, {pipeline_mode = #tpu.pipeline_mode<synchronous>, transform_indices = @transform_2, window_bounds = array<i64: 1, 32>}, {transform_indices = @transform_3, window_bounds = array<i64: 1, 16, 16, 32>}]} {
    %c16_i32 = arith.constant 16 : i32
    %0 = arith.muli %arg1, %c16_i32 : i32
    %cst = arith.constant 0.000000e+00 : f32
    %1 = vector.broadcast %cst : f32 to vector<256x32xf32>
    %c0_i32 = arith.constant 0 : i32
    %2 = arith.addi %0, %c0_i32 : i32
    %c0 = arith.constant 0 : index
    %3 = arith.index_cast %2 : i32 to index
    %c0_0 = arith.constant 0 : index
    %c0_1 = arith.constant 0 : index
    %4 = vector.load %arg2[%c0, %3, %c0_0, %c0_1] : memref<1x18x18x4xbf16, #tpu.memory_space<vmem>>, vector<1x16x16x4xbf16>
    %5 = vector.shape_cast %4 : vector<1x16x16x4xbf16> to vector<16x16x4xbf16>
    %c0_2 = arith.constant 0 : index
    %c0_3 = arith.constant 0 : index
    %6 = vector.load %arg3[%c0_2, %c0_3] : memref<36x32xbf16, #tpu.memory_space<vmem>>, vector<4x32xbf16>
    %7 = vector.shape_cast %5 : vector<16x16x4xbf16> to vector<256x4xbf16>
    %cst_4 = arith.constant dense<0.000000e+00> : vector<256x32xf32>
    %8 = tpu.matmul %7, %6, %cst_4 {dimension_numbers = #tpu.dot_dimension_numbers<[1], [0], [0], [1], [0, 0, 1, 1], [], []>} : vector<256x4xbf16>, vector<4x32xbf16>, vector<256x32xf32> -> vector<256x32xf32>
    %9 = arith.addf %1, %8 : vector<256x32xf32>
    %c0_5 = arith.constant 0 : index
    %10 = arith.index_cast %2 : i32 to index
    %c1 = arith.constant 1 : index
    %c0_6 = arith.constant 0 : index
    %11 = vector.load %arg2[%c0_5, %10, %c1, %c0_6] : memref<1x18x18x4xbf16, #tpu.memory_space<vmem>>, vector<1x16x16x4xbf16>
    %12 = vector.shape_cast %11 : vector<1x16x16x4xbf16> to vector<16x16x4xbf16>
    %c4 = arith.constant 4 : index
    %c0_7 = arith.constant 0 : index
    %13 = vector.load %arg3[%c4, %c0_7] : memref<36x32xbf16, #tpu.memory_space<vmem>>, vector<4x32xbf16>
    %14 = vector.shape_cast %12 : vector<16x16x4xbf16> to vector<256x4xbf16>
    %cst_8 = arith.constant dense<0.000000e+00> : vector<256x32xf32>
    %15 = tpu.matmul %14, %13, %cst_8 {dimension_numbers = #tpu.dot_dimension_numbers<[1], [0], [0], [1], [0, 0, 1, 1], [], []>} : vector<256x4xbf16>, vector<4x32xbf16>, vector<256x32xf32> -> vector<256x32xf32>
    %16 = arith.addf %9, %15 : vector<256x32xf32>
    %c0_9 = arith.constant 0 : index
    %17 = arith.index_cast %2 : i32 to index
    %c2 = arith.constant 2 : index
    %c0_10 = arith.constant 0 : index
    %18 = vector.load %arg2[%c0_9, %17, %c2, %c0_10] : memref<1x18x18x4xbf16, #tpu.memory_space<vmem>>, vector<1x16x16x4xbf16>
    %19 = vector.shape_cast %18 : vector<1x16x16x4xbf16> to vector<16x16x4xbf16>
    %c8 = arith.constant 8 : index
    %c0_11 = arith.constant 0 : index
    %20 = vector.load %arg3[%c8, %c0_11] : memref<36x32xbf16, #tpu.memory_space<vmem>>, vector<4x32xbf16>
    %21 = vector.shape_cast %19 : vector<16x16x4xbf16> to vector<256x4xbf16>
    %cst_12 = arith.constant dense<0.000000e+00> : vector<256x32xf32>
    %22 = tpu.matmul %21, %20, %cst_12 {dimension_numbers = #tpu.dot_dimension_numbers<[1], [0], [0], [1], [0, 0, 1, 1], [], []>} : vector<256x4xbf16>, vector<4x32xbf16>, vector<256x32xf32> -> vector<256x32xf32>
    %23 = arith.addf %16, %22 : vector<256x32xf32>
    %c1_i32 = arith.constant 1 : i32
    %24 = arith.addi %0, %c1_i32 : i32
    %c0_13 = arith.constant 0 : index
    %25 = arith.index_cast %24 : i32 to index
    %c0_14 = arith.constant 0 : index
    %c0_15 = arith.constant 0 : index
    %26 = vector.load %arg2[%c0_13, %25, %c0_14, %c0_15] : memref<1x18x18x4xbf16, #tpu.memory_space<vmem>>, vector<1x16x16x4xbf16>
    %27 = vector.shape_cast %26 : vector<1x16x16x4xbf16> to vector<16x16x4xbf16>
    %c12 = arith.constant 12 : index
    %c0_16 = arith.constant 0 : index
    %28 = vector.load %arg3[%c12, %c0_16] : memref<36x32xbf16, #tpu.memory_space<vmem>>, vector<4x32xbf16>
    %29 = vector.shape_cast %27 : vector<16x16x4xbf16> to vector<256x4xbf16>
    %cst_17 = arith.constant dense<0.000000e+00> : vector<256x32xf32>
    %30 = tpu.matmul %29, %28, %cst_17 {dimension_numbers = #tpu.dot_dimension_numbers<[1], [0], [0], [1], [0, 0, 1, 1], [], []>} : vector<256x4xbf16>, vector<4x32xbf16>, vector<256x32xf32> -> vector<256x32xf32>
    %31 = arith.addf %23, %30 : vector<256x32xf32>
    %c0_18 = arith.constant 0 : index
    %32 = arith.index_cast %24 : i32 to index
    %c1_19 = arith.constant 1 : index
    %c0_20 = arith.constant 0 : index
    %33 = vector.load %arg2[%c0_18, %32, %c1_19, %c0_20] : memref<1x18x18x4xbf16, #tpu.memory_space<vmem>>, vector<1x16x16x4xbf16>
    %34 = vector.shape_cast %33 : vector<1x16x16x4xbf16> to vector<16x16x4xbf16>
    %c16 = arith.constant 16 : index
    %c0_21 = arith.constant 0 : index
    %35 = vector.load %arg3[%c16, %c0_21] : memref<36x32xbf16, #tpu.memory_space<vmem>>, vector<4x32xbf16>
    %36 = vector.shape_cast %34 : vector<16x16x4xbf16> to vector<256x4xbf16>
    %cst_22 = arith.constant dense<0.000000e+00> : vector<256x32xf32>
    %37 = tpu.matmul %36, %35, %cst_22 {dimension_numbers = #tpu.dot_dimension_numbers<[1], [0], [0], [1], [0, 0, 1, 1], [], []>} : vector<256x4xbf16>, vector<4x32xbf16>, vector<256x32xf32> -> vector<256x32xf32>
    %38 = arith.addf %31, %37 : vector<256x32xf32>
    %c0_23 = arith.constant 0 : index
    %39 = arith.index_cast %24 : i32 to index
    %c2_24 = arith.constant 2 : index
    %c0_25 = arith.constant 0 : index
    %40 = vector.load %arg2[%c0_23, %39, %c2_24, %c0_25] : memref<1x18x18x4xbf16, #tpu.memory_space<vmem>>, vector<1x16x16x4xbf16>
    %41 = vector.shape_cast %40 : vector<1x16x16x4xbf16> to vector<16x16x4xbf16>
    %c20 = arith.constant 20 : index
    %c0_26 = arith.constant 0 : index
    %42 = vector.load %arg3[%c20, %c0_26] : memref<36x32xbf16, #tpu.memory_space<vmem>>, vector<4x32xbf16>
    %43 = vector.shape_cast %41 : vector<16x16x4xbf16> to vector<256x4xbf16>
    %cst_27 = arith.constant dense<0.000000e+00> : vector<256x32xf32>
    %44 = tpu.matmul %43, %42, %cst_27 {dimension_numbers = #tpu.dot_dimension_numbers<[1], [0], [0], [1], [0, 0, 1, 1], [], []>} : vector<256x4xbf16>, vector<4x32xbf16>, vector<256x32xf32> -> vector<256x32xf32>
    %45 = arith.addf %38, %44 : vector<256x32xf32>
    %c2_i32 = arith.constant 2 : i32
    %46 = arith.addi %0, %c2_i32 : i32
    %c0_28 = arith.constant 0 : index
    %47 = arith.index_cast %46 : i32 to index
    %c0_29 = arith.constant 0 : index
    %c0_30 = arith.constant 0 : index
    %48 = vector.load %arg2[%c0_28, %47, %c0_29, %c0_30] : memref<1x18x18x4xbf16, #tpu.memory_space<vmem>>, vector<1x16x16x4xbf16>
    %49 = vector.shape_cast %48 : vector<1x16x16x4xbf16> to vector<16x16x4xbf16>
    %c24 = arith.constant 24 : index
    %c0_31 = arith.constant 0 : index
    %50 = vector.load %arg3[%c24, %c0_31] : memref<36x32xbf16, #tpu.memory_space<vmem>>, vector<4x32xbf16>
    %51 = vector.shape_cast %49 : vector<16x16x4xbf16> to vector<256x4xbf16>
    %cst_32 = arith.constant dense<0.000000e+00> : vector<256x32xf32>
    %52 = tpu.matmul %51, %50, %cst_32 {dimension_numbers = #tpu.dot_dimension_numbers<[1], [0], [0], [1], [0, 0, 1, 1], [], []>} : vector<256x4xbf16>, vector<4x32xbf16>, vector<256x32xf32> -> vector<256x32xf32>
    %53 = arith.addf %45, %52 : vector<256x32xf32>
    %c0_33 = arith.constant 0 : index
    %54 = arith.index_cast %46 : i32 to index
    %c1_34 = arith.constant 1 : index
    %c0_35 = arith.constant 0 : index
    %55 = vector.load %arg2[%c0_33, %54, %c1_34, %c0_35] : memref<1x18x18x4xbf16, #tpu.memory_space<vmem>>, vector<1x16x16x4xbf16>
    %56 = vector.shape_cast %55 : vector<1x16x16x4xbf16> to vector<16x16x4xbf16>
    %c28 = arith.constant 28 : index
    %c0_36 = arith.constant 0 : index
    %57 = vector.load %arg3[%c28, %c0_36] : memref<36x32xbf16, #tpu.memory_space<vmem>>, vector<4x32xbf16>
    %58 = vector.shape_cast %56 : vector<16x16x4xbf16> to vector<256x4xbf16>
    %cst_37 = arith.constant dense<0.000000e+00> : vector<256x32xf32>
    %59 = tpu.matmul %58, %57, %cst_37 {dimension_numbers = #tpu.dot_dimension_numbers<[1], [0], [0], [1], [0, 0, 1, 1], [], []>} : vector<256x4xbf16>, vector<4x32xbf16>, vector<256x32xf32> -> vector<256x32xf32>
    %60 = arith.addf %53, %59 : vector<256x32xf32>
    %c0_38 = arith.constant 0 : index
    %61 = arith.index_cast %46 : i32 to index
    %c2_39 = arith.constant 2 : index
    %c0_40 = arith.constant 0 : index
    %62 = vector.load %arg2[%c0_38, %61, %c2_39, %c0_40] : memref<1x18x18x4xbf16, #tpu.memory_space<vmem>>, vector<1x16x16x4xbf16>
    %63 = vector.shape_cast %62 : vector<1x16x16x4xbf16> to vector<16x16x4xbf16>
    %c32 = arith.constant 32 : index
    %c0_41 = arith.constant 0 : index
    %64 = vector.load %arg3[%c32, %c0_41] : memref<36x32xbf16, #tpu.memory_space<vmem>>, vector<4x32xbf16>
    %65 = vector.shape_cast %63 : vector<16x16x4xbf16> to vector<256x4xbf16>
    %cst_42 = arith.constant dense<0.000000e+00> : vector<256x32xf32>
    %66 = tpu.matmul %65, %64, %cst_42 {dimension_numbers = #tpu.dot_dimension_numbers<[1], [0], [0], [1], [0, 0, 1, 1], [], []>} : vector<256x4xbf16>, vector<4x32xbf16>, vector<256x32xf32> -> vector<256x32xf32>
    %67 = arith.addf %60, %66 : vector<256x32xf32>
    %c0_43 = arith.constant 0 : index
    %c0_44 = arith.constant 0 : index
    %68 = vector.load %arg4[%c0_43, %c0_44] : memref<1x32xf32, #tpu.memory_space<vmem>>, vector<1x32xf32>
    %69 = vector.broadcast %68 : vector<1x32xf32> to vector<256x32xf32>
    %70 = arith.addf %67, %69 : vector<256x32xf32>
    %cst_45 = arith.constant 0.000000e+00 : f32
    %71 = vector.broadcast %cst_45 : f32 to vector<256x32xf32>
    %72 = arith.maximumf %70, %71 : vector<256x32xf32>
    %73 = vector.shape_cast %72 : vector<256x32xf32> to vector<1x16x16x32xf32>
    %c0_46 = arith.constant 0 : index
    %c0_47 = arith.constant 0 : index
    %c0_48 = arith.constant 0 : index
    %c0_49 = arith.constant 0 : index
    %74 = vector.load %arg5[%c0_46, %c0_47, %c0_48, %c0_49] : memref<1x16x16x32xf32, #tpu.memory_space<vmem>>, vector<1x16x16x32xf32>
    tpu.vector_store %arg5[%c0_46, %c0_47, %c0_48, %c0_49], %73 {strides = array<i32>} : memref<1x16x16x32xf32, #tpu.memory_space<vmem>>, vector<1x16x16x32xf32>,
    return
  }
  func.func @transform_0(%arg0: i32, %arg1: i32) -> (i32, i32, i32, i32) {
    %c0_i32 = arith.constant 0 : i32
    %c0_i32_0 = arith.constant 0 : i32
    %c0_i32_1 = arith.constant 0 : i32
    %c0_i32_2 = arith.constant 0 : i32
    return %arg0, %c0_i32, %c0_i32_0, %c0_i32_1 : i32, i32, i32, i32
  }
  func.func @transform_1(%arg0: i32, %arg1: i32) -> (i32, i32) {
    %c0_i32 = arith.constant 0 : i32
    %c0_i32_0 = arith.constant 0 : i32
    %c0_i32_1 = arith.constant 0 : i32
    return %c0_i32, %c0_i32_0 : i32, i32
  }
  func.func @transform_2(%arg0: i32, %arg1: i32) -> (i32, i32) {
    %c0_i32 = arith.constant 0 : i32
    %c0_i32_0 = arith.constant 0 : i32
    %c0_i32_1 = arith.constant 0 : i32
    return %c0_i32, %c0_i32_0 : i32, i32
  }
  func.func @transform_3(%arg0: i32, %arg1: i32) -> (i32, i32, i32, i32) {
    %c0_i32 = arith.constant 0 : i32
    %c0_i32_0 = arith.constant 0 : i32
    %c0_i32_1 = arith.constant 0 : i32
    return %arg0, %arg1, %c0_i32, %c0_i32_0 : i32, i32, i32, i32
  }
}

</mosaic_0001>

<llo_original>
// kernel: tpu_custom_call.1
$region0: #{tpu_custom_call.1}
  #allocation0 [shape = 'u32[]', space=smem, size = 0x4, offset = 0x4, fixed_abs, tag = 'smem constant byte address 0x4 - core index']
  #allocation1 [shape = 'u32[144,128]{1,0:T(1,128)}', space=vmem, size = 0x12000, scoped, tag = 'internal scratch']
  %s0 = inlined_call_operand.vmem [shape: bf16[2,18,18,4], index: 0, kind: input, shape index: {}]
  %s1 = inlined_call_operand.vmem [shape: bf16[36,32], index: 1, kind: input, shape index: {}]
  %s2 = inlined_call_operand.vmem [shape: f32[1,32], index: 2, kind: input, shape index: {}]
  %s3 = inlined_call_operand.hbm [shape: f32[2,16,16,32], index: 3, kind: output, shape index: {}]
  %s4 = sld [smem:[#allocation0]]
  $region45: #{tpu_custom_call.1} parent=0
    _
  %s6 = ssub.s32 1, %s4
  %s7 = scalar_select 0, %s6, %s4
  $region1: #{tpu_custom_call.1} parent=0
    #allocation2 [shape = 'u8[262144]{0}', space=vmem, size = 0x40000, scoped, tag = 'output window, operand 0']
    #allocation3 [shape = 's32[2]{0}', space=sflag, size = 0x8, scoped, tag = 'scoped memory for tpu_custom_call.1']
    %8 = vsyncpa [#allocation3], 0
    %s9 = scalar_lea.sflag [#allocation3], 1
    %10 = vsyncpa %s9, 0
    loop: start=0, step=1, limit=4
    $region2: #{tpu_custom_call.1} parent=1 // loop_pre_header
      _
    $region3: #{tpu_custom_call.1} parent=1 // loop_header
      %s12 = sphi 0, %s16
      %p13 = scmp.ge.s32.totalorder %s12, 4
      %s19 = sphi 0, %s31
      %s20 = sphi 0, %s27
      %s21 = sphi 0, %s19
      %s22 = sphi 0, %s20
      %s23 = sphi 0, %s21
      %s24 = sphi 0, %s22
      %s34 = sphi 0, %s36
      %s37 = sphi 0, %s34
      %s38 = sphi 0, %s37
      %s54 = sphi 0, %s38
      %s58 = sphi 0, %s58
      %s60 = sphi 0, %s58
      %s61 = sphi 0, %s60
      %s75 = sphi 0, %s61
      %s79 = sphi 0, %s79
      %s81 = sphi 0, %s79
      %s82 = sphi 0, %s81
      %s96 = sphi 0, %s82
      %s104 = sphi 0, %s106
      %s107 = sphi 0, %s104
      %s108 = sphi 0, %s107
      %s124 = sphi 0, %s108
    $region4: #{tpu_custom_call.1} parent=1 // loop_header_branch
      %15 = sbr.rel (%p13) target = $region8
    $region5: #{tpu_custom_call.1} parent=1 // loop_body
      %s17 = ssub.s32 %s12, 1
      %s18 = ssub.s32 %s12, 2
      %s25 = sadd.s32 1, %s20
      %p26 = scmp.ge.s32.totalorder %s25, 1
      %s27 = scalar_select %p26, 0, %s25
      %s28 = sadd.s32 1, %s19
      %s29 = scalar_select %p26, %s28, %s19
      %p30 = scmp.ge.s32.totalorder %s29, 2
      %s31 = scalar_select %p30, 0, %s29
      %s32 = ssub.s32 %s19, %s31
      %p33 = scmp.eq.s32.totalorder %s32, 0
      %s35 = sadd.s32 %s34, 1
      %s36 = scalar_select %p33, %s34, %s35
      %p39 = pneg %p33
      %p40 = scmp.eq.s32.totalorder %s12, 1
      %p41 = por %p39, %p40
      %p42 = scmp.ne.s32.totalorder %s34, %s37
      %p43 = scmp.eq.s32.totalorder %s12, 0
      %p44 = por %p42, %p43
      %p45 = scmp.ne.s32.totalorder %s34, %s37
      %p46 = scmp.eq.s32.totalorder %s17, 1
      %p47 = por %p45, %p46
      %p48 = scmp.ne.s32.totalorder %s37, %s38
      %p49 = scmp.eq.s32.totalorder %s17, 0
      %p50 = por %p48, %p49
      %p51 = scmp.ne.s32.totalorder %s37, %s38
      %p52 = scmp.eq.s32.totalorder %s18, 1
      %p53 = por %p51, %p52
      %p55 = scmp.ne.s32.totalorder %s38, %s54
      %p56 = scmp.eq.s32.totalorder %s18, 0
      %p57 = por %p55, %p56
      %s59 = sadd.s32 %s58, 1
      %p62 = scmp.eq.s32.totalorder %s12, 1
      %p63 = scmp.ne.s32.totalorder %s58, %s60
      %p64 = scmp.eq.s32.totalorder %s12, 0
      %p65 = por %p63, %p64
      %p66 = scmp.ne.s32.totalorder %s58, %s60
      %p67 = scmp.eq.s32.totalorder %s17, 1
      %p68 = por %p66, %p67
      %p69 = scmp.ne.s32.totalorder %s60, %s61
      %p70 = scmp.eq.s32.totalorder %s17, 0
      %p71 = por %p69, %p70
      %p72 = scmp.ne.s32.totalorder %s60, %s61
      %p73 = scmp.eq.s32.totalorder %s18, 1
      %p74 = por %p72, %p73
      %p76 = scmp.ne.s32.totalorder %s61, %s75
      %p77 = scmp.eq.s32.totalorder %s18, 0
      %p78 = por %p76, %p77
      %s80 = sadd.s32 %s79, 1
      %p83 = scmp.eq.s32.totalorder %s12, 1
      %p84 = scmp.ne.s32.totalorder %s79, %s81
      %p85 = scmp.eq.s32.totalorder %s12, 0
      %p86 = por %p84, %p85
      %p87 = scmp.ne.s32.totalorder %s79, %s81
      %p88 = scmp.eq.s32.totalorder %s17, 1
      %p89 = por %p87, %p88
      %p90 = scmp.ne.s32.totalorder %s81, %s82
      %p91 = scmp.eq.s32.totalorder %s17, 0
      %p92 = por %p90, %p91
      %p93 = scmp.ne.s32.totalorder %s81, %s82
      %p94 = scmp.eq.s32.totalorder %s18, 1
      %p95 = por %p93, %p94
      %p97 = scmp.ne.s32.totalorder %s82, %s96
      %p98 = scmp.eq.s32.totalorder %s18, 0
      %p99 = por %p97, %p98
      %s100 = ssub.s32 %s19, %s31
      %s101 = ssub.s32 %s20, %s27
      %s102 = sor.u32 %s100, %s101
      %p103 = scmp.eq.s32.totalorder %s102, 0
      %s105 = sadd.s32 %s104, 1
      %s106 = scalar_select %p103, %s104, %s105
      %p109 = pneg %p103
      %p110 = scmp.eq.s32.totalorder %s12, 1
      %p111 = por %p109, %p110
      %p112 = scmp.ne.s32.totalorder %s104, %s107
      %p113 = scmp.eq.s32.totalorder %s12, 0
      %p114 = por %p112, %p113
      %p115 = scmp.ne.s32.totalorder %s104, %s107
      %p116 = scmp.eq.s32.totalorder %s17, 1
      %p117 = por %p115, %p116
      %p118 = scmp.ne.s32.totalorder %s107, %s108
      %p119 = scmp.eq.s32.totalorder %s17, 0
      %p120 = por %p118, %p119
      %p121 = scmp.ne.s32.totalorder %s107, %s108
      %p122 = scmp.eq.s32.totalorder %s18, 1
      %p123 = por %p121, %p122
      %p125 = scmp.ne.s32.totalorder %s108, %s124
      %p126 = scmp.eq.s32.totalorder %s18, 0
      %p127 = por %p125, %p126
      %p128 = scmp.le.s32.totalorder 1, %s12
      %p129 = scmp.lt.s32.totalorder %s12, 3
      %p130 = pnand %p128, %p129
      %p131 = pneg %p130
      // Predicated region
      $region9: #{tpu_custom_call.1} parent=5 // pred_check
        _
      $region10: #{tpu_custom_call.1} parent=5 // pred_check_branch
        %133 = sbr.rel (%p130) target = $region12
      $region11: #{tpu_custom_call.1} parent=5 // pred_region
        %s134 = ssub.s32 %s12, 1
        // Predicated region
        $region13: #{tpu_custom_call.1} parent=11 // pred_check
          %p135 = pneg %p71
        $region14: #{tpu_custom_call.1} parent=11 // pred_check_branch
          %137 = sbr.rel (%p135) target = $region16
        $region15: #{tpu_custom_call.1} parent=11 // pred_region
          _
        $region16: #{tpu_custom_call.1} parent=11 // pred_fallthru
          _
        // Predicated region
        $region17: #{tpu_custom_call.1} parent=11 // pred_check
          %p138 = pneg %p92
        $region18: #{tpu_custom_call.1} parent=11 // pred_check_branch
          %140 = sbr.rel (%p138) target = $region20
        $region19: #{tpu_custom_call.1} parent=11 // pred_region
          _
        $region20: #{tpu_custom_call.1} parent=11 // pred_fallthru
          _
      $region12: #{tpu_custom_call.1} parent=5 // pred_fallthru
        _
      %p141 = scmp.lt.s32.totalorder %s12, 2
      // Predicated region
      $region21: #{tpu_custom_call.1} parent=5 // pred_check
        %p142 = pneg %p141
      $region22: #{tpu_custom_call.1} parent=5 // pred_check_branch
        %144 = sbr.rel (%p142) target = $region24
      $region23: #{tpu_custom_call.1} parent=5 // pred_region
        // Predicated region
        $region25: #{tpu_custom_call.1} parent=23 // pred_check
          %p145 = pneg %p44
        $region26: #{tpu_custom_call.1} parent=23 // pred_check_branch
          %147 = sbr.rel (%p145) target = $region28
        $region27: #{tpu_custom_call.1} parent=23 // pred_region
          %p148 = scmp.lt.s32.totalorder %s19, 1
          %s149 = scalar_select %p148, %s19, 1
          %s150 = smul.addr %s149, 54
          %s151 = smul.addr %s150, 4
          %s152 = scalar_lea.vmem %s0, %s151
        $region28: #{tpu_custom_call.1} parent=23 // pred_fallthru
          _
      $region24: #{tpu_custom_call.1} parent=5 // pred_fallthru
        _
      %p153 = scmp.le.s32.totalorder 1, %s12
      %p154 = scmp.lt.s32.totalorder %s12, 3
      %p155 = pnand %p153, %p154
      %p156 = pneg %p155
      // Predicated region
      $region29: #{tpu_custom_call.1} parent=5 // pred_check
        _
      $region30: #{tpu_custom_call.1} parent=5 // pred_check_branch
        %158 = sbr.rel (%p155) target = $region32
      $region31: #{tpu_custom_call.1} parent=5 // pred_region
        %s159 = ssub.s32 %s12, 1
        %p160 = scmp.lt.s32.totalorder %s21, 1
        %s161 = scalar_select %p160, %s21, 1
        %s162 = smul.addr %s161, 54
        %s163 = smul.addr %s162, 4
        %s164 = scalar_lea.vmem %s0, %s163
        %p165 = pneg %p50
        %p166 = pneg %p47
        %p167 = pneg %p71
        %p168 = pneg %p68
        %p169 = pneg %p92
        %p170 = pneg %p89
        %p171 = pneg %p120
        %p172 = pneg %p117
        %s173 = sand.u32 %s107, 1
        %s174 = scalar_lea.sflag [#allocation3], %s173
        %s175 = sand.u32 %s107, 1
        %s176 = smul.addr %s175, 256
        %s177 = scalar_lea.vmem [#allocation2], %s176
        %p178 = scmp.lt.s32.totalorder %s21, 1
        %s179 = scalar_select %p178, %s21, 1
        %s180 = smul.addr %s179, 54
        %s181 = smul.addr %s180, 4
        %s182 = scalar_lea.vmem %s0, %s181
        %s183 = smul.u32 16, %s22
        %s185 = smul.u32 %s22, 16
        %s186 = smul.u32 %s185, 3
        %s187 = smul.addr %s186, 4
        %s188 = scalar_lea.vmem %s182, %s187
        %v189 = vld [vmem:[%s188] sm:$0xf]
        %v190 = vld [vmem:[%s188 + $0x4] sm:$0xf]
        %v191 = vld [vmem:[%s188 + $0xc] sm:$0xf]
        %v192 = vld [vmem:[%s188 + $0x10] sm:$0xf]
        %v193 = vld [vmem:[%s188 + $0x18] sm:$0xf]
        %v194 = vld [vmem:[%s188 + $0x1c] sm:$0xf]
        %v195 = vld [vmem:[%s188 + $0x24] sm:$0xf]
        %v196 = vld [vmem:[%s188 + $0x28] sm:$0xf]
        %v197 = vld [vmem:[%s188 + $0x30] sm:$0xf]
        %v198 = vld [vmem:[%s188 + $0x34] sm:$0xf]
        %v199 = vld [vmem:[%s188 + $0x3c] sm:$0xf]
        %v200 = vld [vmem:[%s188 + $0x40] sm:$0xf]
        %v201 = vld [vmem:[%s188 + $0x48] sm:$0xf]
        %v202 = vld [vmem:[%s188 + $0x4c] sm:$0xf]
        %v203 = vld [vmem:[%s188 + $0x54] sm:$0xf]
        %v204 = vld [vmem:[%s188 + $0x58] sm:$0xf]
        %v205 = vld [vmem:[%s188 + $0x60] sm:$0xf]
        %v206 = vld [vmem:[%s188 + $0x64] sm:$0xf]
        %v207 = vld [vmem:[%s188 + $0x6c] sm:$0xf]
        %v208 = vld [vmem:[%s188 + $0x70] sm:$0xf]
        %v209 = vld [vmem:[%s188 + $0x78] sm:$0xf]
        %v210 = vld [vmem:[%s188 + $0x7c] sm:$0xf]
        %v211 = vld [vmem:[%s188 + $0x84] sm:$0xf]
        %v212 = vld [vmem:[%s188 + $0x88] sm:$0xf]
        %v213 = vld [vmem:[%s188 + $0x90] sm:$0xf]
        %v214 = vld [vmem:[%s188 + $0x94] sm:$0xf]
        %v215 = vld [vmem:[%s188 + $0x9c] sm:$0xf]
        %v216 = vld [vmem:[%s188 + $0xa0] sm:$0xf]
        %v217 = vld [vmem:[%s188 + $0xa8] sm:$0xf]
        %v218 = vld [vmem:[%s188 + $0xac] sm:$0xf]
        %v219 = vld [vmem:[%s188 + $0xb4] sm:$0xf]
        %v220 = vld [vmem:[%s188 + $0xb8] sm:$0xf]
        %v221 = vld [vmem:[%s1] sm:$0x3]
        %v222 = vld [vmem:[%s188 + $0x8] sm:$0x1]
        %v223 = vld [vmem:[%s188 + $0x14] sm:$0x1]
        %v224 = vld [vmem:[%s188 + $0x20] sm:$0x1]
        %v225 = vld [vmem:[%s188 + $0x2c] sm:$0x1]
        %v226 = vld [vmem:[%s188 + $0x38] sm:$0x1]
        %v227 = vld [vmem:[%s188 + $0x44] sm:$0x1]
        %v228 = vld [vmem:[%s188 + $0x50] sm:$0x1]
        %v229 = vld [vmem:[%s188 + $0x5c] sm:$0x1]
        %v230 = vld [vmem:[%s188 + $0x68] sm:$0x1]
        %v231 = vld [vmem:[%s188 + $0x74] sm:$0x1]
        %v232 = vld [vmem:[%s188 + $0x80] sm:$0x1]
        %v233 = vld [vmem:[%s188 + $0x8c] sm:$0x1]
        %v234 = vld [vmem:[%s188 + $0x98] sm:$0x1]
        %v235 = vld [vmem:[%s188 + $0xa4] sm:$0x1]
        %v236 = vld [vmem:[%s188 + $0xb0] sm:$0x1]
        %v237 = vld [vmem:[%s188 + $0xbc] sm:$0x1]
        %v238 = vld [vmem:[%s1] sm:$0xc]
        %vm239 = vsmask.f32 3328
        %vm240 = vsmask.f32 7440
        %vm241 = vmor %vm239, %vm240
        %v243 = vshrl.u32 %v189, 16
        %v245 = vrot.slane %v243, 4
        %v246 = vshll.u32 %v189, 16
        %v248 = vrot.slane %v246, 5
        %v249 = vor.u32 %v245, %v248
        %v250 = vrot.slane %v249, 4
        %v252 = vshll.u32 %v190, 16
        %v254 = vrot.slane %v252, 5
        %v255 = vsel %vm241, %v250, %v254
        %v256 = vshrl.u32 %v190, 16
        %v258 = vrot.slane %v256, 4
        %v259 = vor.u32 %v258, %v254
        %v260 = vrot.slane %v259, 4
        %v262 = vshll.u32 %v222, 16
        %v264 = vrot.slane %v262, 5
        %v265 = vsel %vm241, %v260, %v264
        %v267 = vshrl.u32 %v191, 16
        %v269 = vrot.slane %v267, 4
        %v270 = vshll.u32 %v191, 16
        %v272 = vrot.slane %v270, 5
        %v273 = vor.u32 %v269, %v272
        %v274 = vrot.slane %v273, 4
        %v276 = vshll.u32 %v192, 16
        %v278 = vrot.slane %v276, 5
        %v279 = vsel %vm241, %v274, %v278
        %v280 = vshrl.u32 %v192, 16
        %v282 = vrot.slane %v280, 4
        %v283 = vor.u32 %v282, %v278
        %v284 = vrot.slane %v283, 4
        %v286 = vshll.u32 %v223, 16
        %v288 = vrot.slane %v286, 5
        %v289 = vsel %vm241, %v284, %v288
        %v291 = vshrl.u32 %v193, 16
        %v293 = vrot.slane %v291, 4
        %v294 = vshll.u32 %v193, 16
        %v296 = vrot.slane %v294, 5
        %v297 = vor.u32 %v293, %v296
        %v298 = vrot.slane %v297, 4
        %v300 = vshll.u32 %v194, 16
        %v302 = vrot.slane %v300, 5
        %v303 = vsel %vm241, %v298, %v302
        %v304 = vshrl.u32 %v194, 16
        %v306 = vrot.slane %v304, 4
        %v307 = vor.u32 %v306, %v302
        %v308 = vrot.slane %v307, 4
        %v310 = vshll.u32 %v224, 16
        %v312 = vrot.slane %v310, 5
        %v313 = vsel %vm241, %v308, %v312
        %v315 = vshrl.u32 %v195, 16
        %v317 = vrot.slane %v315, 4
        %v318 = vshll.u32 %v195, 16
        %v320 = vrot.slane %v318, 5
        %v321 = vor.u32 %v317, %v320
        %v322 = vrot.slane %v321, 4
        %v324 = vshll.u32 %v196, 16
        %v326 = vrot.slane %v324, 5
        %v327 = vsel %vm241, %v322, %v326
        %v328 = vshrl.u32 %v196, 16
        %v330 = vrot.slane %v328, 4
        %v331 = vor.u32 %v330, %v326
        %v332 = vrot.slane %v331, 4
        %v334 = vshll.u32 %v225, 16
        %v336 = vrot.slane %v334, 5
        %v337 = vsel %vm241, %v332, %v336
        %v339 = vshrl.u32 %v197, 16
        %v341 = vrot.slane %v339, 4
        %v342 = vshll.u32 %v197, 16
        %v344 = vrot.slane %v342, 5
        %v345 = vor.u32 %v341, %v344
        %v346 = vrot.slane %v345, 4
        %v348 = vshll.u32 %v198, 16
        %v350 = vrot.slane %v348, 5
        %v351 = vsel %vm241, %v346, %v350
        %v352 = vshrl.u32 %v198, 16
        %v354 = vrot.slane %v352, 4
        %v355 = vor.u32 %v354, %v350
        %v356 = vrot.slane %v355, 4
        %v358 = vshll.u32 %v226, 16
        %v360 = vrot.slane %v358, 5
        %v361 = vsel %vm241, %v356, %v360
        %v363 = vshrl.u32 %v199, 16
        %v365 = vrot.slane %v363, 4
        %v366 = vshll.u32 %v199, 16
        %v368 = vrot.slane %v366, 5
        %v369 = vor.u32 %v365, %v368
        %v370 = vrot.slane %v369, 4
        %v372 = vshll.u32 %v200, 16
        %v374 = vrot.slane %v372, 5
        %v375 = vsel %vm241, %v370, %v374
        %v376 = vshrl.u32 %v200, 16
        %v378 = vrot.slane %v376, 4
        %v379 = vor.u32 %v378, %v374
        %v380 = vrot.slane %v379, 4
        %v382 = vshll.u32 %v227, 16
        %v384 = vrot.slane %v382, 5
        %v385 = vsel %vm241, %v380, %v384
        %v387 = vshrl.u32 %v201, 16
        %v389 = vrot.slane %v387, 4
        %v390 = vshll.u32 %v201, 16
        %v392 = vrot.slane %v390, 5
        %v393 = vor.u32 %v389, %v392
        %v394 = vrot.slane %v393, 4
        %v396 = vshll.u32 %v202, 16
        %v398 = vrot.slane %v396, 5
        %v399 = vsel %vm241, %v394, %v398
        %v400 = vshrl.u32 %v202, 16
        %v402 = vrot.slane %v400, 4
        %v403 = vor.u32 %v402, %v398
        %v404 = vrot.slane %v403, 4
        %v406 = vshll.u32 %v228, 16
        %v408 = vrot.slane %v406, 5
        %v409 = vsel %vm241, %v404, %v408
        %v411 = vshrl.u32 %v203, 16
        %v413 = vrot.slane %v411, 4
        %v414 = vshll.u32 %v203, 16
        %v416 = vrot.slane %v414, 5
        %v417 = vor.u32 %v413, %v416
        %v418 = vrot.slane %v417, 4
        %v420 = vshll.u32 %v204, 16
        %v422 = vrot.slane %v420, 5
        %v423 = vsel %vm241, %v418, %v422
        %v424 = vshrl.u32 %v204, 16
        %v426 = vrot.slane %v424, 4
        %v427 = vor.u32 %v426, %v422
        %v428 = vrot.slane %v427, 4
        %v430 = vshll.u32 %v229, 16
        %v432 = vrot.slane %v430, 5
        %v433 = vsel %vm241, %v428, %v432
        %v435 = vshrl.u32 %v205, 16
        %v437 = vrot.slane %v435, 4
        %v438 = vshll.u32 %v205, 16
        %v440 = vrot.slane %v438, 5
        %v441 = vor.u32 %v437, %v440
        %v442 = vrot.slane %v441, 4
        %v444 = vshll.u32 %v206, 16
        %v446 = vrot.slane %v444, 5
        %v447 = vsel %vm241, %v442, %v446
        %v448 = vshrl.u32 %v206, 16
        %v450 = vrot.slane %v448, 4
        %v451 = vor.u32 %v450, %v446
        %v452 = vrot.slane %v451, 4
        %v454 = vshll.u32 %v230, 16
        %v456 = vrot.slane %v454, 5
        %v457 = vsel %vm241, %v452, %v456
        %v459 = vshrl.u32 %v207, 16
        %v461 = vrot.slane %v459, 4
        %v462 = vshll.u32 %v207, 16
        %v464 = vrot.slane %v462, 5
        %v465 = vor.u32 %v461, %v464
        %v466 = vrot.slane %v465, 4
        %v468 = vshll.u32 %v208, 16
        %v470 = vrot.slane %v468, 5
        %v471 = vsel %vm241, %v466, %v470
        %v472 = vshrl.u32 %v208, 16
        %v474 = vrot.slane %v472, 4
        %v475 = vor.u32 %v474, %v470
        %v476 = vrot.slane %v475, 4
        %v478 = vshll.u32 %v231, 16
        %v480 = vrot.slane %v478, 5
        %v481 = vsel %vm241, %v476, %v480
        %v483 = vshrl.u32 %v209, 16
        %v485 = vrot.slane %v483, 4
        %v486 = vshll.u32 %v209, 16
        %v488 = vrot.slane %v486, 5
        %v489 = vor.u32 %v485, %v488
        %v490 = vrot.slane %v489, 4
        %v492 = vshll.u32 %v210, 16
        %v494 = vrot.slane %v492, 5
        %v495 = vsel %vm241, %v490, %v494
        %v496 = vshrl.u32 %v210, 16
        %v498 = vrot.slane %v496, 4
        %v499 = vor.u32 %v498, %v494
        %v500 = vrot.slane %v499, 4
        %v502 = vshll.u32 %v232, 16
        %v504 = vrot.slane %v502, 5
        %v505 = vsel %vm241, %v500, %v504
        %v507 = vshrl.u32 %v211, 16
        %v509 = vrot.slane %v507, 4
        %v510 = vshll.u32 %v211, 16
        %v512 = vrot.slane %v510, 5
        %v513 = vor.u32 %v509, %v512
        %v514 = vrot.slane %v513, 4
        %v516 = vshll.u32 %v212, 16
        %v518 = vrot.slane %v516, 5
        %v519 = vsel %vm241, %v514, %v518
        %v520 = vshrl.u32 %v212, 16
        %v522 = vrot.slane %v520, 4
        %v523 = vor.u32 %v522, %v518
        %v524 = vrot.slane %v523, 4
        %v526 = vshll.u32 %v233, 16
        %v528 = vrot.slane %v526, 5
        %v529 = vsel %vm241, %v524, %v528
        %v531 = vshrl.u32 %v213, 16
        %v533 = vrot.slane %v531, 4
        %v534 = vshll.u32 %v213, 16
        %v536 = vrot.slane %v534, 5
        %v537 = vor.u32 %v533, %v536
        %v538 = vrot.slane %v537, 4
        %v540 = vshll.u32 %v214, 16
        %v542 = vrot.slane %v540, 5
        %v543 = vsel %vm241, %v538, %v542
        %v544 = vshrl.u32 %v214, 16
        %v546 = vrot.slane %v544, 4
        %v547 = vor.u32 %v546, %v542
        %v548 = vrot.slane %v547, 4
        %v550 = vshll.u32 %v234, 16
        %v552 = vrot.slane %v550, 5
        %v553 = vsel %vm241, %v548, %v552
        %v555 = vshrl.u32 %v215, 16
        %v557 = vrot.slane %v555, 4
        %v558 = vshll.u32 %v215, 16
        %v560 = vrot.slane %v558, 5
        %v561 = vor.u32 %v557, %v560
        %v562 = vrot.slane %v561, 4
        %v564 = vshll.u32 %v216, 16
        %v566 = vrot.slane %v564, 5
        %v567 = vsel %vm241, %v562, %v566
        %v568 = vshrl.u32 %v216, 16
        %v570 = vrot.slane %v568, 4
        %v571 = vor.u32 %v570, %v566
        %v572 = vrot.slane %v571, 4
        %v574 = vshll.u32 %v235, 16
        %v576 = vrot.slane %v574, 5
        %v577 = vsel %vm241, %v572, %v576
        %v579 = vshrl.u32 %v217, 16
        %v581 = vrot.slane %v579, 4
        %v582 = vshll.u32 %v217, 16
        %v584 = vrot.slane %v582, 5
        %v585 = vor.u32 %v581, %v584
        %v586 = vrot.slane %v585, 4
        %v588 = vshll.u32 %v218, 16
        %v590 = vrot.slane %v588, 5
        %v591 = vsel %vm241, %v586, %v590
        %v592 = vshrl.u32 %v218, 16
        %v594 = vrot.slane %v592, 4
        %v595 = vor.u32 %v594, %v590
        %v596 = vrot.slane %v595, 4
        %v598 = vshll.u32 %v236, 16
        %v600 = vrot.slane %v598, 5
        %v601 = vsel %vm241, %v596, %v600
        %v603 = vshrl.u32 %v219, 16
        %v605 = vrot.slane %v603, 4
        %v606 = vshll.u32 %v219, 16
        %v608 = vrot.slane %v606, 5
        %v609 = vor.u32 %v605, %v608
        %v610 = vrot.slane %v609, 4
        %v612 = vshll.u32 %v220, 16
        %v614 = vrot.slane %v612, 5
        %v615 = vsel %vm241, %v610, %v614
        %v616 = vshrl.u32 %v220, 16
        %v618 = vrot.slane %v616, 4
        %v619 = vor.u32 %v618, %v614
        %v620 = vrot.slane %v619, 4
        %v622 = vshll.u32 %v237, 16
        %v624 = vrot.slane %v622, 5
        %v625 = vsel %vm241, %v620, %v624
        %v626 = vunpack.c.l.b16 %v255
        %v627 = vunpack.c.l.b16 %v265
        %v628 = vunpack.c.l.b16 %v279
        %v629 = vunpack.c.l.b16 %v289
        %v630 = vunpack.c.l.b16 %v303
        %v631 = vunpack.c.l.b16 %v313
        %v632 = vunpack.c.l.b16 %v327
        %v633 = vunpack.c.l.b16 %v337
        %v634 = vunpack.c.l.b16 %v351
        %v635 = vunpack.c.l.b16 %v361
        %v636 = vunpack.c.l.b16 %v375
        %v637 = vunpack.c.l.b16 %v385
        %v638 = vunpack.c.l.b16 %v399
        %v639 = vunpack.c.l.b16 %v409
        %v640 = vunpack.c.l.b16 %v423
        %v641 = vunpack.c.l.b16 %v433
        %v642 = vunpack.c.l.b16 %v447
        %v643 = vunpack.c.l.b16 %v457
        %v644 = vunpack.c.l.b16 %v471
        %v645 = vunpack.c.l.b16 %v481
        %v646 = vunpack.c.l.b16 %v495
        %v647 = vunpack.c.l.b16 %v505
        %v648 = vunpack.c.l.b16 %v519
        %v649 = vunpack.c.l.b16 %v529
        %v650 = vunpack.c.l.b16 %v543
        %v651 = vunpack.c.l.b16 %v553
        %v652 = vunpack.c.l.b16 %v567
        %v653 = vunpack.c.l.b16 %v577
        %v654 = vunpack.c.l.b16 %v591
        %v655 = vunpack.c.l.b16 %v601
        %v656 = vunpack.c.l.b16 %v615
        %v657 = vunpack.c.l.b16 %v625
        %v658 = vpack.c.b16 %v627, %v626
        %v659 = vpack.c.b16 %v629, %v628
        %v660 = vpack.c.b16 %v631, %v630
        %v661 = vpack.c.b16 %v633, %v632
        %v662 = vpack.c.b16 %v635, %v634
        %v663 = vpack.c.b16 %v637, %v636
        %v664 = vpack.c.b16 %v639, %v638
        %v665 = vpack.c.b16 %v641, %v640
        %v666 = vpack.c.b16 %v643, %v642
        %v667 = vpack.c.b16 %v645, %v644
        %v668 = vpack.c.b16 %v647, %v646
        %v669 = vpack.c.b16 %v649, %v648
        %v670 = vpack.c.b16 %v651, %v650
        %v671 = vpack.c.b16 %v653, %v652
        %v672 = vpack.c.b16 %v655, %v654
        %v673 = vpack.c.b16 %v657, %v656
        %v675 = vunpack.c.l.b16 %v238
        %v676 = vpack.c.b16 %v675, %v675
        %v677 = vrot.slane %v676, 2
        %vm678 = vcmask 31744
        %v680 = vsel %vm678, %v658, 0
        %v683 = vsel %vm678, %v659, 0
        %v686 = vsel %vm678, %v660, 0
        %v689 = vsel %vm678, %v661, 0
        %v692 = vsel %vm678, %v662, 0
        %v695 = vsel %vm678, %v663, 0
        %v698 = vsel %vm678, %v664, 0
        %v701 = vsel %vm678, %v665, 0
        %v704 = vsel %vm678, %v666, 0
        %v707 = vsel %vm678, %v667, 0
        %v710 = vsel %vm678, %v668, 0
        %v713 = vsel %vm678, %v669, 0
        %v716 = vsel %vm678, %v670, 0
        %v719 = vsel %vm678, %v671, 0
        %v722 = vsel %vm678, %v672, 0
        %v725 = vsel %vm678, %v673, 0
        %vm727 = vcmask 1041408
        %v729 = vsel %vm727, %v677, 0
        %731 = vmatprep.subr.bf16.mxu0 0
        %732 = vmatpush1.bf16.msra.mxu0 %v729
        %733 = vmatprep.subr.bf16.mxu0 0
        %734 = vmatpush1.bf16.msra.mxu0 0
        %735 = vmatprep.subr.bf16.mxu0 0
        %736 = vmatpush1.bf16.msra.mxu0 0
        %737 = vmatprep.subr.bf16.mxu0 0
        %738 = vmatpush1.bf16.msra.mxu0 0
        %739 = vmatprep.subr.bf16.mxu0 0
        %740 = vmatpush1.bf16.msra.mxu0 0
        %741 = vmatprep.subr.bf16.mxu0 0
        %742 = vmatpush1.bf16.msra.mxu0 0
        %743 = vmatprep.subr.bf16.mxu0 0
        %744 = vmatpush1.bf16.msra.mxu0 0
        %745 = vmatprep.subr.bf16.mxu0 0
        %746 = vmatpush1.bf16.msra.mxu0 0
        %747 = vmatprep.subr.bf16.mxu0 0
        %748 = vmatpush1.bf16.msra.mxu0 0
        %749 = vmatprep.subr.bf16.mxu0 0
        %750 = vmatpush1.bf16.msra.mxu0 0
        %751 = vmatprep.subr.bf16.mxu0 0
        %752 = vmatpush1.bf16.msra.mxu0 0
        %753 = vmatprep.subr.bf16.mxu0 0
        %754 = vmatpush1.bf16.msra.mxu0 0
        %755 = vmatprep.subr.bf16.mxu0 0
        %756 = vmatpush1.bf16.msra.mxu0 0
        %757 = vmatprep.subr.bf16.mxu0 0
        %758 = vmatpush1.bf16.msra.mxu0 0
        %759 = vmatprep.subr.bf16.mxu0 0
        %760 = vmatpush1.bf16.msra.mxu0 0
        %761 = vmatprep.subr.bf16.mxu0 0
        %762 = vmatpush1.bf16.msra.mxu0 0
        %763 = vmatprep.mubr.bf16.mxu0 0
        %764 = vmatmul.mubr.bf16.gmra.mrb[0].mxu0 %v680
        %v765 = vpop.f32.mrb[0].mxu0
        %v766 = vadd.f32 0.0, %v765
        %v767 = vpop.f32.mrb[0].mxu0
        %v768 = vpop.f32.mrb[0].mxu0
        %v769 = vadd.f32 0.0, %v768
        %v770 = vpop.f32.mrb[0].mxu0
        %771 = vmatprep.mubr.bf16.mxu0 0
        %772 = vmatmul.mubr.bf16.gmra.mrb[0].mxu0 %v683
        %v773 = vpop.f32.mrb[0].mxu0
        %v774 = vadd.f32 0.0, %v773
        %v775 = vpop.f32.mrb[0].mxu0
        %v776 = vpop.f32.mrb[0].mxu0
        %v777 = vadd.f32 0.0, %v776
        %v778 = vpop.f32.mrb[0].mxu0
        %779 = vmatprep.mubr.bf16.mxu0 0
        %780 = vmatmul.mubr.bf16.gmra.mrb[0].mxu0 %v686
        %v781 = vpop.f32.mrb[0].mxu0
        %v782 = vadd.f32 0.0, %v781
        %v783 = vpop.f32.mrb[0].mxu0
        %v784 = vpop.f32.mrb[0].mxu0
        %v785 = vadd.f32 0.0, %v784
        %v786 = vpop.f32.mrb[0].mxu0
        %787 = vmatprep.mubr.bf16.mxu0 0
        %788 = vmatmul.mubr.bf16.gmra.mrb[0].mxu0 %v689
        %v789 = vpop.f32.mrb[0].mxu0
        %v790 = vadd.f32 0.0, %v789
        %v791 = vpop.f32.mrb[0].mxu0
        %v792 = vpop.f32.mrb[0].mxu0
        %v793 = vadd.f32 0.0, %v792
        %v794 = vpop.f32.mrb[0].mxu0
        %795 = vmatprep.mubr.bf16.mxu0 0
        %796 = vmatmul.mubr.bf16.gmra.mrb[0].mxu0 %v692
        %v797 = vpop.f32.mrb[0].mxu0
        %v798 = vadd.f32 0.0, %v797
        %v799 = vpop.f32.mrb[0].mxu0
        %v800 = vpop.f32.mrb[0].mxu0
        %v801 = vadd.f32 0.0, %v800
        %v802 = vpop.f32.mrb[0].mxu0
        %803 = vmatprep.mubr.bf16.mxu0 0
        %804 = vmatmul.mubr.bf16.gmra.mrb[0].mxu0 %v695
        %v805 = vpop.f32.mrb[0].mxu0
        %v806 = vadd.f32 0.0, %v805
        %v807 = vpop.f32.mrb[0].mxu0
        %v808 = vpop.f32.mrb[0].mxu0
        %v809 = vadd.f32 0.0, %v808
        %v810 = vpop.f32.mrb[0].mxu0
        %811 = vmatprep.mubr.bf16.mxu0 0
        %812 = vmatmul.mubr.bf16.gmra.mrb[0].mxu0 %v698
        %v813 = vpop.f32.mrb[0].mxu0
        %v814 = vadd.f32 0.0, %v813
        %v815 = vpop.f32.mrb[0].mxu0
        %v816 = vpop.f32.mrb[0].mxu0
        %v817 = vadd.f32 0.0, %v816
        %v818 = vpop.f32.mrb[0].mxu0
        %819 = vmatprep.mubr.bf16.mxu0 0
        %820 = vmatmul.mubr.bf16.gmra.mrb[0].mxu0 %v701
        %v821 = vpop.f32.mrb[0].mxu0
        %v822 = vadd.f32 0.0, %v821
        %v823 = vpop.f32.mrb[0].mxu0
        %v824 = vpop.f32.mrb[0].mxu0
        %v825 = vadd.f32 0.0, %v824
        %v826 = vpop.f32.mrb[0].mxu0
        %827 = vmatprep.mubr.bf16.mxu0 0
        %828 = vmatmul.mubr.bf16.gmra.mrb[0].mxu0 %v704
        %v829 = vpop.f32.mrb[0].mxu0
        %v830 = vadd.f32 0.0, %v829
        %v831 = vpop.f32.mrb[0].mxu0
        %v832 = vpop.f32.mrb[0].mxu0
        %v833 = vadd.f32 0.0, %v832
        %v834 = vpop.f32.mrb[0].mxu0
        %835 = vmatprep.mubr.bf16.mxu0 0
        %836 = vmatmul.mubr.bf16.gmra.mrb[0].mxu0 %v707
        %v837 = vpop.f32.mrb[0].mxu0
        %v838 = vadd.f32 0.0, %v837
        %v839 = vpop.f32.mrb[0].mxu0
        %v840 = vpop.f32.mrb[0].mxu0
        %v841 = vadd.f32 0.0, %v840
        %v842 = vpop.f32.mrb[0].mxu0
        %843 = vmatprep.mubr.bf16.mxu0 0
        %844 = vmatmul.mubr.bf16.gmra.mrb[0].mxu0 %v710
        %v845 = vpop.f32.mrb[0].mxu0
        %v846 = vadd.f32 0.0, %v845
        %v847 = vpop.f32.mrb[0].mxu0
        %v848 = vpop.f32.mrb[0].mxu0
        %v849 = vadd.f32 0.0, %v848
        %v850 = vpop.f32.mrb[0].mxu0
        %851 = vmatprep.mubr.bf16.mxu0 0
        %852 = vmatmul.mubr.bf16.gmra.mrb[0].mxu0 %v713
        %v853 = vpop.f32.mrb[0].mxu0
        %v854 = vadd.f32 0.0, %v853
        %v855 = vpop.f32.mrb[0].mxu0
        %v856 = vpop.f32.mrb[0].mxu0
        %v857 = vadd.f32 0.0, %v856
        %v858 = vpop.f32.mrb[0].mxu0
        %859 = vmatprep.mubr.bf16.mxu0 0
        %860 = vmatmul.mubr.bf16.gmra.mrb[0].mxu0 %v716
        %v861 = vpop.f32.mrb[0].mxu0
        %v862 = vadd.f32 0.0, %v861
        %v863 = vpop.f32.mrb[0].mxu0
        %v864 = vpop.f32.mrb[0].mxu0
        %v865 = vadd.f32 0.0, %v864
        %v866 = vpop.f32.mrb[0].mxu0
        %867 = vmatprep.mubr.bf16.mxu0 0
        %868 = vmatmul.mubr.bf16.gmra.mrb[0].mxu0 %v719
        %v869 = vpop.f32.mrb[0].mxu0
        %v870 = vadd.f32 0.0, %v869
        %v871 = vpop.f32.mrb[0].mxu0
        %v872 = vpop.f32.mrb[0].mxu0
        %v873 = vadd.f32 0.0, %v872
        %v874 = vpop.f32.mrb[0].mxu0
        %875 = vmatprep.mubr.bf16.mxu0 0
        %876 = vmatmul.mubr.bf16.gmra.mrb[0].mxu0 %v722
        %v877 = vpop.f32.mrb[0].mxu0
        %v878 = vadd.f32 0.0, %v877
        %v879 = vpop.f32.mrb[0].mxu0
        %v880 = vpop.f32.mrb[0].mxu0
        %v881 = vadd.f32 0.0, %v880
        %v882 = vpop.f32.mrb[0].mxu0
        %883 = vmatprep.mubr.bf16.mxu0 0
        %884 = vmatmul.mubr.bf16.gmra.mrb[0].mxu0 %v725
        %v885 = vpop.f32.mrb[0].mxu0
        %v886 = vadd.f32 0.0, %v885
        %v887 = vpop.f32.mrb[0].mxu0
        %v888 = vpop.f32.mrb[0].mxu0
        %v889 = vadd.f32 0.0, %v888
        %v890 = vpop.f32.mrb[0].mxu0
        %891 = vdwg.mxu0
        %v924 = vunpack.c.l.b16 %v189
        %v925 = vunpack.c.l.b16 %v190
        %v926 = vunpack.c.l.b16 %v191
        %v927 = vunpack.c.l.b16 %v192
        %v928 = vunpack.c.l.b16 %v193
        %v929 = vunpack.c.l.b16 %v194
        %v930 = vunpack.c.l.b16 %v195
        %v931 = vunpack.c.l.b16 %v196
        %v932 = vunpack.c.l.b16 %v197
        %v933 = vunpack.c.l.b16 %v198
        %v934 = vunpack.c.l.b16 %v199
        %v935 = vunpack.c.l.b16 %v200
        %v936 = vunpack.c.l.b16 %v201
        %v937 = vunpack.c.l.b16 %v202
        %v938 = vunpack.c.l.b16 %v203
        %v939 = vunpack.c.l.b16 %v204
        %v940 = vunpack.c.l.b16 %v205
        %v941 = vunpack.c.l.b16 %v206
        %v942 = vunpack.c.l.b16 %v207
        %v943 = vunpack.c.l.b16 %v208
        %v944 = vunpack.c.l.b16 %v209
        %v945 = vunpack.c.l.b16 %v210
        %v946 = vunpack.c.l.b16 %v211
        %v947 = vunpack.c.l.b16 %v212
        %v948 = vunpack.c.l.b16 %v213
        %v949 = vunpack.c.l.b16 %v214
        %v950 = vunpack.c.l.b16 %v215
        %v951 = vunpack.c.l.b16 %v216
        %v952 = vunpack.c.l.b16 %v217
        %v953 = vunpack.c.l.b16 %v218
        %v954 = vunpack.c.l.b16 %v219
        %v955 = vunpack.c.l.b16 %v220
        %v956 = vpack.c.b16 %v925, %v924
        %v957 = vpack.c.b16 %v927, %v926
        %v958 = vpack.c.b16 %v929, %v928
        %v959 = vpack.c.b16 %v931, %v930
        %v960 = vpack.c.b16 %v933, %v932
        %v961 = vpack.c.b16 %v935, %v934
        %v962 = vpack.c.b16 %v937, %v936
        %v963 = vpack.c.b16 %v939, %v938
        %v964 = vpack.c.b16 %v941, %v940
        %v965 = vpack.c.b16 %v943, %v942
        %v966 = vpack.c.b16 %v945, %v944
        %v967 = vpack.c.b16 %v947, %v946
        %v968 = vpack.c.b16 %v949, %v948
        %v969 = vpack.c.b16 %v951, %v950
        %v970 = vpack.c.b16 %v953, %v952
        %v971 = vpack.c.b16 %v955, %v954
        %v973 = vsel %vm678, %v956, 0
        %v976 = vsel %vm678, %v957, 0
        %v979 = vsel %vm678, %v958, 0
        %v982 = vsel %vm678, %v959, 0
        %v985 = vsel %vm678, %v960, 0
        %v988 = vsel %vm678, %v961, 0
        %v991 = vsel %vm678, %v962, 0
        %v994 = vsel %vm678, %v963, 0
        %v997 = vsel %vm678, %v964, 0
        %v1000 = vsel %vm678, %v965, 0
        %v1003 = vsel %vm678, %v966, 0
        %v1006 = vsel %vm678, %v967, 0
        %v1009 = vsel %vm678, %v968, 0
        %v1012 = vsel %vm678, %v969, 0
        %v1015 = vsel %vm678, %v970, 0
        %v1018 = vsel %vm678, %v971, 0
        %v1021 = vsel %vm727, %v221, 0
        %1023 = vmatprep.subr.bf16.mxu0 0
        %1024 = vmatpush1.bf16.msra.mxu0 %v1021
        %1025 = vmatprep.subr.bf16.mxu0 0
        %1026 = vmatpush1.bf16.msra.mxu0 0
        %1027 = vmatprep.subr.bf16.mxu0 0
        %1028 = vmatpush1.bf16.msra.mxu0 0
        %1029 = vmatprep.subr.bf16.mxu0 0
        %1030 = vmatpush1.bf16.msra.mxu0 0
        %1031 = vmatprep.subr.bf16.mxu0 0
        %1032 = vmatpush1.bf16.msra.mxu0 0
        %1033 = vmatprep.subr.bf16.mxu0 0
        %1034 = vmatpush1.bf16.msra.mxu0 0
        %1035 = vmatprep.subr.bf16.mxu0 0
        %1036 = vmatpush1.bf16.msra.mxu0 0
        %1037 = vmatprep.subr.bf16.mxu0 0
        %1038 = vmatpush1.bf16.msra.mxu0 0
        %1039 = vmatprep.subr.bf16.mxu0 0
        %1040 = vmatpush1.bf16.msra.mxu0 0
        %1041 = vmatprep.subr.bf16.mxu0 0
        %1042 = vmatpush1.bf16.msra.mxu0 0
        %1043 = vmatprep.subr.bf16.mxu0 0
        %1044 = vmatpush1.bf16.msra.mxu0 0
        %1045 = vmatprep.subr.bf16.mxu0 0
        %1046 = vmatpush1.bf16.msra.mxu0 0
        %1047 = vmatprep.subr.bf16.mxu0 0
        %1048 = vmatpush1.bf16.msra.mxu0 0
        %1049 = vmatprep.subr.bf16.mxu0 0
        %1050 = vmatpush1.bf16.msra.mxu0 0
        %1051 = vmatprep.subr.bf16.mxu0 0
        %1052 = vmatpush1.bf16.msra.mxu0 0
        %1053 = vmatprep.subr.bf16.mxu0 0
        %1054 = vmatpush1.bf16.msra.mxu0 0
        %1055 = vmatprep.mubr.bf16.mxu0 0
        %1056 = vmatmul.mubr.bf16.gmra.mrb[0].mxu0 %v973
        %v1057 = vpop.f32.mrb[0].mxu0
        %v1058 = vadd.f32 %v766, %v1057
        %v1059 = vpop.f32.mrb[0].mxu0
        %v1060 = vpop.f32.mrb[0].mxu0
        %v1061 = vadd.f32 %v769, %v1060
        %v1062 = vpop.f32.mrb[0].mxu0
        %1063 = vmatprep.mubr.bf16.mxu0 0
        %1064 = vmatmul.mubr.bf16.gmra.mrb[0].mxu0 %v976
        %v1065 = vpop.f32.mrb[0].mxu0
        %v1066 = vadd.f32 %v774, %v1065
        %v1067 = vpop.f32.mrb[0].mxu0
        %v1068 = vpop.f32.mrb[0].mxu0
        %v1069 = vadd.f32 %v777, %v1068
        %v1070 = vpop.f32.mrb[0].mxu0
        %1071 = vmatprep.mubr.bf16.mxu0 0
        %1072 = vmatmul.mubr.bf16.gmra.mrb[0].mxu0 %v979
        %v1073 = vpop.f32.mrb[0].mxu0
        %v1074 = vadd.f32 %v782, %v1073
        %v1075 = vpop.f32.mrb[0].mxu0
        %v1076 = vpop.f32.mrb[0].mxu0
        %v1077 = vadd.f32 %v785, %v1076
        %v1078 = vpop.f32.mrb[0].mxu0
        %1079 = vmatprep.mubr.bf16.mxu0 0
        %1080 = vmatmul.mubr.bf16.gmra.mrb[0].mxu0 %v982
        %v1081 = vpop.f32.mrb[0].mxu0
        %v1082 = vadd.f32 %v790, %v1081
        %v1083 = vpop.f32.mrb[0].mxu0
        %v1084 = vpop.f32.mrb[0].mxu0
        %v1085 = vadd.f32 %v793, %v1084
        %v1086 = vpop.f32.mrb[0].mxu0
        %1087 = vmatprep.mubr.bf16.mxu0 0
        %1088 = vmatmul.mubr.bf16.gmra.mrb[0].mxu0 %v985
        %v1089 = vpop.f32.mrb[0].mxu0
        %v1090 = vadd.f32 %v798, %v1089
        %v1091 = vpop.f32.mrb[0].mxu0
        %v1092 = vpop.f32.mrb[0].mxu0
        %v1093 = vadd.f32 %v801, %v1092
        %v1094 = vpop.f32.mrb[0].mxu0
        %1095 = vmatprep.mubr.bf16.mxu0 0
        %1096 = vmatmul.mubr.bf16.gmra.mrb[0].mxu0 %v988
        %v1097 = vpop.f32.mrb[0].mxu0
        %v1098 = vadd.f32 %v806, %v1097
        %v1099 = vpop.f32.mrb[0].mxu0
        %v1100 = vpop.f32.mrb[0].mxu0
        %v1101 = vadd.f32 %v809, %v1100
        %v1102 = vpop.f32.mrb[0].mxu0
        %1103 = vmatprep.mubr.bf16.mxu0 0
        %1104 = vmatmul.mubr.bf16.gmra.mrb[0].mxu0 %v991
        %v1105 = vpop.f32.mrb[0].mxu0
        %v1106 = vadd.f32 %v814, %v1105
        %v1107 = vpop.f32.mrb[0].mxu0
        %v1108 = vpop.f32.mrb[0].mxu0
        %v1109 = vadd.f32 %v817, %v1108
        %v1110 = vpop.f32.mrb[0].mxu0
        %1111 = vmatprep.mubr.bf16.mxu0 0
        %1112 = vmatmul.mubr.bf16.gmra.mrb[0].mxu0 %v994
        %v1113 = vpop.f32.mrb[0].mxu0
        %v1114 = vadd.f32 %v822, %v1113
        %v1115 = vpop.f32.mrb[0].mxu0
        %v1116 = vpop.f32.mrb[0].mxu0
        %v1117 = vadd.f32 %v825, %v1116
        %v1118 = vpop.f32.mrb[0].mxu0
        %1119 = vmatprep.mubr.bf16.mxu0 0
        %1120 = vmatmul.mubr.bf16.gmra.mrb[0].mxu0 %v997
        %v1121 = vpop.f32.mrb[0].mxu0
        %v1122 = vadd.f32 %v830, %v1121
        %v1123 = vpop.f32.mrb[0].mxu0
        %v1124 = vpop.f32.mrb[0].mxu0
        %v1125 = vadd.f32 %v833, %v1124
        %v1126 = vpop.f32.mrb[0].mxu0
        %1127 = vmatprep.mubr.bf16.mxu0 0
        %1128 = vmatmul.mubr.bf16.gmra.mrb[0].mxu0 %v1000
        %v1129 = vpop.f32.mrb[0].mxu0
        %v1130 = vadd.f32 %v838, %v1129
        %v1131 = vpop.f32.mrb[0].mxu0
        %v1132 = vpop.f32.mrb[0].mxu0
        %v1133 = vadd.f32 %v841, %v1132
        %v1134 = vpop.f32.mrb[0].mxu0
        %1135 = vmatprep.mubr.bf16.mxu0 0
        %1136 = vmatmul.mubr.bf16.gmra.mrb[0].mxu0 %v1003
        %v1137 = vpop.f32.mrb[0].mxu0
        %v1138 = vadd.f32 %v846, %v1137
        %v1139 = vpop.f32.mrb[0].mxu0
        %v1140 = vpop.f32.mrb[0].mxu0
        %v1141 = vadd.f32 %v849, %v1140
        %v1142 = vpop.f32.mrb[0].mxu0
        %1143 = vmatprep.mubr.bf16.mxu0 0
        %1144 = vmatmul.mubr.bf16.gmra.mrb[0].mxu0 %v1006
        %v1145 = vpop.f32.mrb[0].mxu0
        %v1146 = vadd.f32 %v854, %v1145
        %v1147 = vpop.f32.mrb[0].mxu0
        %v1148 = vpop.f32.mrb[0].mxu0
        %v1149 = vadd.f32 %v857, %v1148
        %v1150 = vpop.f32.mrb[0].mxu0
        %1151 = vmatprep.mubr.bf16.mxu0 0
        %1152 = vmatmul.mubr.bf16.gmra.mrb[0].mxu0 %v1009
        %v1153 = vpop.f32.mrb[0].mxu0
        %v1154 = vadd.f32 %v862, %v1153
        %v1155 = vpop.f32.mrb[0].mxu0
        %v1156 = vpop.f32.mrb[0].mxu0
        %v1157 = vadd.f32 %v865, %v1156
        %v1158 = vpop.f32.mrb[0].mxu0
        %1159 = vmatprep.mubr.bf16.mxu0 0
        %1160 = vmatmul.mubr.bf16.gmra.mrb[0].mxu0 %v1012
        %v1161 = vpop.f32.mrb[0].mxu0
        %v1162 = vadd.f32 %v870, %v1161
        %v1163 = vpop.f32.mrb[0].mxu0
        %v1164 = vpop.f32.mrb[0].mxu0
        %v1165 = vadd.f32 %v873, %v1164
        %v1166 = vpop.f32.mrb[0].mxu0
        %1167 = vmatprep.mubr.bf16.mxu0 0
        %1168 = vmatmul.mubr.bf16.gmra.mrb[0].mxu0 %v1015
        %v1169 = vpop.f32.mrb[0].mxu0
        %v1170 = vadd.f32 %v878, %v1169
        %v1171 = vpop.f32.mrb[0].mxu0
        %v1172 = vpop.f32.mrb[0].mxu0
        %v1173 = vadd.f32 %v881, %v1172
        %v1174 = vpop.f32.mrb[0].mxu0
        %1175 = vmatprep.mubr.bf16.mxu0 0
        %1176 = vmatmul.mubr.bf16.gmra.mrb[0].mxu0 %v1018
        %v1177 = vpop.f32.mrb[0].mxu0
        %v1178 = vadd.f32 %v886, %v1177
        %v1179 = vpop.f32.mrb[0].mxu0
        %v1180 = vpop.f32.mrb[0].mxu0
        %v1181 = vadd.f32 %v889, %v1180
        %v1182 = vpop.f32.mrb[0].mxu0
        %1183 = vdwg.mxu0
        %v1184 = vld [vmem:[%s188] sm:$0xe]
        %v1185 = vld [vmem:[%s188 + $0xc] sm:$0xe]
        %v1186 = vld [vmem:[%s188 + $0x18] sm:$0xe]
        %v1187 = vld [vmem:[%s188 + $0x24] sm:$0xe]
        %v1188 = vld [vmem:[%s188 + $0x30] sm:$0xe]
        %v1189 = vld [vmem:[%s188 + $0x3c] sm:$0xe]
        %v1190 = vld [vmem:[%s188 + $0x48] sm:$0xe]
        %v1191 = vld [vmem:[%s188 + $0x54] sm:$0xe]
        %v1192 = vld [vmem:[%s188 + $0x60] sm:$0xe]
        %v1193 = vld [vmem:[%s188 + $0x6c] sm:$0xe]
        %v1194 = vld [vmem:[%s188 + $0x78] sm:$0xe]
        %v1195 = vld [vmem:[%s188 + $0x84] sm:$0xe]
        %v1196 = vld [vmem:[%s188 + $0x90] sm:$0xe]
        %v1197 = vld [vmem:[%s188 + $0x9c] sm:$0xe]
        %v1198 = vld [vmem:[%s188 + $0xa8] sm:$0xe]
        %v1199 = vld [vmem:[%s188 + $0xb4] sm:$0xe]
        %v1200 = vld [vmem:[%s1 + $0x4] sm:$0x3]
        %vm1233 = vcmask 1042432
        %vm1234 = vcmask 1046532
        %vm1235 = vmor %vm1233, %vm1234
        %v1236 = vrot.slane %v1184, 5
        %v1237 = vrot.slane %v1236, 4
        %v1238 = vrot.slane %v190, 5
        %v1239 = vsel %vm1235, %v1237, %v1238
        %v1240 = vrot.slane %v1238, 4
        %v1241 = vrot.slane %v222, 5
        %v1242 = vsel %vm1235, %v1240, %v1241
        %v1243 = vrot.slane %v1185, 5
        %v1244 = vrot.slane %v1243, 4
        %v1245 = vrot.slane %v192, 5
        %v1246 = vsel %vm1235, %v1244, %v1245
        %v1247 = vrot.slane %v1245, 4
        %v1248 = vrot.slane %v223, 5
        %v1249 = vsel %vm1235, %v1247, %v1248
        %v1250 = vrot.slane %v1186, 5
        %v1251 = vrot.slane %v1250, 4
        %v1252 = vrot.slane %v194, 5
        %v1253 = vsel %vm1235, %v1251, %v1252
        %v1254 = vrot.slane %v1252, 4
        %v1255 = vrot.slane %v224, 5
        %v1256 = vsel %vm1235, %v1254, %v1255
        %v1257 = vrot.slane %v1187, 5
        %v1258 = vrot.slane %v1257, 4
        %v1259 = vrot.slane %v196, 5
        %v1260 = vsel %vm1235, %v1258, %v1259
        %v1261 = vrot.slane %v1259, 4
        %v1262 = vrot.slane %v225, 5
        %v1263 = vsel %vm1235, %v1261, %v1262
        %v1264 = vrot.slane %v1188, 5
        %v1265 = vrot.slane %v1264, 4
        %v1266 = vrot.slane %v198, 5
        %v1267 = vsel %vm1235, %v1265, %v1266
        %v1268 = vrot.slane %v1266, 4
        %v1269 = vrot.slane %v226, 5
        %v1270 = vsel %vm1235, %v1268, %v1269
        %v1271 = vrot.slane %v1189, 5
        %v1272 = vrot.slane %v1271, 4
        %v1273 = vrot.slane %v200, 5
        %v1274 = vsel %vm1235, %v1272, %v1273
        %v1275 = vrot.slane %v1273, 4
        %v1276 = vrot.slane %v227, 5
        %v1277 = vsel %vm1235, %v1275, %v1276
        %v1278 = vrot.slane %v1190, 5
        %v1279 = vrot.slane %v1278, 4
        %v1280 = vrot.slane %v202, 5
        %v1281 = vsel %vm1235, %v1279, %v1280
        %v1282 = vrot.slane %v1280, 4
        %v1283 = vrot.slane %v228, 5
        %v1284 = vsel %vm1235, %v1282, %v1283
        %v1285 = vrot.slane %v1191, 5
        %v1286 = vrot.slane %v1285, 4
        %v1287 = vrot.slane %v204, 5
        %v1288 = vsel %vm1235, %v1286, %v1287
        %v1289 = vrot.slane %v1287, 4
        %v1290 = vrot.slane %v229, 5
        %v1291 = vsel %vm1235, %v1289, %v1290
        %v1292 = vrot.slane %v1192, 5
        %v1293 = vrot.slane %v1292, 4
        %v1294 = vrot.slane %v206, 5
        %v1295 = vsel %vm1235, %v1293, %v1294
        %v1296 = vrot.slane %v1294, 4
        %v1297 = vrot.slane %v230, 5
        %v1298 = vsel %vm1235, %v1296, %v1297
        %v1299 = vrot.slane %v1193, 5
        %v1300 = vrot.slane %v1299, 4
        %v1301 = vrot.slane %v208, 5
        %v1302 = vsel %vm1235, %v1300, %v1301
        %v1303 = vrot.slane %v1301, 4
        %v1304 = vrot.slane %v231, 5
        %v1305 = vsel %vm1235, %v1303, %v1304
        %v1306 = vrot.slane %v1194, 5
        %v1307 = vrot.slane %v1306, 4
        %v1308 = vrot.slane %v210, 5
        %v1309 = vsel %vm1235, %v1307, %v1308
        %v1310 = vrot.slane %v1308, 4
        %v1311 = vrot.slane %v232, 5
        %v1312 = vsel %vm1235, %v1310, %v1311
        %v1313 = vrot.slane %v1195, 5
        %v1314 = vrot.slane %v1313, 4
        %v1315 = vrot.slane %v212, 5
        %v1316 = vsel %vm1235, %v1314, %v1315
        %v1317 = vrot.slane %v1315, 4
        %v1318 = vrot.slane %v233, 5
        %v1319 = vsel %vm1235, %v1317, %v1318
        %v1320 = vrot.slane %v1196, 5
        %v1321 = vrot.slane %v1320, 4
        %v1322 = vrot.slane %v214, 5
        %v1323 = vsel %vm1235, %v1321, %v1322
        %v1324 = vrot.slane %v1322, 4
        %v1325 = vrot.slane %v234, 5
        %v1326 = vsel %vm1235, %v1324, %v1325
        %v1327 = vrot.slane %v1197, 5
        %v1328 = vrot.slane %v1327, 4
        %v1329 = vrot.slane %v216, 5
        %v1330 = vsel %vm1235, %v1328, %v1329
        %v1331 = vrot.slane %v1329, 4
        %v1332 = vrot.slane %v235, 5
        %v1333 = vsel %vm1235, %v1331, %v1332
        %v1334 = vrot.slane %v1198, 5
        %v1335 = vrot.slane %v1334, 4
        %v1336 = vrot.slane %v218, 5
        %v1337 = vsel %vm1235, %v1335, %v1336
        %v1338 = vrot.slane %v1336, 4
        %v1339 = vrot.slane %v236, 5
        %v1340 = vsel %vm1235, %v1338, %v1339
        %v1341 = vrot.slane %v1199, 5
        %v1342 = vrot.slane %v1341, 4
        %v1343 = vrot.slane %v220, 5
        %v1344 = vsel %vm1235, %v1342, %v1343
        %v1345 = vrot.slane %v1343, 4
        %v1346 = vrot.slane %v237, 5
        %v1347 = vsel %vm1235, %v1345, %v1346
        %v1348 = vunpack.c.l.b16 %v1239
        %v1349 = vunpack.c.l.b16 %v1242
        %v1350 = vunpack.c.l.b16 %v1246
        %v1351 = vunpack.c.l.b16 %v1249
        %v1352 = vunpack.c.l.b16 %v1253
        %v1353 = vunpack.c.l.b16 %v1256
        %v1354 = vunpack.c.l.b16 %v1260
        %v1355 = vunpack.c.l.b16 %v1263
        %v1356 = vunpack.c.l.b16 %v1267
        %v1357 = vunpack.c.l.b16 %v1270
        %v1358 = vunpack.c.l.b16 %v1274
        %v1359 = vunpack.c.l.b16 %v1277
        %v1360 = vunpack.c.l.b16 %v1281
        %v1361 = vunpack.c.l.b16 %v1284
        %v1362 = vunpack.c.l.b16 %v1288
        %v1363 = vunpack.c.l.b16 %v1291
        %v1364 = vunpack.c.l.b16 %v1295
        %v1365 = vunpack.c.l.b16 %v1298
        %v1366 = vunpack.c.l.b16 %v1302
        %v1367 = vunpack.c.l.b16 %v1305
        %v1368 = vunpack.c.l.b16 %v1309
        %v1369 = vunpack.c.l.b16 %v1312
        %v1370 = vunpack.c.l.b16 %v1316
        %v1371 = vunpack.c.l.b16 %v1319
        %v1372 = vunpack.c.l.b16 %v1323
        %v1373 = vunpack.c.l.b16 %v1326
        %v1374 = vunpack.c.l.b16 %v1330
        %v1375 = vunpack.c.l.b16 %v1333
        %v1376 = vunpack.c.l.b16 %v1337
        %v1377 = vunpack.c.l.b16 %v1340
        %v1378 = vunpack.c.l.b16 %v1344
        %v1379 = vunpack.c.l.b16 %v1347
        %v1380 = vpack.c.b16 %v1349, %v1348
        %v1381 = vpack.c.b16 %v1351, %v1350
        %v1382 = vpack.c.b16 %v1353, %v1352
        %v1383 = vpack.c.b16 %v1355, %v1354
        %v1384 = vpack.c.b16 %v1357, %v1356
        %v1385 = vpack.c.b16 %v1359, %v1358
        %v1386 = vpack.c.b16 %v1361, %v1360
        %v1387 = vpack.c.b16 %v1363, %v1362
        %v1388 = vpack.c.b16 %v1365, %v1364
        %v1389 = vpack.c.b16 %v1367, %v1366
        %v1390 = vpack.c.b16 %v1369, %v1368
        %v1391 = vpack.c.b16 %v1371, %v1370
        %v1392 = vpack.c.b16 %v1373, %v1372
        %v1393 = vpack.c.b16 %v1375, %v1374
        %v1394 = vpack.c.b16 %v1377, %v1376
        %v1395 = vpack.c.b16 %v1379, %v1378
        %v1397 = vsel %vm678, %v1380, 0
        %v1400 = vsel %vm678, %v1381, 0
        %v1403 = vsel %vm678, %v1382, 0
        %v1406 = vsel %vm678, %v1383, 0
        %v1409 = vsel %vm678, %v1384, 0
        %v1412 = vsel %vm678, %v1385, 0
        %v1415 = vsel %vm678, %v1386, 0
        %v1418 = vsel %vm678, %v1387, 0
        %v1421 = vsel %vm678, %v1388, 0
        %v1424 = vsel %vm678, %v1389, 0
        %v1427 = vsel %vm678, %v1390, 0
        %v1430 = vsel %vm678, %v1391, 0
        %v1433 = vsel %vm678, %v1392, 0
        %v1436 = vsel %vm678, %v1393, 0
        %v1439 = vsel %vm678, %v1394, 0
        %v1442 = vsel %vm678, %v1395, 0
        %v1445 = vsel %vm727, %v1200, 0
        %1447 = vmatprep.subr.bf16.mxu0 0
        %1448 = vmatpush1.bf16.msra.mxu0 %v1445
        %1449 = vmatprep.subr.bf16.mxu0 0
        %1450 = vmatpush1.bf16.msra.mxu0 0
        %1451 = vmatprep.subr.bf16.mxu0 0
        %1452 = vmatpush1.bf16.msra.mxu0 0
        %1453 = vmatprep.subr.bf16.mxu0 0
        %1454 = vmatpush1.bf16.msra.mxu0 0
        %1455 = vmatprep.subr.bf16.mxu0 0
        %1456 = vmatpush1.bf16.msra.mxu0 0
        %1457 = vmatprep.subr.bf16.mxu0 0
        %1458 = vmatpush1.bf16.msra.mxu0 0
        %1459 = vmatprep.subr.bf16.mxu0 0
        %1460 = vmatpush1.bf16.msra.mxu0 0
        %1461 = vmatprep.subr.bf16.mxu0 0
        %1462 = vmatpush1.bf16.msra.mxu0 0
        %1463 = vmatprep.subr.bf16.mxu0 0
        %1464 = vmatpush1.bf16.msra.mxu0 0
        %1465 = vmatprep.subr.bf16.mxu0 0
        %1466 = vmatpush1.bf16.msra.mxu0 0
        %1467 = vmatprep.subr.bf16.mxu0 0
        %1468 = vmatpush1.bf16.msra.mxu0 0
        %1469 = vmatprep.subr.bf16.mxu0 0
        %1470 = vmatpush1.bf16.msra.mxu0 0
        %1471 = vmatprep.subr.bf16.mxu0 0
        %1472 = vmatpush1.bf16.msra.mxu0 0
        %1473 = vmatprep.subr.bf16.mxu0 0
        %1474 = vmatpush1.bf16.msra.mxu0 0
        %1475 = vmatprep.subr.bf16.mxu0 0
        %1476 = vmatpush1.bf16.msra.mxu0 0
        %1477 = vmatprep.subr.bf16.mxu0 0
        %1478 = vmatpush1.bf16.msra.mxu0 0
        %1479 = vmatprep.mubr.bf16.mxu0 0
        %1480 = vmatmul.mubr.bf16.gmra.mrb[0].mxu0 %v1397
        %v1481 = vpop.f32.mrb[0].mxu0
        %v1482 = vadd.f32 0.0, %v1481
        %v1483 = vpop.f32.mrb[0].mxu0
        %v1484 = vpop.f32.mrb[0].mxu0
        %v1485 = vadd.f32 0.0, %v1484
        %v1486 = vpop.f32.mrb[0].mxu0
        %1487 = vmatprep.mubr.bf16.mxu0 0
        %1488 = vmatmul.mubr.bf16.gmra.mrb[0].mxu0 %v1400
        %v1489 = vpop.f32.mrb[0].mxu0
        %v1490 = vadd.f32 0.0, %v1489
        %v1491 = vpop.f32.mrb[0].mxu0
        %v1492 = vpop.f32.mrb[0].mxu0
        %v1493 = vadd.f32 0.0, %v1492
        %v1494 = vpop.f32.mrb[0].mxu0
        %1495 = vmatprep.mubr.bf16.mxu0 0
        %1496 = vmatmul.mubr.bf16.gmra.mrb[0].mxu0 %v1403
        %v1497 = vpop.f32.mrb[0].mxu0
        %v1498 = vadd.f32 0.0, %v1497
        %v1499 = vpop.f32.mrb[0].mxu0
        %v1500 = vpop.f32.mrb[0].mxu0
        %v1501 = vadd.f32 0.0, %v1500
        %v1502 = vpop.f32.mrb[0].mxu0
        %1503 = vmatprep.mubr.bf16.mxu0 0
        %1504 = vmatmul.mubr.bf16.gmra.mrb[0].mxu0 %v1406
        %v1505 = vpop.f32.mrb[0].mxu0
        %v1506 = vadd.f32 0.0, %v1505
        %v1507 = vpop.f32.mrb[0].mxu0
        %v1508 = vpop.f32.mrb[0].mxu0
        %v1509 = vadd.f32 0.0, %v1508
        %v1510 = vpop.f32.mrb[0].mxu0
        %1511 = vmatprep.mubr.bf16.mxu0 0
        %1512 = vmatmul.mubr.bf16.gmra.mrb[0].mxu0 %v1409
        %v1513 = vpop.f32.mrb[0].mxu0
        %v1514 = vadd.f32 0.0, %v1513
        %v1515 = vpop.f32.mrb[0].mxu0
        %v1516 = vpop.f32.mrb[0].mxu0
        %v1517 = vadd.f32 0.0, %v1516
        %v1518 = vpop.f32.mrb[0].mxu0
        %1519 = vmatprep.mubr.bf16.mxu0 0
        %1520 = vmatmul.mubr.bf16.gmra.mrb[0].mxu0 %v1412
        %v1521 = vpop.f32.mrb[0].mxu0
        %v1522 = vadd.f32 0.0, %v1521
        %v1523 = vpop.f32.mrb[0].mxu0
        %v1524 = vpop.f32.mrb[0].mxu0
        %v1525 = vadd.f32 0.0, %v1524
        %v1526 = vpop.f32.mrb[0].mxu0
        %1527 = vmatprep.mubr.bf16.mxu0 0
        %1528 = vmatmul.mubr.bf16.gmra.mrb[0].mxu0 %v1415
        %v1529 = vpop.f32.mrb[0].mxu0
        %v1530 = vadd.f32 0.0, %v1529
        %v1531 = vpop.f32.mrb[0].mxu0
        %v1532 = vpop.f32.mrb[0].mxu0
        %v1533 = vadd.f32 0.0, %v1532
        %v1534 = vpop.f32.mrb[0].mxu0
        %1535 = vmatprep.mubr.bf16.mxu0 0
        %1536 = vmatmul.mubr.bf16.gmra.mrb[0].mxu0 %v1418
        %v1537 = vpop.f32.mrb[0].mxu0
        %v1538 = vadd.f32 0.0, %v1537
        %v1539 = vpop.f32.mrb[0].mxu0
        %v1540 = vpop.f32.mrb[0].mxu0
        %v1541 = vadd.f32 0.0, %v1540
        %v1542 = vpop.f32.mrb[0].mxu0
        %1543 = vmatprep.mubr.bf16.mxu0 0
        %1544 = vmatmul.mubr.bf16.gmra.mrb[0].mxu0 %v1421
        %v1545 = vpop.f32.mrb[0].mxu0
        %v1546 = vadd.f32 0.0, %v1545
        %v1547 = vpop.f32.mrb[0].mxu0
        %v1548 = vpop.f32.mrb[0].mxu0
        %v1549 = vadd.f32 0.0, %v1548
        %v1550 = vpop.f32.mrb[0].mxu0
        %1551 = vmatprep.mubr.bf16.mxu0 0
        %1552 = vmatmul.mubr.bf16.gmra.mrb[0].mxu0 %v1424
        %v1553 = vpop.f32.mrb[0].mxu0
        %v1554 = vadd.f32 0.0, %v1553
        %v1555 = vpop.f32.mrb[0].mxu0
        %v1556 = vpop.f32.mrb[0].mxu0
        %v1557 = vadd.f32 0.0, %v1556
        %v1558 = vpop.f32.mrb[0].mxu0
        %1559 = vmatprep.mubr.bf16.mxu0 0
        %1560 = vmatmul.mubr.bf16.gmra.mrb[0].mxu0 %v1427
        %v1561 = vpop.f32.mrb[0].mxu0
        %v1562 = vadd.f32 0.0, %v1561
        %v1563 = vpop.f32.mrb[0].mxu0
        %v1564 = vpop.f32.mrb[0].mxu0
        %v1565 = vadd.f32 0.0, %v1564
        %v1566 = vpop.f32.mrb[0].mxu0
        %1567 = vmatprep.mubr.bf16.mxu0 0
        %1568 = vmatmul.mubr.bf16.gmra.mrb[0].mxu0 %v1430
        %v1569 = vpop.f32.mrb[0].mxu0
        %v1570 = vadd.f32 0.0, %v1569
        %v1571 = vpop.f32.mrb[0].mxu0
        %v1572 = vpop.f32.mrb[0].mxu0
        %v1573 = vadd.f32 0.0, %v1572
        %v1574 = vpop.f32.mrb[0].mxu0
        %1575 = vmatprep.mubr.bf16.mxu0 0
        %1576 = vmatmul.mubr.bf16.gmra.mrb[0].mxu0 %v1433
        %v1577 = vpop.f32.mrb[0].mxu0
        %v1578 = vadd.f32 0.0, %v1577
        %v1579 = vpop.f32.mrb[0].mxu0
        %v1580 = vpop.f32.mrb[0].mxu0
        %v1581 = vadd.f32 0.0, %v1580
        %v1582 = vpop.f32.mrb[0].mxu0
        %1583 = vmatprep.mubr.bf16.mxu0 0
        %1584 = vmatmul.mubr.bf16.gmra.mrb[0].mxu0 %v1436
        %v1585 = vpop.f32.mrb[0].mxu0
        %v1586 = vadd.f32 0.0, %v1585
        %v1587 = vpop.f32.mrb[0].mxu0
        %v1588 = vpop.f32.mrb[0].mxu0
        %v1589 = vadd.f32 0.0, %v1588
        %v1590 = vpop.f32.mrb[0].mxu0
        %1591 = vmatprep.mubr.bf16.mxu0 0
        %1592 = vmatmul.mubr.bf16.gmra.mrb[0].mxu0 %v1439
        %v1593 = vpop.f32.mrb[0].mxu0
        %v1594 = vadd.f32 0.0, %v1593
        %v1595 = vpop.f32.mrb[0].mxu0
        %v1596 = vpop.f32.mrb[0].mxu0
        %v1597 = vadd.f32 0.0, %v1596
        %v1598 = vpop.f32.mrb[0].mxu0
        %1599 = vmatprep.mubr.bf16.mxu0 0
        %1600 = vmatmul.mubr.bf16.gmra.mrb[0].mxu0 %v1442
        %v1601 = vpop.f32.mrb[0].mxu0
        %v1602 = vadd.f32 0.0, %v1601
        %v1603 = vpop.f32.mrb[0].mxu0
        %v1604 = vpop.f32.mrb[0].mxu0
        %v1605 = vadd.f32 0.0, %v1604
        %v1606 = vpop.f32.mrb[0].mxu0
        %1607 = vdwg.mxu0
        %v1608 = vadd.f32 %v1058, %v1482
        %v1609 = vadd.f32 %v1061, %v1485
        %v1610 = vadd.f32 %v1066, %v1490
        %v1611 = vadd.f32 %v1069, %v1493
        %v1612 = vadd.f32 %v1074, %v1498
        %v1613 = vadd.f32 %v1077, %v1501
        %v1614 = vadd.f32 %v1082, %v1506
        %v1615 = vadd.f32 %v1085, %v1509
        %v1616 = vadd.f32 %v1090, %v1514
        %v1617 = vadd.f32 %v1093, %v1517
        %v1618 = vadd.f32 %v1098, %v1522
        %v1619 = vadd.f32 %v1101, %v1525
        %v1620 = vadd.f32 %v1106, %v1530
        %v1621 = vadd.f32 %v1109, %v1533
        %v1622 = vadd.f32 %v1114, %v1538
        %v1623 = vadd.f32 %v1117, %v1541
        %v1624 = vadd.f32 %v1122, %v1546
        %v1625 = vadd.f32 %v1125, %v1549
        %v1626 = vadd.f32 %v1130, %v1554
        %v1627 = vadd.f32 %v1133, %v1557
        %v1628 = vadd.f32 %v1138, %v1562
        %v1629 = vadd.f32 %v1141, %v1565
        %v1630 = vadd.f32 %v1146, %v1570
        %v1631 = vadd.f32 %v1149, %v1573
        %v1632 = vadd.f32 %v1154, %v1578
        %v1633 = vadd.f32 %v1157, %v1581
        %v1634 = vadd.f32 %v1162, %v1586
        %v1635 = vadd.f32 %v1165, %v1589
        %v1636 = vadd.f32 %v1170, %v1594
        %v1637 = vadd.f32 %v1173, %v1597
        %v1638 = vadd.f32 %v1178, %v1602
        %v1639 = vadd.f32 %v1181, %v1605
        %s1640 = sadd.s32 %s185, 1
        %s1641 = smul.u32 %s1640, 3
        %s1642 = smul.addr %s1641, 4
        %s1643 = scalar_lea.vmem %s182, %s1642
        %v1644 = vld [vmem:[%s1643] sm:$0xf]
        %v1645 = vld [vmem:[%s1643 + $0x4] sm:$0xf]
        %v1646 = vld [vmem:[%s1643 + $0xc] sm:$0xf]
        %v1647 = vld [vmem:[%s1643 + $0x10] sm:$0xf]
        %v1648 = vld [vmem:[%s1643 + $0x18] sm:$0xf]
        %v1649 = vld [vmem:[%s1643 + $0x1c] sm:$0xf]
        %v1650 = vld [vmem:[%s1643 + $0x24] sm:$0xf]
        %v1651 = vld [vmem:[%s1643 + $0x28] sm:$0xf]
        %v1652 = vld [vmem:[%s1643 + $0x30] sm:$0xf]
        %v1653 = vld [vmem:[%s1643 + $0x34] sm:$0xf]
        %v1654 = vld [vmem:[%s1643 + $0x3c] sm:$0xf]
        %v1655 = vld [vmem:[%s1643 + $0x40] sm:$0xf]
        %v1656 = vld [vmem:[%s1643 + $0x48] sm:$0xf]
        %v1657 = vld [vmem:[%s1643 + $0x4c] sm:$0xf]
        %v1658 = vld [vmem:[%s1643 + $0x54] sm:$0xf]
        %v1659 = vld [vmem:[%s1643 + $0x58] sm:$0xf]
        %v1660 = vld [vmem:[%s1643 + $0x60] sm:$0xf]
        %v1661 = vld [vmem:[%s1643 + $0x64] sm:$0xf]
        %v1662 = vld [vmem:[%s1643 + $0x6c] sm:$0xf]
        %v1663 = vld [vmem:[%s1643 + $0x70] sm:$0xf]
        %v1664 = vld [vmem:[%s1643 + $0x78] sm:$0xf]
        %v1665 = vld [vmem:[%s1643 + $0x7c] sm:$0xf]
        %v1666 = vld [vmem:[%s1643 + $0x84] sm:$0xf]
        %v1667 = vld [vmem:[%s1643 + $0x88] sm:$0xf]
        %v1668 = vld [vmem:[%s1643 + $0x90] sm:$0xf]
        %v1669 = vld [vmem:[%s1643 + $0x94] sm:$0xf]
        %v1670 = vld [vmem:[%s1643 + $0x9c] sm:$0xf]
        %v1671 = vld [vmem:[%s1643 + $0xa0] sm:$0xf]
        %v1672 = vld [vmem:[%s1643 + $0xa8] sm:$0xf]
        %v1673 = vld [vmem:[%s1643 + $0xac] sm:$0xf]
        %v1674 = vld [vmem:[%s1643 + $0xb4] sm:$0xf]
        %v1675 = vld [vmem:[%s1643 + $0xb8] sm:$0xf]
        %v1676 = vld [vmem:[%s1 + $0x4] sm:$0xc]
        %v1709 = vunpack.c.l.b16 %v1644
        %v1710 = vunpack.c.l.b16 %v1645
        %v1711 = vunpack.c.l.b16 %v1646
        %v1712 = vunpack.c.l.b16 %v1647
        %v1713 = vunpack.c.l.b16 %v1648
        %v1714 = vunpack.c.l.b16 %v1649
        %v1715 = vunpack.c.l.b16 %v1650
        %v1716 = vunpack.c.l.b16 %v1651
        %v1717 = vunpack.c.l.b16 %v1652
        %v1718 = vunpack.c.l.b16 %v1653
        %v1719 = vunpack.c.l.b16 %v1654
        %v1720 = vunpack.c.l.b16 %v1655
        %v1721 = vunpack.c.l.b16 %v1656
        %v1722 = vunpack.c.l.b16 %v1657
        %v1723 = vunpack.c.l.b16 %v1658
        %v1724 = vunpack.c.l.b16 %v1659
        %v1725 = vunpack.c.l.b16 %v1660
        %v1726 = vunpack.c.l.b16 %v1661
        %v1727 = vunpack.c.l.b16 %v1662
        %v1728 = vunpack.c.l.b16 %v1663
        %v1729 = vunpack.c.l.b16 %v1664
        %v1730 = vunpack.c.l.b16 %v1665
        %v1731 = vunpack.c.l.b16 %v1666
        %v1732 = vunpack.c.l.b16 %v1667
        %v1733 = vunpack.c.l.b16 %v1668
        %v1734 = vunpack.c.l.b16 %v1669
        %v1735 = vunpack.c.l.b16 %v1670
        %v1736 = vunpack.c.l.b16 %v1671
        %v1737 = vunpack.c.l.b16 %v1672
        %v1738 = vunpack.c.l.b16 %v1673
        %v1739 = vunpack.c.l.b16 %v1674
        %v1740 = vunpack.c.l.b16 %v1675
        %v1741 = vpack.c.b16 %v1710, %v1709
        %v1742 = vpack.c.b16 %v1712, %v1711
        %v1743 = vpack.c.b16 %v1714, %v1713
        %v1744 = vpack.c.b16 %v1716, %v1715
        %v1745 = vpack.c.b16 %v1718, %v1717
        %v1746 = vpack.c.b16 %v1720, %v1719
        %v1747 = vpack.c.b16 %v1722, %v1721
        %v1748 = vpack.c.b16 %v1724, %v1723
        %v1749 = vpack.c.b16 %v1726, %v1725
        %v1750 = vpack.c.b16 %v1728, %v1727
        %v1751 = vpack.c.b16 %v1730, %v1729
        %v1752 = vpack.c.b16 %v1732, %v1731
        %v1753 = vpack.c.b16 %v1734, %v1733
        %v1754 = vpack.c.b16 %v1736, %v1735
        %v1755 = vpack.c.b16 %v1738, %v1737
        %v1756 = vpack.c.b16 %v1740, %v1739
        %v1758 = vunpack.c.l.b16 %v1676
        %v1759 = vpack.c.b16 %v1758, %v1758
        %v1760 = vrot.slane %v1759, 2
        %v1762 = vsel %vm678, %v1741, 0
        %v1765 = vsel %vm678, %v1742, 0
        %v1768 = vsel %vm678, %v1743, 0
        %v1771 = vsel %vm678, %v1744, 0
        %v1774 = vsel %vm678, %v1745, 0
        %v1777 = vsel %vm678, %v1746, 0
        %v1780 = vsel %vm678, %v1747, 0
        %v1783 = vsel %vm678, %v1748, 0
        %v1786 = vsel %vm678, %v1749, 0
        %v1789 = vsel %vm678, %v1750, 0
        %v1792 = vsel %vm678, %v1751, 0
        %v1795 = vsel %vm678, %v1752, 0
        %v1798 = vsel %vm678, %v1753, 0
        %v1801 = vsel %vm678, %v1754, 0
        %v1804 = vsel %vm678, %v1755, 0
        %v1807 = vsel %vm678, %v1756, 0
        %v1810 = vsel %vm727, %v1760, 0
        %1812 = vmatprep.subr.bf16.mxu0 0
        %1813 = vmatpush1.bf16.msra.mxu0 %v1810
        %1814 = vmatprep.subr.bf16.mxu0 0
        %1815 = vmatpush1.bf16.msra.mxu0 0
        %1816 = vmatprep.subr.bf16.mxu0 0
        %1817 = vmatpush1.bf16.msra.mxu0 0
        %1818 = vmatprep.subr.bf16.mxu0 0
        %1819 = vmatpush1.bf16.msra.mxu0 0
        %1820 = vmatprep.subr.bf16.mxu0 0
        %1821 = vmatpush1.bf16.msra.mxu0 0
        %1822 = vmatprep.subr.bf16.mxu0 0
        %1823 = vmatpush1.bf16.msra.mxu0 0
        %1824 = vmatprep.subr.bf16.mxu0 0
        %1825 = vmatpush1.bf16.msra.mxu0 0
        %1826 = vmatprep.subr.bf16.mxu0 0
        %1827 = vmatpush1.bf16.msra.mxu0 0
        %1828 = vmatprep.subr.bf16.mxu0 0
        %1829 = vmatpush1.bf16.msra.mxu0 0
        %1830 = vmatprep.subr.bf16.mxu0 0
        %1831 = vmatpush1.bf16.msra.mxu0 0
        %1832 = vmatprep.subr.bf16.mxu0 0
        %1833 = vmatpush1.bf16.msra.mxu0 0
        %1834 = vmatprep.subr.bf16.mxu0 0
        %1835 = vmatpush1.bf16.msra.mxu0 0
        %1836 = vmatprep.subr.bf16.mxu0 0
        %1837 = vmatpush1.bf16.msra.mxu0 0
        %1838 = vmatprep.subr.bf16.mxu0 0
        %1839 = vmatpush1.bf16.msra.mxu0 0
        %1840 = vmatprep.subr.bf16.mxu0 0
        %1841 = vmatpush1.bf16.msra.mxu0 0
        %1842 = vmatprep.subr.bf16.mxu0 0
        %1843 = vmatpush1.bf16.msra.mxu0 0
        %1844 = vmatprep.mubr.bf16.mxu0 0
        %1845 = vmatmul.mubr.bf16.gmra.mrb[0].mxu0 %v1762
        %v1846 = vpop.f32.mrb[0].mxu0
        %v1847 = vadd.f32 0.0, %v1846
        %v1848 = vpop.f32.mrb[0].mxu0
        %v1849 = vpop.f32.mrb[0].mxu0
        %v1850 = vadd.f32 0.0, %v1849
        %v1851 = vpop.f32.mrb[0].mxu0
        %1852 = vmatprep.mubr.bf16.mxu0 0
        %1853 = vmatmul.mubr.bf16.gmra.mrb[0].mxu0 %v1765
        %v1854 = vpop.f32.mrb[0].mxu0
        %v1855 = vadd.f32 0.0, %v1854
        %v1856 = vpop.f32.mrb[0].mxu0
        %v1857 = vpop.f32.mrb[0].mxu0
        %v1858 = vadd.f32 0.0, %v1857
        %v1859 = vpop.f32.mrb[0].mxu0
        %1860 = vmatprep.mubr.bf16.mxu0 0
        %1861 = vmatmul.mubr.bf16.gmra.mrb[0].mxu0 %v1768
        %v1862 = vpop.f32.mrb[0].mxu0
        %v1863 = vadd.f32 0.0, %v1862
        %v1864 = vpop.f32.mrb[0].mxu0
        %v1865 = vpop.f32.mrb[0].mxu0
        %v1866 = vadd.f32 0.0, %v1865
        %v1867 = vpop.f32.mrb[0].mxu0
        %1868 = vmatprep.mubr.bf16.mxu0 0
        %1869 = vmatmul.mubr.bf16.gmra.mrb[0].mxu0 %v1771
        %v1870 = vpop.f32.mrb[0].mxu0
        %v1871 = vadd.f32 0.0, %v1870
        %v1872 = vpop.f32.mrb[0].mxu0
        %v1873 = vpop.f32.mrb[0].mxu0
        %v1874 = vadd.f32 0.0, %v1873
        %v1875 = vpop.f32.mrb[0].mxu0
        %1876 = vmatprep.mubr.bf16.mxu0 0
        %1877 = vmatmul.mubr.bf16.gmra.mrb[0].mxu0 %v1774
        %v1878 = vpop.f32.mrb[0].mxu0
        %v1879 = vadd.f32 0.0, %v1878
        %v1880 = vpop.f32.mrb[0].mxu0
        %v1881 = vpop.f32.mrb[0].mxu0
        %v1882 = vadd.f32 0.0, %v1881
        %v1883 = vpop.f32.mrb[0].mxu0
        %1884 = vmatprep.mubr.bf16.mxu0 0
        %1885 = vmatmul.mubr.bf16.gmra.mrb[0].mxu0 %v1777
        %v1886 = vpop.f32.mrb[0].mxu0
        %v1887 = vadd.f32 0.0, %v1886
        %v1888 = vpop.f32.mrb[0].mxu0
        %v1889 = vpop.f32.mrb[0].mxu0
        %v1890 = vadd.f32 0.0, %v1889
        %v1891 = vpop.f32.mrb[0].mxu0
        %1892 = vmatprep.mubr.bf16.mxu0 0
        %1893 = vmatmul.mubr.bf16.gmra.mrb[0].mxu0 %v1780
        %v1894 = vpop.f32.mrb[0].mxu0
        %v1895 = vadd.f32 0.0, %v1894
        %v1896 = vpop.f32.mrb[0].mxu0
        %v1897 = vpop.f32.mrb[0].mxu0
        %v1898 = vadd.f32 0.0, %v1897
        %v1899 = vpop.f32.mrb[0].mxu0
        %1900 = vmatprep.mubr.bf16.mxu0 0
        %1901 = vmatmul.mubr.bf16.gmra.mrb[0].mxu0 %v1783
        %v1902 = vpop.f32.mrb[0].mxu0
        %v1903 = vadd.f32 0.0, %v1902
        %v1904 = vpop.f32.mrb[0].mxu0
        %v1905 = vpop.f32.mrb[0].mxu0
        %v1906 = vadd.f32 0.0, %v1905
        %v1907 = vpop.f32.mrb[0].mxu0
        %1908 = vmatprep.mubr.bf16.mxu0 0
        %1909 = vmatmul.mubr.bf16.gmra.mrb[0].mxu0 %v1786
        %v1910 = vpop.f32.mrb[0].mxu0
        %v1911 = vadd.f32 0.0, %v1910
        %v1912 = vpop.f32.mrb[0].mxu0
        %v1913 = vpop.f32.mrb[0].mxu0
        %v1914 = vadd.f32 0.0, %v1913
        %v1915 = vpop.f32.mrb[0].mxu0
        %1916 = vmatprep.mubr.bf16.mxu0 0
        %1917 = vmatmul.mubr.bf16.gmra.mrb[0].mxu0 %v1789
        %v1918 = vpop.f32.mrb[0].mxu0
        %v1919 = vadd.f32 0.0, %v1918
        %v1920 = vpop.f32.mrb[0].mxu0
        %v1921 = vpop.f32.mrb[0].mxu0
        %v1922 = vadd.f32 0.0, %v1921
        %v1923 = vpop.f32.mrb[0].mxu0
        %1924 = vmatprep.mubr.bf16.mxu0 0
        %1925 = vmatmul.mubr.bf16.gmra.mrb[0].mxu0 %v1792
        %v1926 = vpop.f32.mrb[0].mxu0
        %v1927 = vadd.f32 0.0, %v1926
        %v1928 = vpop.f32.mrb[0].mxu0
        %v1929 = vpop.f32.mrb[0].mxu0
        %v1930 = vadd.f32 0.0, %v1929
        %v1931 = vpop.f32.mrb[0].mxu0
        %1932 = vmatprep.mubr.bf16.mxu0 0
        %1933 = vmatmul.mubr.bf16.gmra.mrb[0].mxu0 %v1795
        %v1934 = vpop.f32.mrb[0].mxu0
        %v1935 = vadd.f32 0.0, %v1934
        %v1936 = vpop.f32.mrb[0].mxu0
        %v1937 = vpop.f32.mrb[0].mxu0
        %v1938 = vadd.f32 0.0, %v1937
        %v1939 = vpop.f32.mrb[0].mxu0
        %1940 = vmatprep.mubr.bf16.mxu0 0
        %1941 = vmatmul.mubr.bf16.gmra.mrb[0].mxu0 %v1798
        %v1942 = vpop.f32.mrb[0].mxu0
        %v1943 = vadd.f32 0.0, %v1942
        %v1944 = vpop.f32.mrb[0].mxu0
        %v1945 = vpop.f32.mrb[0].mxu0
        %v1946 = vadd.f32 0.0, %v1945
        %v1947 = vpop.f32.mrb[0].mxu0
        %1948 = vmatprep.mubr.bf16.mxu0 0
        %1949 = vmatmul.mubr.bf16.gmra.mrb[0].mxu0 %v1801
        %v1950 = vpop.f32.mrb[0].mxu0
        %v1951 = vadd.f32 0.0, %v1950
        %v1952 = vpop.f32.mrb[0].mxu0
        %v1953 = vpop.f32.mrb[0].mxu0
        %v1954 = vadd.f32 0.0, %v1953
        %v1955 = vpop.f32.mrb[0].mxu0
        %1956 = vmatprep.mubr.bf16.mxu0 0
        %1957 = vmatmul.mubr.bf16.gmra.mrb[0].mxu0 %v1804
        %v1958 = vpop.f32.mrb[0].mxu0
        %v1959 = vadd.f32 0.0, %v1958
        %v1960 = vpop.f32.mrb[0].mxu0
        %v1961 = vpop.f32.mrb[0].mxu0
        %v1962 = vadd.f32 0.0, %v1961
        %v1963 = vpop.f32.mrb[0].mxu0
        %1964 = vmatprep.mubr.bf16.mxu0 0
        %1965 = vmatmul.mubr.bf16.gmra.mrb[0].mxu0 %v1807
        %v1966 = vpop.f32.mrb[0].mxu0
        %v1967 = vadd.f32 0.0, %v1966
        %v1968 = vpop.f32.mrb[0].mxu0
        %v1969 = vpop.f32.mrb[0].mxu0
        %v1970 = vadd.f32 0.0, %v1969
        %v1971 = vpop.f32.mrb[0].mxu0
        %1972 = vdwg.mxu0
        %v1973 = vadd.f32 %v1608, %v1847
        %v1974 = vadd.f32 %v1609, %v1850
        %v1975 = vadd.f32 %v1610, %v1855
        %v1976 = vadd.f32 %v1611, %v1858
        %v1977 = vadd.f32 %v1612, %v1863
        %v1978 = vadd.f32 %v1613, %v1866
        %v1979 = vadd.f32 %v1614, %v1871
        %v1980 = vadd.f32 %v1615, %v1874
        %v1981 = vadd.f32 %v1616, %v1879
        %v1982 = vadd.f32 %v1617, %v1882
        %v1983 = vadd.f32 %v1618, %v1887
        %v1984 = vadd.f32 %v1619, %v1890
        %v1985 = vadd.f32 %v1620, %v1895
        %v1986 = vadd.f32 %v1621, %v1898
        %v1987 = vadd.f32 %v1622, %v1903
        %v1988 = vadd.f32 %v1623, %v1906
        %v1989 = vadd.f32 %v1624, %v1911
        %v1990 = vadd.f32 %v1625, %v1914
        %v1991 = vadd.f32 %v1626, %v1919
        %v1992 = vadd.f32 %v1627, %v1922
        %v1993 = vadd.f32 %v1628, %v1927
        %v1994 = vadd.f32 %v1629, %v1930
        %v1995 = vadd.f32 %v1630, %v1935
        %v1996 = vadd.f32 %v1631, %v1938
        %v1997 = vadd.f32 %v1632, %v1943
        %v1998 = vadd.f32 %v1633, %v1946
        %v1999 = vadd.f32 %v1634, %v1951
        %v2000 = vadd.f32 %v1635, %v1954
        %v2001 = vadd.f32 %v1636, %v1959
        %v2002 = vadd.f32 %v1637, %v1962
        %v2003 = vadd.f32 %v1638, %v1967
        %v2004 = vadd.f32 %v1639, %v1970
        %v2005 = vld [vmem:[%s1643] sm:$0xf]
        %v2006 = vld [vmem:[%s1643 + $0x4] sm:$0xf]
        %v2007 = vld [vmem:[%s1643 + $0x8] sm:$0x1]
        %v2008 = vld [vmem:[%s1643 + $0xc] sm:$0xf]
        %v2009 = vld [vmem:[%s1643 + $0x10] sm:$0xf]
        %v2010 = vld [vmem:[%s1643 + $0x14] sm:$0x1]
        %v2011 = vld [vmem:[%s1643 + $0x18] sm:$0xf]
        %v2012 = vld [vmem:[%s1643 + $0x1c] sm:$0xf]
        %v2013 = vld [vmem:[%s1643 + $0x20] sm:$0x1]
        %v2014 = vld [vmem:[%s1643 + $0x24] sm:$0xf]
        %v2015 = vld [vmem:[%s1643 + $0x28] sm:$0xf]
        %v2016 = vld [vmem:[%s1643 + $0x2c] sm:$0x1]
        %v2017 = vld [vmem:[%s1643 + $0x30] sm:$0xf]
        %v2018 = vld [vmem:[%s1643 + $0x34] sm:$0xf]
        %v2019 = vld [vmem:[%s1643 + $0x38] sm:$0x1]
        %v2020 = vld [vmem:[%s1643 + $0x3c] sm:$0xf]
        %v2021 = vld [vmem:[%s1643 + $0x40] sm:$0xf]
        %v2022 = vld [vmem:[%s1643 + $0x44] sm:$0x1]
        %v2023 = vld [vmem:[%s1643 + $0x48] sm:$0xf]
        %v2024 = vld [vmem:[%s1643 + $0x4c] sm:$0xf]
        %v2025 = vld [vmem:[%s1643 + $0x50] sm:$0x1]
        %v2026 = vld [vmem:[%s1643 + $0x54] sm:$0xf]
        %v2027 = vld [vmem:[%s1643 + $0x58] sm:$0xf]
        %v2028 = vld [vmem:[%s1643 + $0x5c] sm:$0x1]
        %v2029 = vld [vmem:[%s1643 + $0x60] sm:$0xf]
        %v2030 = vld [vmem:[%s1643 + $0x64] sm:$0xf]
        %v2031 = vld [vmem:[%s1643 + $0x68] sm:$0x1]
        %v2032 = vld [vmem:[%s1643 + $0x6c] sm:$0xf]
        %v2033 = vld [vmem:[%s1643 + $0x70] sm:$0xf]
        %v2034 = vld [vmem:[%s1643 + $0x74] sm:$0x1]
        %v2035 = vld [vmem:[%s1643 + $0x78] sm:$0xf]
        %v2036 = vld [vmem:[%s1643 + $0x7c] sm:$0xf]
        %v2037 = vld [vmem:[%s1643 + $0x80] sm:$0x1]
        %v2038 = vld [vmem:[%s1643 + $0x84] sm:$0xf]
        %v2039 = vld [vmem:[%s1643 + $0x88] sm:$0xf]
        %v2040 = vld [vmem:[%s1643 + $0x8c] sm:$0x1]
        %v2041 = vld [vmem:[%s1643 + $0x90] sm:$0xf]
        %v2042 = vld [vmem:[%s1643 + $0x94] sm:$0xf]
        %v2043 = vld [vmem:[%s1643 + $0x98] sm:$0x1]
        %v2044 = vld [vmem:[%s1643 + $0x9c] sm:$0xf]
        %v2045 = vld [vmem:[%s1643 + $0xa0] sm:$0xf]
        %v2046 = vld [vmem:[%s1643 + $0xa4] sm:$0x1]
        %v2047 = vld [vmem:[%s1643 + $0xa8] sm:$0xf]
        %v2048 = vld [vmem:[%s1643 + $0xac] sm:$0xf]
        %v2049 = vld [vmem:[%s1643 + $0xb0] sm:$0x1]
        %v2050 = vld [vmem:[%s1643 + $0xb4] sm:$0xf]
        %v2051 = vld [vmem:[%s1643 + $0xb8] sm:$0xf]
        %v2052 = vld [vmem:[%s1643 + $0xbc] sm:$0x1]
        %v2053 = vld [vmem:[%s1 + $0x8] sm:$0x3]
        %v2055 = vshrl.u32 %v2005, 16
        %v2057 = vrot.slane %v2055, 4
        %v2058 = vshll.u32 %v2005, 16
        %v2060 = vrot.slane %v2058, 5
        %v2061 = vor.u32 %v2057, %v2060
        %v2062 = vrot.slane %v2061, 4
        %v2064 = vshll.u32 %v2006, 16
        %v2066 = vrot.slane %v2064, 5
        %v2067 = vsel %vm241, %v2062, %v2066
        %v2068 = vshrl.u32 %v2006, 16
        %v2070 = vrot.slane %v2068, 4
        %v2071 = vor.u32 %v2070, %v2066
        %v2072 = vrot.slane %v2071, 4
        %v2074 = vshll.u32 %v2007, 16
        %v2076 = vrot.slane %v2074, 5
        %v2077 = vsel %vm241, %v2072, %v2076
        %v2079 = vshrl.u32 %v2008, 16
        %v2081 = vrot.slane %v2079, 4
        %v2082 = vshll.u32 %v2008, 16
        %v2084 = vrot.slane %v2082, 5
        %v2085 = vor.u32 %v2081, %v2084
        %v2086 = vrot.slane %v2085, 4
        %v2088 = vshll.u32 %v2009, 16
        %v2090 = vrot.slane %v2088, 5
        %v2091 = vsel %vm241, %v2086, %v2090
        %v2092 = vshrl.u32 %v2009, 16
        %v2094 = vrot.slane %v2092, 4
        %v2095 = vor.u32 %v2094, %v2090
        %v2096 = vrot.slane %v2095, 4
        %v2098 = vshll.u32 %v2010, 16
        %v2100 = vrot.slane %v2098, 5
        %v2101 = vsel %vm241, %v2096, %v2100
        %v2103 = vshrl.u32 %v2011, 16
        %v2105 = vrot.slane %v2103, 4
        %v2106 = vshll.u32 %v2011, 16
        %v2108 = vrot.slane %v2106, 5
        %v2109 = vor.u32 %v2105, %v2108
        %v2110 = vrot.slane %v2109, 4
        %v2112 = vshll.u32 %v2012, 16
        %v2114 = vrot.slane %v2112, 5
        %v2115 = vsel %vm241, %v2110, %v2114
        %v2116 = vshrl.u32 %v2012, 16
        %v2118 = vrot.slane %v2116, 4
        %v2119 = vor.u32 %v2118, %v2114
        %v2120 = vrot.slane %v2119, 4
        %v2122 = vshll.u32 %v2013, 16
        %v2124 = vrot.slane %v2122, 5
        %v2125 = vsel %vm241, %v2120, %v2124
        %v2127 = vshrl.u32 %v2014, 16
        %v2129 = vrot.slane %v2127, 4
        %v2130 = vshll.u32 %v2014, 16
        %v2132 = vrot.slane %v2130, 5
        %v2133 = vor.u32 %v2129, %v2132
        %v2134 = vrot.slane %v2133, 4
        %v2136 = vshll.u32 %v2015, 16
        %v2138 = vrot.slane %v2136, 5
        %v2139 = vsel %vm241, %v2134, %v2138
        %v2140 = vshrl.u32 %v2015, 16
        %v2142 = vrot.slane %v2140, 4
        %v2143 = vor.u32 %v2142, %v2138
        %v2144 = vrot.slane %v2143, 4
        %v2146 = vshll.u32 %v2016, 16
        %v2148 = vrot.slane %v2146, 5
        %v2149 = vsel %vm241, %v2144, %v2148
        %v2151 = vshrl.u32 %v2017, 16
        %v2153 = vrot.slane %v2151, 4
        %v2154 = vshll.u32 %v2017, 16
        %v2156 = vrot.slane %v2154, 5
        %v2157 = vor.u32 %v2153, %v2156
        %v2158 = vrot.slane %v2157, 4
        %v2160 = vshll.u32 %v2018, 16
        %v2162 = vrot.slane %v2160, 5
        %v2163 = vsel %vm241, %v2158, %v2162
        %v2164 = vshrl.u32 %v2018, 16
        %v2166 = vrot.slane %v2164, 4
        %v2167 = vor.u32 %v2166, %v2162
        %v2168 = vrot.slane %v2167, 4
        %v2170 = vshll.u32 %v2019, 16
        %v2172 = vrot.slane %v2170, 5
        %v2173 = vsel %vm241, %v2168, %v2172
        %v2175 = vshrl.u32 %v2020, 16
        %v2177 = vrot.slane %v2175, 4
        %v2178 = vshll.u32 %v2020, 16
        %v2180 = vrot.slane %v2178, 5
        %v2181 = vor.u32 %v2177, %v2180
        %v2182 = vrot.slane %v2181, 4
        %v2184 = vshll.u32 %v2021, 16
        %v2186 = vrot.slane %v2184, 5
        %v2187 = vsel %vm241, %v2182, %v2186
        %v2188 = vshrl.u32 %v2021, 16
        %v2190 = vrot.slane %v2188, 4
        %v2191 = vor.u32 %v2190, %v2186
        %v2192 = vrot.slane %v2191, 4
        %v2194 = vshll.u32 %v2022, 16
        %v2196 = vrot.slane %v2194, 5
        %v2197 = vsel %vm241, %v2192, %v2196
        %v2199 = vshrl.u32 %v2023, 16
        %v2201 = vrot.slane %v2199, 4
        %v2202 = vshll.u32 %v2023, 16
        %v2204 = vrot.slane %v2202, 5
        %v2205 = vor.u32 %v2201, %v2204
        %v2206 = vrot.slane %v2205, 4
        %v2208 = vshll.u32 %v2024, 16
        %v2210 = vrot.slane %v2208, 5
        %v2211 = vsel %vm241, %v2206, %v2210
        %v2212 = vshrl.u32 %v2024, 16
        %v2214 = vrot.slane %v2212, 4
        %v2215 = vor.u32 %v2214, %v2210
        %v2216 = vrot.slane %v2215, 4
        %v2218 = vshll.u32 %v2025, 16
        %v2220 = vrot.slane %v2218, 5
        %v2221 = vsel %vm241, %v2216, %v2220
        %v2223 = vshrl.u32 %v2026, 16
        %v2225 = vrot.slane %v2223, 4
        %v2226 = vshll.u32 %v2026, 16
        %v2228 = vrot.slane %v2226, 5
        %v2229 = vor.u32 %v2225, %v2228
        %v2230 = vrot.slane %v2229, 4
        %v2232 = vshll.u32 %v2027, 16
        %v2234 = vrot.slane %v2232, 5
        %v2235 = vsel %vm241, %v2230, %v2234
        %v2236 = vshrl.u32 %v2027, 16
        %v2238 = vrot.slane %v2236, 4
        %v2239 = vor.u32 %v2238, %v2234
        %v2240 = vrot.slane %v2239, 4
        %v2242 = vshll.u32 %v2028, 16
        %v2244 = vrot.slane %v2242, 5
        %v2245 = vsel %vm241, %v2240, %v2244
        %v2247 = vshrl.u32 %v2029, 16
        %v2249 = vrot.slane %v2247, 4
        %v2250 = vshll.u32 %v2029, 16
        %v2252 = vrot.slane %v2250, 5
        %v2253 = vor.u32 %v2249, %v2252
        %v2254 = vrot.slane %v2253, 4
        %v2256 = vshll.u32 %v2030, 16
        %v2258 = vrot.slane %v2256, 5
        %v2259 = vsel %vm241, %v2254, %v2258
        %v2260 = vshrl.u32 %v2030, 16
        %v2262 = vrot.slane %v2260, 4
        %v2263 = vor.u32 %v2262, %v2258
        %v2264 = vrot.slane %v2263, 4
        %v2266 = vshll.u32 %v2031, 16
        %v2268 = vrot.slane %v2266, 5
        %v2269 = vsel %vm241, %v2264, %v2268
        %v2271 = vshrl.u32 %v2032, 16
        %v2273 = vrot.slane %v2271, 4
        %v2274 = vshll.u32 %v2032, 16
        %v2276 = vrot.slane %v2274, 5
        %v2277 = vor.u32 %v2273, %v2276
        %v2278 = vrot.slane %v2277, 4
        %v2280 = vshll.u32 %v2033, 16
        %v2282 = vrot.slane %v2280, 5
        %v2283 = vsel %vm241, %v2278, %v2282
        %v2284 = vshrl.u32 %v2033, 16
        %v2286 = vrot.slane %v2284, 4
        %v2287 = vor.u32 %v2286, %v2282
        %v2288 = vrot.slane %v2287, 4
        %v2290 = vshll.u32 %v2034, 16
        %v2292 = vrot.slane %v2290, 5
        %v2293 = vsel %vm241, %v2288, %v2292
        %v2295 = vshrl.u32 %v2035, 16
        %v2297 = vrot.slane %v2295, 4
        %v2298 = vshll.u32 %v2035, 16
        %v2300 = vrot.slane %v2298, 5
        %v2301 = vor.u32 %v2297, %v2300
        %v2302 = vrot.slane %v2301, 4
        %v2304 = vshll.u32 %v2036, 16
        %v2306 = vrot.slane %v2304, 5
        %v2307 = vsel %vm241, %v2302, %v2306
        %v2308 = vshrl.u32 %v2036, 16
        %v2310 = vrot.slane %v2308, 4
        %v2311 = vor.u32 %v2310, %v2306
        %v2312 = vrot.slane %v2311, 4
        %v2314 = vshll.u32 %v2037, 16
        %v2316 = vrot.slane %v2314, 5
        %v2317 = vsel %vm241, %v2312, %v2316
        %v2319 = vshrl.u32 %v2038, 16
        %v2321 = vrot.slane %v2319, 4
        %v2322 = vshll.u32 %v2038, 16
        %v2324 = vrot.slane %v2322, 5
        %v2325 = vor.u32 %v2321, %v2324
        %v2326 = vrot.slane %v2325, 4
        %v2328 = vshll.u32 %v2039, 16
        %v2330 = vrot.slane %v2328, 5
        %v2331 = vsel %vm241, %v2326, %v2330
        %v2332 = vshrl.u32 %v2039, 16
        %v2334 = vrot.slane %v2332, 4
        %v2335 = vor.u32 %v2334, %v2330
        %v2336 = vrot.slane %v2335, 4
        %v2338 = vshll.u32 %v2040, 16
        %v2340 = vrot.slane %v2338, 5
        %v2341 = vsel %vm241, %v2336, %v2340
        %v2343 = vshrl.u32 %v2041, 16
        %v2345 = vrot.slane %v2343, 4
        %v2346 = vshll.u32 %v2041, 16
        %v2348 = vrot.slane %v2346, 5
        %v2349 = vor.u32 %v2345, %v2348
        %v2350 = vrot.slane %v2349, 4
        %v2352 = vshll.u32 %v2042, 16
        %v2354 = vrot.slane %v2352, 5
        %v2355 = vsel %vm241, %v2350, %v2354
        %v2356 = vshrl.u32 %v2042, 16
        %v2358 = vrot.slane %v2356, 4
        %v2359 = vor.u32 %v2358, %v2354
        %v2360 = vrot.slane %v2359, 4
        %v2362 = vshll.u32 %v2043, 16
        %v2364 = vrot.slane %v2362, 5
        %v2365 = vsel %vm241, %v2360, %v2364
        %v2367 = vshrl.u32 %v2044, 16
        %v2369 = vrot.slane %v2367, 4
        %v2370 = vshll.u32 %v2044, 16
        %v2372 = vrot.slane %v2370, 5
        %v2373 = vor.u32 %v2369, %v2372
        %v2374 = vrot.slane %v2373, 4
        %v2376 = vshll.u32 %v2045, 16
        %v2378 = vrot.slane %v2376, 5
        %v2379 = vsel %vm241, %v2374, %v2378
        %v2380 = vshrl.u32 %v2045, 16
        %v2382 = vrot.slane %v2380, 4
        %v2383 = vor.u32 %v2382, %v2378
        %v2384 = vrot.slane %v2383, 4
        %v2386 = vshll.u32 %v2046, 16
        %v2388 = vrot.slane %v2386, 5
        %v2389 = vsel %vm241, %v2384, %v2388
        %v2391 = vshrl.u32 %v2047, 16
        %v2393 = vrot.slane %v2391, 4
        %v2394 = vshll.u32 %v2047, 16
        %v2396 = vrot.slane %v2394, 5
        %v2397 = vor.u32 %v2393, %v2396
        %v2398 = vrot.slane %v2397, 4
        %v2400 = vshll.u32 %v2048, 16
        %v2402 = vrot.slane %v2400, 5
        %v2403 = vsel %vm241, %v2398, %v2402
        %v2404 = vshrl.u32 %v2048, 16
        %v2406 = vrot.slane %v2404, 4
        %v2407 = vor.u32 %v2406, %v2402
        %v2408 = vrot.slane %v2407, 4
        %v2410 = vshll.u32 %v2049, 16
        %v2412 = vrot.slane %v2410, 5
        %v2413 = vsel %vm241, %v2408, %v2412
        %v2415 = vshrl.u32 %v2050, 16
        %v2417 = vrot.slane %v2415, 4
        %v2418 = vshll.u32 %v2050, 16
        %v2420 = vrot.slane %v2418, 5
        %v2421 = vor.u32 %v2417, %v2420
        %v2422 = vrot.slane %v2421, 4
        %v2424 = vshll.u32 %v2051, 16
        %v2426 = vrot.slane %v2424, 5
        %v2427 = vsel %vm241, %v2422, %v2426
        %v2428 = vshrl.u32 %v2051, 16
        %v2430 = vrot.slane %v2428, 4
        %v2431 = vor.u32 %v2430, %v2426
        %v2432 = vrot.slane %v2431, 4
        %v2434 = vshll.u32 %v2052, 16
        %v2436 = vrot.slane %v2434, 5
        %v2437 = vsel %vm241, %v2432, %v2436
        %v2438 = vunpack.c.l.b16 %v2067
        %v2439 = vunpack.c.l.b16 %v2077
        %v2440 = vunpack.c.l.b16 %v2091
        %v2441 = vunpack.c.l.b16 %v2101
        %v2442 = vunpack.c.l.b16 %v2115
        %v2443 = vunpack.c.l.b16 %v2125
        %v2444 = vunpack.c.l.b16 %v2139
        %v2445 = vunpack.c.l.b16 %v2149
        %v2446 = vunpack.c.l.b16 %v2163
        %v2447 = vunpack.c.l.b16 %v2173
        %v2448 = vunpack.c.l.b16 %v2187
        %v2449 = vunpack.c.l.b16 %v2197
        %v2450 = vunpack.c.l.b16 %v2211
        %v2451 = vunpack.c.l.b16 %v2221
        %v2452 = vunpack.c.l.b16 %v2235
        %v2453 = vunpack.c.l.b16 %v2245
        %v2454 = vunpack.c.l.b16 %v2259
        %v2455 = vunpack.c.l.b16 %v2269
        %v2456 = vunpack.c.l.b16 %v2283
        %v2457 = vunpack.c.l.b16 %v2293
        %v2458 = vunpack.c.l.b16 %v2307
        %v2459 = vunpack.c.l.b16 %v2317
        %v2460 = vunpack.c.l.b16 %v2331
        %v2461 = vunpack.c.l.b16 %v2341
        %v2462 = vunpack.c.l.b16 %v2355
        %v2463 = vunpack.c.l.b16 %v2365
        %v2464 = vunpack.c.l.b16 %v2379
        %v2465 = vunpack.c.l.b16 %v2389
        %v2466 = vunpack.c.l.b16 %v2403
        %v2467 = vunpack.c.l.b16 %v2413
        %v2468 = vunpack.c.l.b16 %v2427
        %v2469 = vunpack.c.l.b16 %v2437
        %v2470 = vpack.c.b16 %v2439, %v2438
        %v2471 = vpack.c.b16 %v2441, %v2440
        %v2472 = vpack.c.b16 %v2443, %v2442
        %v2473 = vpack.c.b16 %v2445, %v2444
        %v2474 = vpack.c.b16 %v2447, %v2446
        %v2475 = vpack.c.b16 %v2449, %v2448
        %v2476 = vpack.c.b16 %v2451, %v2450
        %v2477 = vpack.c.b16 %v2453, %v2452
        %v2478 = vpack.c.b16 %v2455, %v2454
        %v2479 = vpack.c.b16 %v2457, %v2456
        %v2480 = vpack.c.b16 %v2459, %v2458
        %v2481 = vpack.c.b16 %v2461, %v2460
        %v2482 = vpack.c.b16 %v2463, %v2462
        %v2483 = vpack.c.b16 %v2465, %v2464
        %v2484 = vpack.c.b16 %v2467, %v2466
        %v2485 = vpack.c.b16 %v2469, %v2468
        %v2487 = vsel %vm678, %v2470, 0
        %v2490 = vsel %vm678, %v2471, 0
        %v2493 = vsel %vm678, %v2472, 0
        %v2496 = vsel %vm678, %v2473, 0
        %v2499 = vsel %vm678, %v2474, 0
        %v2502 = vsel %vm678, %v2475, 0
        %v2505 = vsel %vm678, %v2476, 0
        %v2508 = vsel %vm678, %v2477, 0
        %v2511 = vsel %vm678, %v2478, 0
        %v2514 = vsel %vm678, %v2479, 0
        %v2517 = vsel %vm678, %v2480, 0
        %v2520 = vsel %vm678, %v2481, 0
        %v2523 = vsel %vm678, %v2482, 0
        %v2526 = vsel %vm678, %v2483, 0
        %v2529 = vsel %vm678, %v2484, 0
        %v2532 = vsel %vm678, %v2485, 0
        %v2535 = vsel %vm727, %v2053, 0
        %2537 = vmatprep.subr.bf16.mxu0 0
        %2538 = vmatpush1.bf16.msra.mxu0 %v2535
        %2539 = vmatprep.subr.bf16.mxu0 0
        %2540 = vmatpush1.bf16.msra.mxu0 0
        %2541 = vmatprep.subr.bf16.mxu0 0
        %2542 = vmatpush1.bf16.msra.mxu0 0
        %2543 = vmatprep.subr.bf16.mxu0 0
        %2544 = vmatpush1.bf16.msra.mxu0 0
        %2545 = vmatprep.subr.bf16.mxu0 0
        %2546 = vmatpush1.bf16.msra.mxu0 0
        %2547 = vmatprep.subr.bf16.mxu0 0
        %2548 = vmatpush1.bf16.msra.mxu0 0
        %2549 = vmatprep.subr.bf16.mxu0 0
        %2550 = vmatpush1.bf16.msra.mxu0 0
        %2551 = vmatprep.subr.bf16.mxu0 0
        %2552 = vmatpush1.bf16.msra.mxu0 0
        %2553 = vmatprep.subr.bf16.mxu0 0
        %2554 = vmatpush1.bf16.msra.mxu0 0
        %2555 = vmatprep.subr.bf16.mxu0 0
        %2556 = vmatpush1.bf16.msra.mxu0 0
        %2557 = vmatprep.subr.bf16.mxu0 0
        %2558 = vmatpush1.bf16.msra.mxu0 0
        %2559 = vmatprep.subr.bf16.mxu0 0
        %2560 = vmatpush1.bf16.msra.mxu0 0
        %2561 = vmatprep.subr.bf16.mxu0 0
        %2562 = vmatpush1.bf16.msra.mxu0 0
        %2563 = vmatprep.subr.bf16.mxu0 0
        %2564 = vmatpush1.bf16.msra.mxu0 0
        %2565 = vmatprep.subr.bf16.mxu0 0
        %2566 = vmatpush1.bf16.msra.mxu0 0
        %2567 = vmatprep.subr.bf16.mxu0 0
        %2568 = vmatpush1.bf16.msra.mxu0 0
        %2569 = vmatprep.mubr.bf16.mxu0 0
        %2570 = vmatmul.mubr.bf16.gmra.mrb[0].mxu0 %v2487
        %v2571 = vpop.f32.mrb[0].mxu0
        %v2572 = vadd.f32 0.0, %v2571
        %v2573 = vpop.f32.mrb[0].mxu0
        %v2574 = vpop.f32.mrb[0].mxu0
        %v2575 = vadd.f32 0.0, %v2574
        %v2576 = vpop.f32.mrb[0].mxu0
        %2577 = vmatprep.mubr.bf16.mxu0 0
        %2578 = vmatmul.mubr.bf16.gmra.mrb[0].mxu0 %v2490
        %v2579 = vpop.f32.mrb[0].mxu0
        %v2580 = vadd.f32 0.0, %v2579
        %v2581 = vpop.f32.mrb[0].mxu0
        %v2582 = vpop.f32.mrb[0].mxu0
        %v2583 = vadd.f32 0.0, %v2582
        %v2584 = vpop.f32.mrb[0].mxu0
        %2585 = vmatprep.mubr.bf16.mxu0 0
        %2586 = vmatmul.mubr.bf16.gmra.mrb[0].mxu0 %v2493
        %v2587 = vpop.f32.mrb[0].mxu0
        %v2588 = vadd.f32 0.0, %v2587
        %v2589 = vpop.f32.mrb[0].mxu0
        %v2590 = vpop.f32.mrb[0].mxu0
        %v2591 = vadd.f32 0.0, %v2590
        %v2592 = vpop.f32.mrb[0].mxu0
        %2593 = vmatprep.mubr.bf16.mxu0 0
        %2594 = vmatmul.mubr.bf16.gmra.mrb[0].mxu0 %v2496
        %v2595 = vpop.f32.mrb[0].mxu0
        %v2596 = vadd.f32 0.0, %v2595
        %v2597 = vpop.f32.mrb[0].mxu0
        %v2598 = vpop.f32.mrb[0].mxu0
        %v2599 = vadd.f32 0.0, %v2598
        %v2600 = vpop.f32.mrb[0].mxu0
        %2601 = vmatprep.mubr.bf16.mxu0 0
        %2602 = vmatmul.mubr.bf16.gmra.mrb[0].mxu0 %v2499
        %v2603 = vpop.f32.mrb[0].mxu0
        %v2604 = vadd.f32 0.0, %v2603
        %v2605 = vpop.f32.mrb[0].mxu0
        %v2606 = vpop.f32.mrb[0].mxu0
        %v2607 = vadd.f32 0.0, %v2606
        %v2608 = vpop.f32.mrb[0].mxu0
        %2609 = vmatprep.mubr.bf16.mxu0 0
        %2610 = vmatmul.mubr.bf16.gmra.mrb[0].mxu0 %v2502
        %v2611 = vpop.f32.mrb[0].mxu0
        %v2612 = vadd.f32 0.0, %v2611
        %v2613 = vpop.f32.mrb[0].mxu0
        %v2614 = vpop.f32.mrb[0].mxu0
        %v2615 = vadd.f32 0.0, %v2614
        %v2616 = vpop.f32.mrb[0].mxu0
        %2617 = vmatprep.mubr.bf16.mxu0 0
        %2618 = vmatmul.mubr.bf16.gmra.mrb[0].mxu0 %v2505
        %v2619 = vpop.f32.mrb[0].mxu0
        %v2620 = vadd.f32 0.0, %v2619
        %v2621 = vpop.f32.mrb[0].mxu0
        %v2622 = vpop.f32.mrb[0].mxu0
        %v2623 = vadd.f32 0.0, %v2622
        %v2624 = vpop.f32.mrb[0].mxu0
        %2625 = vmatprep.mubr.bf16.mxu0 0
        %2626 = vmatmul.mubr.bf16.gmra.mrb[0].mxu0 %v2508
        %v2627 = vpop.f32.mrb[0].mxu0
        %v2628 = vadd.f32 0.0, %v2627
        %v2629 = vpop.f32.mrb[0].mxu0
        %v2630 = vpop.f32.mrb[0].mxu0
        %v2631 = vadd.f32 0.0, %v2630
        %v2632 = vpop.f32.mrb[0].mxu0
        %2633 = vmatprep.mubr.bf16.mxu0 0
        %2634 = vmatmul.mubr.bf16.gmra.mrb[0].mxu0 %v2511
        %v2635 = vpop.f32.mrb[0].mxu0
        %v2636 = vadd.f32 0.0, %v2635
        %v2637 = vpop.f32.mrb[0].mxu0
        %v2638 = vpop.f32.mrb[0].mxu0
        %v2639 = vadd.f32 0.0, %v2638
        %v2640 = vpop.f32.mrb[0].mxu0
        %2641 = vmatprep.mubr.bf16.mxu0 0
        %2642 = vmatmul.mubr.bf16.gmra.mrb[0].mxu0 %v2514
        %v2643 = vpop.f32.mrb[0].mxu0
        %v2644 = vadd.f32 0.0, %v2643
        %v2645 = vpop.f32.mrb[0].mxu0
        %v2646 = vpop.f32.mrb[0].mxu0
        %v2647 = vadd.f32 0.0, %v2646
        %v2648 = vpop.f32.mrb[0].mxu0
        %2649 = vmatprep.mubr.bf16.mxu0 0
        %2650 = vmatmul.mubr.bf16.gmra.mrb[0].mxu0 %v2517
        %v2651 = vpop.f32.mrb[0].mxu0
        %v2652 = vadd.f32 0.0, %v2651
        %v2653 = vpop.f32.mrb[0].mxu0
        %v2654 = vpop.f32.mrb[0].mxu0
        %v2655 = vadd.f32 0.0, %v2654
        %v2656 = vpop.f32.mrb[0].mxu0
        %2657 = vmatprep.mubr.bf16.mxu0 0
        %2658 = vmatmul.mubr.bf16.gmra.mrb[0].mxu0 %v2520
        %v2659 = vpop.f32.mrb[0].mxu0
        %v2660 = vadd.f32 0.0, %v2659
        %v2661 = vpop.f32.mrb[0].mxu0
        %v2662 = vpop.f32.mrb[0].mxu0
        %v2663 = vadd.f32 0.0, %v2662
        %v2664 = vpop.f32.mrb[0].mxu0
        %2665 = vmatprep.mubr.bf16.mxu0 0
        %2666 = vmatmul.mubr.bf16.gmra.mrb[0].mxu0 %v2523
        %v2667 = vpop.f32.mrb[0].mxu0
        %v2668 = vadd.f32 0.0, %v2667
        %v2669 = vpop.f32.mrb[0].mxu0
        %v2670 = vpop.f32.mrb[0].mxu0
        %v2671 = vadd.f32 0.0, %v2670
        %v2672 = vpop.f32.mrb[0].mxu0
        %2673 = vmatprep.mubr.bf16.mxu0 0
        %2674 = vmatmul.mubr.bf16.gmra.mrb[0].mxu0 %v2526
        %v2675 = vpop.f32.mrb[0].mxu0
        %v2676 = vadd.f32 0.0, %v2675
        %v2677 = vpop.f32.mrb[0].mxu0
        %v2678 = vpop.f32.mrb[0].mxu0
        %v2679 = vadd.f32 0.0, %v2678
        %v2680 = vpop.f32.mrb[0].mxu0
        %2681 = vmatprep.mubr.bf16.mxu0 0
        %2682 = vmatmul.mubr.bf16.gmra.mrb[0].mxu0 %v2529
        %v2683 = vpop.f32.mrb[0].mxu0
        %v2684 = vadd.f32 0.0, %v2683
        %v2685 = vpop.f32.mrb[0].mxu0
        %v2686 = vpop.f32.mrb[0].mxu0
        %v2687 = vadd.f32 0.0, %v2686
        %v2688 = vpop.f32.mrb[0].mxu0
        %2689 = vmatprep.mubr.bf16.mxu0 0
        %2690 = vmatmul.mubr.bf16.gmra.mrb[0].mxu0 %v2532
        %v2691 = vpop.f32.mrb[0].mxu0
        %v2692 = vadd.f32 0.0, %v2691
        %v2693 = vpop.f32.mrb[0].mxu0
        %v2694 = vpop.f32.mrb[0].mxu0
        %v2695 = vadd.f32 0.0, %v2694
        %v2696 = vpop.f32.mrb[0].mxu0
        %2697 = vdwg.mxu0
        %v2698 = vadd.f32 %v1973, %v2572
        %v2699 = vadd.f32 %v1974, %v2575
        %v2700 = vadd.f32 %v1975, %v2580
        %v2701 = vadd.f32 %v1976, %v2583
        %v2702 = vadd.f32 %v1977, %v2588
        %v2703 = vadd.f32 %v1978, %v2591
        %v2704 = vadd.f32 %v1979, %v2596
        %v2705 = vadd.f32 %v1980, %v2599
        %v2706 = vadd.f32 %v1981, %v2604
        %v2707 = vadd.f32 %v1982, %v2607
        %v2708 = vadd.f32 %v1983, %v2612
        %v2709 = vadd.f32 %v1984, %v2615
        %v2710 = vadd.f32 %v1985, %v2620
        %v2711 = vadd.f32 %v1986, %v2623
        %v2712 = vadd.f32 %v1987, %v2628
        %v2713 = vadd.f32 %v1988, %v2631
        %v2714 = vadd.f32 %v1989, %v2636
        %v2715 = vadd.f32 %v1990, %v2639
        %v2716 = vadd.f32 %v1991, %v2644
        %v2717 = vadd.f32 %v1992, %v2647
        %v2718 = vadd.f32 %v1993, %v2652
        %v2719 = vadd.f32 %v1994, %v2655
        %v2720 = vadd.f32 %v1995, %v2660
        %v2721 = vadd.f32 %v1996, %v2663
        %v2722 = vadd.f32 %v1997, %v2668
        %v2723 = vadd.f32 %v1998, %v2671
        %v2724 = vadd.f32 %v1999, %v2676
        %v2725 = vadd.f32 %v2000, %v2679
        %v2726 = vadd.f32 %v2001, %v2684
        %v2727 = vadd.f32 %v2002, %v2687
        %v2728 = vadd.f32 %v2003, %v2692
        %v2729 = vadd.f32 %v2004, %v2695
        %v2730 = vld [vmem:[%s1643] sm:$0xe]
        %v2731 = vld [vmem:[%s1643 + $0xc] sm:$0xe]
        %v2732 = vld [vmem:[%s1643 + $0x18] sm:$0xe]
        %v2733 = vld [vmem:[%s1643 + $0x24] sm:$0xe]
        %v2734 = vld [vmem:[%s1643 + $0x30] sm:$0xe]
        %v2735 = vld [vmem:[%s1643 + $0x3c] sm:$0xe]
        %v2736 = vld [vmem:[%s1643 + $0x48] sm:$0xe]
        %v2737 = vld [vmem:[%s1643 + $0x54] sm:$0xe]
        %v2738 = vld [vmem:[%s1643 + $0x60] sm:$0xe]
        %v2739 = vld [vmem:[%s1643 + $0x6c] sm:$0xe]
        %v2740 = vld [vmem:[%s1643 + $0x78] sm:$0xe]
        %v2741 = vld [vmem:[%s1643 + $0x84] sm:$0xe]
        %v2742 = vld [vmem:[%s1643 + $0x90] sm:$0xe]
        %v2743 = vld [vmem:[%s1643 + $0x9c] sm:$0xe]
        %v2744 = vld [vmem:[%s1643 + $0xa8] sm:$0xe]
        %v2745 = vld [vmem:[%s1643 + $0xb4] sm:$0xe]
        %v2746 = vld [vmem:[%s1 + $0x8] sm:$0xc]
        %v2795 = vrot.slane %v2730, 5
        %v2796 = vrot.slane %v2795, 4
        %v2797 = vrot.slane %v2006, 5
        %v2798 = vsel %vm1235, %v2796, %v2797
        %v2799 = vrot.slane %v2797, 4
        %v2800 = vrot.slane %v2007, 5
        %v2801 = vsel %vm1235, %v2799, %v2800
        %v2802 = vrot.slane %v2731, 5
        %v2803 = vrot.slane %v2802, 4
        %v2804 = vrot.slane %v2009, 5
        %v2805 = vsel %vm1235, %v2803, %v2804
        %v2806 = vrot.slane %v2804, 4
        %v2807 = vrot.slane %v2010, 5
        %v2808 = vsel %vm1235, %v2806, %v2807
        %v2809 = vrot.slane %v2732, 5
        %v2810 = vrot.slane %v2809, 4
        %v2811 = vrot.slane %v2012, 5
        %v2812 = vsel %vm1235, %v2810, %v2811
        %v2813 = vrot.slane %v2811, 4
        %v2814 = vrot.slane %v2013, 5
        %v2815 = vsel %vm1235, %v2813, %v2814
        %v2816 = vrot.slane %v2733, 5
        %v2817 = vrot.slane %v2816, 4
        %v2818 = vrot.slane %v2015, 5
        %v2819 = vsel %vm1235, %v2817, %v2818
        %v2820 = vrot.slane %v2818, 4
        %v2821 = vrot.slane %v2016, 5
        %v2822 = vsel %vm1235, %v2820, %v2821
        %v2823 = vrot.slane %v2734, 5
        %v2824 = vrot.slane %v2823, 4
        %v2825 = vrot.slane %v2018, 5
        %v2826 = vsel %vm1235, %v2824, %v2825
        %v2827 = vrot.slane %v2825, 4
        %v2828 = vrot.slane %v2019, 5
        %v2829 = vsel %vm1235, %v2827, %v2828
        %v2830 = vrot.slane %v2735, 5
        %v2831 = vrot.slane %v2830, 4
        %v2832 = vrot.slane %v2021, 5
        %v2833 = vsel %vm1235, %v2831, %v2832
        %v2834 = vrot.slane %v2832, 4
        %v2835 = vrot.slane %v2022, 5
        %v2836 = vsel %vm1235, %v2834, %v2835
        %v2837 = vrot.slane %v2736, 5
        %v2838 = vrot.slane %v2837, 4
        %v2839 = vrot.slane %v2024, 5
        %v2840 = vsel %vm1235, %v2838, %v2839
        %v2841 = vrot.slane %v2839, 4
        %v2842 = vrot.slane %v2025, 5
        %v2843 = vsel %vm1235, %v2841, %v2842
        %v2844 = vrot.slane %v2737, 5
        %v2845 = vrot.slane %v2844, 4
        %v2846 = vrot.slane %v2027, 5
        %v2847 = vsel %vm1235, %v2845, %v2846
        %v2848 = vrot.slane %v2846, 4
        %v2849 = vrot.slane %v2028, 5
        %v2850 = vsel %vm1235, %v2848, %v2849
        %v2851 = vrot.slane %v2738, 5
        %v2852 = vrot.slane %v2851, 4
        %v2853 = vrot.slane %v2030, 5
        %v2854 = vsel %vm1235, %v2852, %v2853
        %v2855 = vrot.slane %v2853, 4
        %v2856 = vrot.slane %v2031, 5
        %v2857 = vsel %vm1235, %v2855, %v2856
        %v2858 = vrot.slane %v2739, 5
        %v2859 = vrot.slane %v2858, 4
        %v2860 = vrot.slane %v2033, 5
        %v2861 = vsel %vm1235, %v2859, %v2860
        %v2862 = vrot.slane %v2860, 4
        %v2863 = vrot.slane %v2034, 5
        %v2864 = vsel %vm1235, %v2862, %v2863
        %v2865 = vrot.slane %v2740, 5
        %v2866 = vrot.slane %v2865, 4
        %v2867 = vrot.slane %v2036, 5
        %v2868 = vsel %vm1235, %v2866, %v2867
        %v2869 = vrot.slane %v2867, 4
        %v2870 = vrot.slane %v2037, 5
        %v2871 = vsel %vm1235, %v2869, %v2870
        %v2872 = vrot.slane %v2741, 5
        %v2873 = vrot.slane %v2872, 4
        %v2874 = vrot.slane %v2039, 5
        %v2875 = vsel %vm1235, %v2873, %v2874
        %v2876 = vrot.slane %v2874, 4
        %v2877 = vrot.slane %v2040, 5
        %v2878 = vsel %vm1235, %v2876, %v2877
        %v2879 = vrot.slane %v2742, 5
        %v2880 = vrot.slane %v2879, 4
        %v2881 = vrot.slane %v2042, 5
        %v2882 = vsel %vm1235, %v2880, %v2881
        %v2883 = vrot.slane %v2881, 4
        %v2884 = vrot.slane %v2043, 5
        %v2885 = vsel %vm1235, %v2883, %v2884
        %v2886 = vrot.slane %v2743, 5
        %v2887 = vrot.slane %v2886, 4
        %v2888 = vrot.slane %v2045, 5
        %v2889 = vsel %vm1235, %v2887, %v2888
        %v2890 = vrot.slane %v2888, 4
        %v2891 = vrot.slane %v2046, 5
        %v2892 = vsel %vm1235, %v2890, %v2891
        %v2893 = vrot.slane %v2744, 5
        %v2894 = vrot.slane %v2893, 4
        %v2895 = vrot.slane %v2048, 5
        %v2896 = vsel %vm1235, %v2894, %v2895
        %v2897 = vrot.slane %v2895, 4
        %v2898 = vrot.slane %v2049, 5
        %v2899 = vsel %vm1235, %v2897, %v2898
        %v2900 = vrot.slane %v2745, 5
        %v2901 = vrot.slane %v2900, 4
        %v2902 = vrot.slane %v2051, 5
        %v2903 = vsel %vm1235, %v2901, %v2902
        %v2904 = vrot.slane %v2902, 4
        %v2905 = vrot.slane %v2052, 5
        %v2906 = vsel %vm1235, %v2904, %v2905
        %v2907 = vunpack.c.l.b16 %v2798
        %v2908 = vunpack.c.l.b16 %v2801
        %v2909 = vunpack.c.l.b16 %v2805
        %v2910 = vunpack.c.l.b16 %v2808
        %v2911 = vunpack.c.l.b16 %v2812
        %v2912 = vunpack.c.l.b16 %v2815
        %v2913 = vunpack.c.l.b16 %v2819
        %v2914 = vunpack.c.l.b16 %v2822
        %v2915 = vunpack.c.l.b16 %v2826
        %v2916 = vunpack.c.l.b16 %v2829
        %v2917 = vunpack.c.l.b16 %v2833
        %v2918 = vunpack.c.l.b16 %v2836
        %v2919 = vunpack.c.l.b16 %v2840
        %v2920 = vunpack.c.l.b16 %v2843
        %v2921 = vunpack.c.l.b16 %v2847
        %v2922 = vunpack.c.l.b16 %v2850
        %v2923 = vunpack.c.l.b16 %v2854
        %v2924 = vunpack.c.l.b16 %v2857
        %v2925 = vunpack.c.l.b16 %v2861
        %v2926 = vunpack.c.l.b16 %v2864
        %v2927 = vunpack.c.l.b16 %v2868
        %v2928 = vunpack.c.l.b16 %v2871
        %v2929 = vunpack.c.l.b16 %v2875
        %v2930 = vunpack.c.l.b16 %v2878
        %v2931 = vunpack.c.l.b16 %v2882
        %v2932 = vunpack.c.l.b16 %v2885
        %v2933 = vunpack.c.l.b16 %v2889
        %v2934 = vunpack.c.l.b16 %v2892
        %v2935 = vunpack.c.l.b16 %v2896
        %v2936 = vunpack.c.l.b16 %v2899
        %v2937 = vunpack.c.l.b16 %v2903
        %v2938 = vunpack.c.l.b16 %v2906
        %v2939 = vpack.c.b16 %v2908, %v2907
        %v2940 = vpack.c.b16 %v2910, %v2909
        %v2941 = vpack.c.b16 %v2912, %v2911
        %v2942 = vpack.c.b16 %v2914, %v2913
        %v2943 = vpack.c.b16 %v2916, %v2915
        %v2944 = vpack.c.b16 %v2918, %v2917
        %v2945 = vpack.c.b16 %v2920, %v2919
        %v2946 = vpack.c.b16 %v2922, %v2921
        %v2947 = vpack.c.b16 %v2924, %v2923
        %v2948 = vpack.c.b16 %v2926, %v2925
        %v2949 = vpack.c.b16 %v2928, %v2927
        %v2950 = vpack.c.b16 %v2930, %v2929
        %v2951 = vpack.c.b16 %v2932, %v2931
        %v2952 = vpack.c.b16 %v2934, %v2933
        %v2953 = vpack.c.b16 %v2936, %v2935
        %v2954 = vpack.c.b16 %v2938, %v2937
        %v2956 = vunpack.c.l.b16 %v2746
        %v2957 = vpack.c.b16 %v2956, %v2956
        %v2958 = vrot.slane %v2957, 2
        %v2960 = vsel %vm678, %v2939, 0
        %v2963 = vsel %vm678, %v2940, 0
        %v2966 = vsel %vm678, %v2941, 0
        %v2969 = vsel %vm678, %v2942, 0
        %v2972 = vsel %vm678, %v2943, 0
        %v2975 = vsel %vm678, %v2944, 0
        %v2978 = vsel %vm678, %v2945, 0
        %v2981 = vsel %vm678, %v2946, 0
        %v2984 = vsel %vm678, %v2947, 0
        %v2987 = vsel %vm678, %v2948, 0
        %v2990 = vsel %vm678, %v2949, 0
        %v2993 = vsel %vm678, %v2950, 0
        %v2996 = vsel %vm678, %v2951, 0
        %v2999 = vsel %vm678, %v2952, 0
        %v3002 = vsel %vm678, %v2953, 0
        %v3005 = vsel %vm678, %v2954, 0
        %v3008 = vsel %vm727, %v2958, 0
        %3010 = vmatprep.subr.bf16.mxu0 0
        %3011 = vmatpush1.bf16.msra.mxu0 %v3008
        %3012 = vmatprep.subr.bf16.mxu0 0
        %3013 = vmatpush1.bf16.msra.mxu0 0
        %3014 = vmatprep.subr.bf16.mxu0 0
        %3015 = vmatpush1.bf16.msra.mxu0 0
        %3016 = vmatprep.subr.bf16.mxu0 0
        %3017 = vmatpush1.bf16.msra.mxu0 0
        %3018 = vmatprep.subr.bf16.mxu0 0
        %3019 = vmatpush1.bf16.msra.mxu0 0
        %3020 = vmatprep.subr.bf16.mxu0 0
        %3021 = vmatpush1.bf16.msra.mxu0 0
        %3022 = vmatprep.subr.bf16.mxu0 0
        %3023 = vmatpush1.bf16.msra.mxu0 0
        %3024 = vmatprep.subr.bf16.mxu0 0
        %3025 = vmatpush1.bf16.msra.mxu0 0
        %3026 = vmatprep.subr.bf16.mxu0 0
        %3027 = vmatpush1.bf16.msra.mxu0 0
        %3028 = vmatprep.subr.bf16.mxu0 0
        %3029 = vmatpush1.bf16.msra.mxu0 0
        %3030 = vmatprep.subr.bf16.mxu0 0
        %3031 = vmatpush1.bf16.msra.mxu0 0
        %3032 = vmatprep.subr.bf16.mxu0 0
        %3033 = vmatpush1.bf16.msra.mxu0 0
        %3034 = vmatprep.subr.bf16.mxu0 0
        %3035 = vmatpush1.bf16.msra.mxu0 0
        %3036 = vmatprep.subr.bf16.mxu0 0
        %3037 = vmatpush1.bf16.msra.mxu0 0
        %3038 = vmatprep.subr.bf16.mxu0 0
        %3039 = vmatpush1.bf16.msra.mxu0 0
        %3040 = vmatprep.subr.bf16.mxu0 0
        %3041 = vmatpush1.bf16.msra.mxu0 0
        %3042 = vmatprep.mubr.bf16.mxu0 0
        %3043 = vmatmul.mubr.bf16.gmra.mrb[0].mxu0 %v2960
        %v3044 = vpop.f32.mrb[0].mxu0
        %v3045 = vadd.f32 0.0, %v3044
        %v3046 = vpop.f32.mrb[0].mxu0
        %v3047 = vpop.f32.mrb[0].mxu0
        %v3048 = vadd.f32 0.0, %v3047
        %v3049 = vpop.f32.mrb[0].mxu0
        %3050 = vmatprep.mubr.bf16.mxu0 0
        %3051 = vmatmul.mubr.bf16.gmra.mrb[0].mxu0 %v2963
        %v3052 = vpop.f32.mrb[0].mxu0
        %v3053 = vadd.f32 0.0, %v3052
        %v3054 = vpop.f32.mrb[0].mxu0
        %v3055 = vpop.f32.mrb[0].mxu0
        %v3056 = vadd.f32 0.0, %v3055
        %v3057 = vpop.f32.mrb[0].mxu0
        %3058 = vmatprep.mubr.bf16.mxu0 0
        %3059 = vmatmul.mubr.bf16.gmra.mrb[0].mxu0 %v2966
        %v3060 = vpop.f32.mrb[0].mxu0
        %v3061 = vadd.f32 0.0, %v3060
        %v3062 = vpop.f32.mrb[0].mxu0
        %v3063 = vpop.f32.mrb[0].mxu0
        %v3064 = vadd.f32 0.0, %v3063
        %v3065 = vpop.f32.mrb[0].mxu0
        %3066 = vmatprep.mubr.bf16.mxu0 0
        %3067 = vmatmul.mubr.bf16.gmra.mrb[0].mxu0 %v2969
        %v3068 = vpop.f32.mrb[0].mxu0
        %v3069 = vadd.f32 0.0, %v3068
        %v3070 = vpop.f32.mrb[0].mxu0
        %v3071 = vpop.f32.mrb[0].mxu0
        %v3072 = vadd.f32 0.0, %v3071
        %v3073 = vpop.f32.mrb[0].mxu0
        %3074 = vmatprep.mubr.bf16.mxu0 0
        %3075 = vmatmul.mubr.bf16.gmra.mrb[0].mxu0 %v2972
        %v3076 = vpop.f32.mrb[0].mxu0
        %v3077 = vadd.f32 0.0, %v3076
        %v3078 = vpop.f32.mrb[0].mxu0
        %v3079 = vpop.f32.mrb[0].mxu0
        %v3080 = vadd.f32 0.0, %v3079
        %v3081 = vpop.f32.mrb[0].mxu0
        %3082 = vmatprep.mubr.bf16.mxu0 0
        %3083 = vmatmul.mubr.bf16.gmra.mrb[0].mxu0 %v2975
        %v3084 = vpop.f32.mrb[0].mxu0
        %v3085 = vadd.f32 0.0, %v3084
        %v3086 = vpop.f32.mrb[0].mxu0
        %v3087 = vpop.f32.mrb[0].mxu0
        %v3088 = vadd.f32 0.0, %v3087
        %v3089 = vpop.f32.mrb[0].mxu0
        %3090 = vmatprep.mubr.bf16.mxu0 0
        %3091 = vmatmul.mubr.bf16.gmra.mrb[0].mxu0 %v2978
        %v3092 = vpop.f32.mrb[0].mxu0
        %v3093 = vadd.f32 0.0, %v3092
        %v3094 = vpop.f32.mrb[0].mxu0
        %v3095 = vpop.f32.mrb[0].mxu0
        %v3096 = vadd.f32 0.0, %v3095
        %v3097 = vpop.f32.mrb[0].mxu0
        %3098 = vmatprep.mubr.bf16.mxu0 0
        %3099 = vmatmul.mubr.bf16.gmra.mrb[0].mxu0 %v2981
        %v3100 = vpop.f32.mrb[0].mxu0
        %v3101 = vadd.f32 0.0, %v3100
        %v3102 = vpop.f32.mrb[0].mxu0
        %v3103 = vpop.f32.mrb[0].mxu0
        %v3104 = vadd.f32 0.0, %v3103
        %v3105 = vpop.f32.mrb[0].mxu0
        %3106 = vmatprep.mubr.bf16.mxu0 0
        %3107 = vmatmul.mubr.bf16.gmra.mrb[0].mxu0 %v2984
        %v3108 = vpop.f32.mrb[0].mxu0
        %v3109 = vadd.f32 0.0, %v3108
        %v3110 = vpop.f32.mrb[0].mxu0
        %v3111 = vpop.f32.mrb[0].mxu0
        %v3112 = vadd.f32 0.0, %v3111
        %v3113 = vpop.f32.mrb[0].mxu0
        %3114 = vmatprep.mubr.bf16.mxu0 0
        %3115 = vmatmul.mubr.bf16.gmra.mrb[0].mxu0 %v2987
        %v3116 = vpop.f32.mrb[0].mxu0
        %v3117 = vadd.f32 0.0, %v3116
        %v3118 = vpop.f32.mrb[0].mxu0
        %v3119 = vpop.f32.mrb[0].mxu0
        %v3120 = vadd.f32 0.0, %v3119
        %v3121 = vpop.f32.mrb[0].mxu0
        %3122 = vmatprep.mubr.bf16.mxu0 0
        %3123 = vmatmul.mubr.bf16.gmra.mrb[0].mxu0 %v2990
        %v3124 = vpop.f32.mrb[0].mxu0
        %v3125 = vadd.f32 0.0, %v3124
        %v3126 = vpop.f32.mrb[0].mxu0
        %v3127 = vpop.f32.mrb[0].mxu0
        %v3128 = vadd.f32 0.0, %v3127
        %v3129 = vpop.f32.mrb[0].mxu0
        %3130 = vmatprep.mubr.bf16.mxu0 0
        %3131 = vmatmul.mubr.bf16.gmra.mrb[0].mxu0 %v2993
        %v3132 = vpop.f32.mrb[0].mxu0
        %v3133 = vadd.f32 0.0, %v3132
        %v3134 = vpop.f32.mrb[0].mxu0
        %v3135 = vpop.f32.mrb[0].mxu0
        %v3136 = vadd.f32 0.0, %v3135
        %v3137 = vpop.f32.mrb[0].mxu0
        %3138 = vmatprep.mubr.bf16.mxu0 0
        %3139 = vmatmul.mubr.bf16.gmra.mrb[0].mxu0 %v2996
        %v3140 = vpop.f32.mrb[0].mxu0
        %v3141 = vadd.f32 0.0, %v3140
        %v3142 = vpop.f32.mrb[0].mxu0
        %v3143 = vpop.f32.mrb[0].mxu0
        %v3144 = vadd.f32 0.0, %v3143
        %v3145 = vpop.f32.mrb[0].mxu0
        %3146 = vmatprep.mubr.bf16.mxu0 0
        %3147 = vmatmul.mubr.bf16.gmra.mrb[0].mxu0 %v2999
        %v3148 = vpop.f32.mrb[0].mxu0
        %v3149 = vadd.f32 0.0, %v3148
        %v3150 = vpop.f32.mrb[0].mxu0
        %v3151 = vpop.f32.mrb[0].mxu0
        %v3152 = vadd.f32 0.0, %v3151
        %v3153 = vpop.f32.mrb[0].mxu0
        %3154 = vmatprep.mubr.bf16.mxu0 0
        %3155 = vmatmul.mubr.bf16.gmra.mrb[0].mxu0 %v3002
        %v3156 = vpop.f32.mrb[0].mxu0
        %v3157 = vadd.f32 0.0, %v3156
        %v3158 = vpop.f32.mrb[0].mxu0
        %v3159 = vpop.f32.mrb[0].mxu0
        %v3160 = vadd.f32 0.0, %v3159
        %v3161 = vpop.f32.mrb[0].mxu0
        %3162 = vmatprep.mubr.bf16.mxu0 0
        %3163 = vmatmul.mubr.bf16.gmra.mrb[0].mxu0 %v3005
        %v3164 = vpop.f32.mrb[0].mxu0
        %v3165 = vadd.f32 0.0, %v3164
        %v3166 = vpop.f32.mrb[0].mxu0
        %v3167 = vpop.f32.mrb[0].mxu0
        %v3168 = vadd.f32 0.0, %v3167
        %v3169 = vpop.f32.mrb[0].mxu0
        %3170 = vdwg.mxu0
        %v3171 = vadd.f32 %v2698, %v3045
        %v3172 = vadd.f32 %v2699, %v3048
        %v3173 = vadd.f32 %v2700, %v3053
        %v3174 = vadd.f32 %v2701, %v3056
        %v3175 = vadd.f32 %v2702, %v3061
        %v3176 = vadd.f32 %v2703, %v3064
        %v3177 = vadd.f32 %v2704, %v3069
        %v3178 = vadd.f32 %v2705, %v3072
        %v3179 = vadd.f32 %v2706, %v3077
        %v3180 = vadd.f32 %v2707, %v3080
        %v3181 = vadd.f32 %v2708, %v3085
        %v3182 = vadd.f32 %v2709, %v3088
        %v3183 = vadd.f32 %v2710, %v3093
        %v3184 = vadd.f32 %v2711, %v3096
        %v3185 = vadd.f32 %v2712, %v3101
        %v3186 = vadd.f32 %v2713, %v3104
        %v3187 = vadd.f32 %v2714, %v3109
        %v3188 = vadd.f32 %v2715, %v3112
        %v3189 = vadd.f32 %v2716, %v3117
        %v3190 = vadd.f32 %v2717, %v3120
        %v3191 = vadd.f32 %v2718, %v3125
        %v3192 = vadd.f32 %v2719, %v3128
        %v3193 = vadd.f32 %v2720, %v3133
        %v3194 = vadd.f32 %v2721, %v3136
        %v3195 = vadd.f32 %v2722, %v3141
        %v3196 = vadd.f32 %v2723, %v3144
        %v3197 = vadd.f32 %v2724, %v3149
        %v3198 = vadd.f32 %v2725, %v3152
        %v3199 = vadd.f32 %v2726, %v3157
        %v3200 = vadd.f32 %v2727, %v3160
        %v3201 = vadd.f32 %v2728, %v3165
        %v3202 = vadd.f32 %v2729, %v3168
        %s3203 = sadd.s32 %s185, 2
        %s3204 = smul.u32 %s3203, 3
        %s3205 = smul.addr %s3204, 4
        %s3206 = scalar_lea.vmem %s182, %s3205
        %v3207 = vld [vmem:[%s3206] sm:$0xf]
        %v3208 = vld [vmem:[%s3206 + $0x4] sm:$0xf]
        %v3209 = vld [vmem:[%s3206 + $0xc] sm:$0xf]
        %v3210 = vld [vmem:[%s3206 + $0x10] sm:$0xf]
        %v3211 = vld [vmem:[%s3206 + $0x18] sm:$0xf]
        %v3212 = vld [vmem:[%s3206 + $0x1c] sm:$0xf]
        %v3213 = vld [vmem:[%s3206 + $0x24] sm:$0xf]
        %v3214 = vld [vmem:[%s3206 + $0x28] sm:$0xf]
        %v3215 = vld [vmem:[%s3206 + $0x30] sm:$0xf]
        %v3216 = vld [vmem:[%s3206 + $0x34] sm:$0xf]
        %v3217 = vld [vmem:[%s3206 + $0x3c] sm:$0xf]
        %v3218 = vld [vmem:[%s3206 + $0x40] sm:$0xf]
        %v3219 = vld [vmem:[%s3206 + $0x48] sm:$0xf]
        %v3220 = vld [vmem:[%s3206 + $0x4c] sm:$0xf]
        %v3221 = vld [vmem:[%s3206 + $0x54] sm:$0xf]
        %v3222 = vld [vmem:[%s3206 + $0x58] sm:$0xf]
        %v3223 = vld [vmem:[%s3206 + $0x60] sm:$0xf]
        %v3224 = vld [vmem:[%s3206 + $0x64] sm:$0xf]
        %v3225 = vld [vmem:[%s3206 + $0x6c] sm:$0xf]
        %v3226 = vld [vmem:[%s3206 + $0x70] sm:$0xf]
        %v3227 = vld [vmem:[%s3206 + $0x78] sm:$0xf]
        %v3228 = vld [vmem:[%s3206 + $0x7c] sm:$0xf]
        %v3229 = vld [vmem:[%s3206 + $0x84] sm:$0xf]
        %v3230 = vld [vmem:[%s3206 + $0x88] sm:$0xf]
        %v3231 = vld [vmem:[%s3206 + $0x90] sm:$0xf]
        %v3232 = vld [vmem:[%s3206 + $0x94] sm:$0xf]
        %v3233 = vld [vmem:[%s3206 + $0x9c] sm:$0xf]
        %v3234 = vld [vmem:[%s3206 + $0xa0] sm:$0xf]
        %v3235 = vld [vmem:[%s3206 + $0xa8] sm:$0xf]
        %v3236 = vld [vmem:[%s3206 + $0xac] sm:$0xf]
        %v3237 = vld [vmem:[%s3206 + $0xb4] sm:$0xf]
        %v3238 = vld [vmem:[%s3206 + $0xb8] sm:$0xf]
        %v3239 = vld [vmem:[%s1 + $0xc] sm:$0x3]
        %v3272 = vunpack.c.l.b16 %v3207
        %v3273 = vunpack.c.l.b16 %v3208
        %v3274 = vunpack.c.l.b16 %v3209
        %v3275 = vunpack.c.l.b16 %v3210
        %v3276 = vunpack.c.l.b16 %v3211
        %v3277 = vunpack.c.l.b16 %v3212
        %v3278 = vunpack.c.l.b16 %v3213
        %v3279 = vunpack.c.l.b16 %v3214
        %v3280 = vunpack.c.l.b16 %v3215
        %v3281 = vunpack.c.l.b16 %v3216
        %v3282 = vunpack.c.l.b16 %v3217
        %v3283 = vunpack.c.l.b16 %v3218
        %v3284 = vunpack.c.l.b16 %v3219
        %v3285 = vunpack.c.l.b16 %v3220
        %v3286 = vunpack.c.l.b16 %v3221
        %v3287 = vunpack.c.l.b16 %v3222
        %v3288 = vunpack.c.l.b16 %v3223
        %v3289 = vunpack.c.l.b16 %v3224
        %v3290 = vunpack.c.l.b16 %v3225
        %v3291 = vunpack.c.l.b16 %v3226
        %v3292 = vunpack.c.l.b16 %v3227
        %v3293 = vunpack.c.l.b16 %v3228
        %v3294 = vunpack.c.l.b16 %v3229
        %v3295 = vunpack.c.l.b16 %v3230
        %v3296 = vunpack.c.l.b16 %v3231
        %v3297 = vunpack.c.l.b16 %v3232
        %v3298 = vunpack.c.l.b16 %v3233
        %v3299 = vunpack.c.l.b16 %v3234
        %v3300 = vunpack.c.l.b16 %v3235
        %v3301 = vunpack.c.l.b16 %v3236
        %v3302 = vunpack.c.l.b16 %v3237
        %v3303 = vunpack.c.l.b16 %v3238
        %v3304 = vpack.c.b16 %v3273, %v3272
        %v3305 = vpack.c.b16 %v3275, %v3274
        %v3306 = vpack.c.b16 %v3277, %v3276
        %v3307 = vpack.c.b16 %v3279, %v3278
        %v3308 = vpack.c.b16 %v3281, %v3280
        %v3309 = vpack.c.b16 %v3283, %v3282
        %v3310 = vpack.c.b16 %v3285, %v3284
        %v3311 = vpack.c.b16 %v3287, %v3286
        %v3312 = vpack.c.b16 %v3289, %v3288
        %v3313 = vpack.c.b16 %v3291, %v3290
        %v3314 = vpack.c.b16 %v3293, %v3292
        %v3315 = vpack.c.b16 %v3295, %v3294
        %v3316 = vpack.c.b16 %v3297, %v3296
        %v3317 = vpack.c.b16 %v3299, %v3298
        %v3318 = vpack.c.b16 %v3301, %v3300
        %v3319 = vpack.c.b16 %v3303, %v3302
        %v3321 = vsel %vm678, %v3304, 0
        %v3324 = vsel %vm678, %v3305, 0
        %v3327 = vsel %vm678, %v3306, 0
        %v3330 = vsel %vm678, %v3307, 0
        %v3333 = vsel %vm678, %v3308, 0
        %v3336 = vsel %vm678, %v3309, 0
        %v3339 = vsel %vm678, %v3310, 0
        %v3342 = vsel %vm678, %v3311, 0
        %v3345 = vsel %vm678, %v3312, 0
        %v3348 = vsel %vm678, %v3313, 0
        %v3351 = vsel %vm678, %v3314, 0
        %v3354 = vsel %vm678, %v3315, 0
        %v3357 = vsel %vm678, %v3316, 0
        %v3360 = vsel %vm678, %v3317, 0
        %v3363 = vsel %vm678, %v3318, 0
        %v3366 = vsel %vm678, %v3319, 0
        %v3369 = vsel %vm727, %v3239, 0
        %3371 = vmatprep.subr.bf16.mxu0 0
        %3372 = vmatpush1.bf16.msra.mxu0 %v3369
        %3373 = vmatprep.subr.bf16.mxu0 0
        %3374 = vmatpush1.bf16.msra.mxu0 0
        %3375 = vmatprep.subr.bf16.mxu0 0
        %3376 = vmatpush1.bf16.msra.mxu0 0
        %3377 = vmatprep.subr.bf16.mxu0 0
        %3378 = vmatpush1.bf16.msra.mxu0 0
        %3379 = vmatprep.subr.bf16.mxu0 0
        %3380 = vmatpush1.bf16.msra.mxu0 0
        %3381 = vmatprep.subr.bf16.mxu0 0
        %3382 = vmatpush1.bf16.msra.mxu0 0
        %3383 = vmatprep.subr.bf16.mxu0 0
        %3384 = vmatpush1.bf16.msra.mxu0 0
        %3385 = vmatprep.subr.bf16.mxu0 0
        %3386 = vmatpush1.bf16.msra.mxu0 0
        %3387 = vmatprep.subr.bf16.mxu0 0
        %3388 = vmatpush1.bf16.msra.mxu0 0
        %3389 = vmatprep.subr.bf16.mxu0 0
        %3390 = vmatpush1.bf16.msra.mxu0 0
        %3391 = vmatprep.subr.bf16.mxu0 0
        %3392 = vmatpush1.bf16.msra.mxu0 0
        %3393 = vmatprep.subr.bf16.mxu0 0
        %3394 = vmatpush1.bf16.msra.mxu0 0
        %3395 = vmatprep.subr.bf16.mxu0 0
        %3396 = vmatpush1.bf16.msra.mxu0 0
        %3397 = vmatprep.subr.bf16.mxu0 0
        %3398 = vmatpush1.bf16.msra.mxu0 0
        %3399 = vmatprep.subr.bf16.mxu0 0
        %3400 = vmatpush1.bf16.msra.mxu0 0
        %3401 = vmatprep.subr.bf16.mxu0 0
        %3402 = vmatpush1.bf16.msra.mxu0 0
        %3403 = vmatprep.mubr.bf16.mxu0 0
        %3404 = vmatmul.mubr.bf16.gmra.mrb[0].mxu0 %v3321
        %v3405 = vpop.f32.mrb[0].mxu0
        %v3406 = vadd.f32 0.0, %v3405
        %v3407 = vpop.f32.mrb[0].mxu0
        %v3408 = vpop.f32.mrb[0].mxu0
        %v3409 = vadd.f32 0.0, %v3408
        %v3410 = vpop.f32.mrb[0].mxu0
        %3411 = vmatprep.mubr.bf16.mxu0 0
        %3412 = vmatmul.mubr.bf16.gmra.mrb[0].mxu0 %v3324
        %v3413 = vpop.f32.mrb[0].mxu0
        %v3414 = vadd.f32 0.0, %v3413
        %v3415 = vpop.f32.mrb[0].mxu0
        %v3416 = vpop.f32.mrb[0].mxu0
        %v3417 = vadd.f32 0.0, %v3416
        %v3418 = vpop.f32.mrb[0].mxu0
        %3419 = vmatprep.mubr.bf16.mxu0 0
        %3420 = vmatmul.mubr.bf16.gmra.mrb[0].mxu0 %v3327
        %v3421 = vpop.f32.mrb[0].mxu0
        %v3422 = vadd.f32 0.0, %v3421
        %v3423 = vpop.f32.mrb[0].mxu0
        %v3424 = vpop.f32.mrb[0].mxu0
        %v3425 = vadd.f32 0.0, %v3424
        %v3426 = vpop.f32.mrb[0].mxu0
        %3427 = vmatprep.mubr.bf16.mxu0 0
        %3428 = vmatmul.mubr.bf16.gmra.mrb[0].mxu0 %v3330
        %v3429 = vpop.f32.mrb[0].mxu0
        %v3430 = vadd.f32 0.0, %v3429
        %v3431 = vpop.f32.mrb[0].mxu0
        %v3432 = vpop.f32.mrb[0].mxu0
        %v3433 = vadd.f32 0.0, %v3432
        %v3434 = vpop.f32.mrb[0].mxu0
        %3435 = vmatprep.mubr.bf16.mxu0 0
        %3436 = vmatmul.mubr.bf16.gmra.mrb[0].mxu0 %v3333
        %v3437 = vpop.f32.mrb[0].mxu0
        %v3438 = vadd.f32 0.0, %v3437
        %v3439 = vpop.f32.mrb[0].mxu0
        %v3440 = vpop.f32.mrb[0].mxu0
        %v3441 = vadd.f32 0.0, %v3440
        %v3442 = vpop.f32.mrb[0].mxu0
        %3443 = vmatprep.mubr.bf16.mxu0 0
        %3444 = vmatmul.mubr.bf16.gmra.mrb[0].mxu0 %v3336
        %v3445 = vpop.f32.mrb[0].mxu0
        %v3446 = vadd.f32 0.0, %v3445
        %v3447 = vpop.f32.mrb[0].mxu0
        %v3448 = vpop.f32.mrb[0].mxu0
        %v3449 = vadd.f32 0.0, %v3448
        %v3450 = vpop.f32.mrb[0].mxu0
        %3451 = vmatprep.mubr.bf16.mxu0 0
        %3452 = vmatmul.mubr.bf16.gmra.mrb[0].mxu0 %v3339
        %v3453 = vpop.f32.mrb[0].mxu0
        %v3454 = vadd.f32 0.0, %v3453
        %v3455 = vpop.f32.mrb[0].mxu0
        %v3456 = vpop.f32.mrb[0].mxu0
        %v3457 = vadd.f32 0.0, %v3456
        %v3458 = vpop.f32.mrb[0].mxu0
        %3459 = vmatprep.mubr.bf16.mxu0 0
        %3460 = vmatmul.mubr.bf16.gmra.mrb[0].mxu0 %v3342
        %v3461 = vpop.f32.mrb[0].mxu0
        %v3462 = vadd.f32 0.0, %v3461
        %v3463 = vpop.f32.mrb[0].mxu0
        %v3464 = vpop.f32.mrb[0].mxu0
        %v3465 = vadd.f32 0.0, %v3464
        %v3466 = vpop.f32.mrb[0].mxu0
        %3467 = vmatprep.mubr.bf16.mxu0 0
        %3468 = vmatmul.mubr.bf16.gmra.mrb[0].mxu0 %v3345
        %v3469 = vpop.f32.mrb[0].mxu0
        %v3470 = vadd.f32 0.0, %v3469
        %v3471 = vpop.f32.mrb[0].mxu0
        %v3472 = vpop.f32.mrb[0].mxu0
        %v3473 = vadd.f32 0.0, %v3472
        %v3474 = vpop.f32.mrb[0].mxu0
        %3475 = vmatprep.mubr.bf16.mxu0 0
        %3476 = vmatmul.mubr.bf16.gmra.mrb[0].mxu0 %v3348
        %v3477 = vpop.f32.mrb[0].mxu0
        %v3478 = vadd.f32 0.0, %v3477
        %v3479 = vpop.f32.mrb[0].mxu0
        %v3480 = vpop.f32.mrb[0].mxu0
        %v3481 = vadd.f32 0.0, %v3480
        %v3482 = vpop.f32.mrb[0].mxu0
        %3483 = vmatprep.mubr.bf16.mxu0 0
        %3484 = vmatmul.mubr.bf16.gmra.mrb[0].mxu0 %v3351
        %v3485 = vpop.f32.mrb[0].mxu0
        %v3486 = vadd.f32 0.0, %v3485
        %v3487 = vpop.f32.mrb[0].mxu0
        %v3488 = vpop.f32.mrb[0].mxu0
        %v3489 = vadd.f32 0.0, %v3488
        %v3490 = vpop.f32.mrb[0].mxu0
        %3491 = vmatprep.mubr.bf16.mxu0 0
        %3492 = vmatmul.mubr.bf16.gmra.mrb[0].mxu0 %v3354
        %v3493 = vpop.f32.mrb[0].mxu0
        %v3494 = vadd.f32 0.0, %v3493
        %v3495 = vpop.f32.mrb[0].mxu0
        %v3496 = vpop.f32.mrb[0].mxu0
        %v3497 = vadd.f32 0.0, %v3496
        %v3498 = vpop.f32.mrb[0].mxu0
        %3499 = vmatprep.mubr.bf16.mxu0 0
        %3500 = vmatmul.mubr.bf16.gmra.mrb[0].mxu0 %v3357
        %v3501 = vpop.f32.mrb[0].mxu0
        %v3502 = vadd.f32 0.0, %v3501
        %v3503 = vpop.f32.mrb[0].mxu0
        %v3504 = vpop.f32.mrb[0].mxu0
        %v3505 = vadd.f32 0.0, %v3504
        %v3506 = vpop.f32.mrb[0].mxu0
        %3507 = vmatprep.mubr.bf16.mxu0 0
        %3508 = vmatmul.mubr.bf16.gmra.mrb[0].mxu0 %v3360
        %v3509 = vpop.f32.mrb[0].mxu0
        %v3510 = vadd.f32 0.0, %v3509
        %v3511 = vpop.f32.mrb[0].mxu0
        %v3512 = vpop.f32.mrb[0].mxu0
        %v3513 = vadd.f32 0.0, %v3512
        %v3514 = vpop.f32.mrb[0].mxu0
        %3515 = vmatprep.mubr.bf16.mxu0 0
        %3516 = vmatmul.mubr.bf16.gmra.mrb[0].mxu0 %v3363
        %v3517 = vpop.f32.mrb[0].mxu0
        %v3518 = vadd.f32 0.0, %v3517
        %v3519 = vpop.f32.mrb[0].mxu0
        %v3520 = vpop.f32.mrb[0].mxu0
        %v3521 = vadd.f32 0.0, %v3520
        %v3522 = vpop.f32.mrb[0].mxu0
        %3523 = vmatprep.mubr.bf16.mxu0 0
        %3524 = vmatmul.mubr.bf16.gmra.mrb[0].mxu0 %v3366
        %v3525 = vpop.f32.mrb[0].mxu0
        %v3526 = vadd.f32 0.0, %v3525
        %v3527 = vpop.f32.mrb[0].mxu0
        %v3528 = vpop.f32.mrb[0].mxu0
        %v3529 = vadd.f32 0.0, %v3528
        %v3530 = vpop.f32.mrb[0].mxu0
        %3531 = vdwg.mxu0
        %v3532 = vadd.f32 %v3171, %v3406
        %v3533 = vadd.f32 %v3172, %v3409
        %v3534 = vadd.f32 %v3173, %v3414
        %v3535 = vadd.f32 %v3174, %v3417
        %v3536 = vadd.f32 %v3175, %v3422
        %v3537 = vadd.f32 %v3176, %v3425
        %v3538 = vadd.f32 %v3177, %v3430
        %v3539 = vadd.f32 %v3178, %v3433
        %v3540 = vadd.f32 %v3179, %v3438
        %v3541 = vadd.f32 %v3180, %v3441
        %v3542 = vadd.f32 %v3181, %v3446
        %v3543 = vadd.f32 %v3182, %v3449
        %v3544 = vadd.f32 %v3183, %v3454
        %v3545 = vadd.f32 %v3184, %v3457
        %v3546 = vadd.f32 %v3185, %v3462
        %v3547 = vadd.f32 %v3186, %v3465
        %v3548 = vadd.f32 %v3187, %v3470
        %v3549 = vadd.f32 %v3188, %v3473
        %v3550 = vadd.f32 %v3189, %v3478
        %v3551 = vadd.f32 %v3190, %v3481
        %v3552 = vadd.f32 %v3191, %v3486
        %v3553 = vadd.f32 %v3192, %v3489
        %v3554 = vadd.f32 %v3193, %v3494
        %v3555 = vadd.f32 %v3194, %v3497
        %v3556 = vadd.f32 %v3195, %v3502
        %v3557 = vadd.f32 %v3196, %v3505
        %v3558 = vadd.f32 %v3197, %v3510
        %v3559 = vadd.f32 %v3198, %v3513
        %v3560 = vadd.f32 %v3199, %v3518
        %v3561 = vadd.f32 %v3200, %v3521
        %v3562 = vadd.f32 %v3201, %v3526
        %v3563 = vadd.f32 %v3202, %v3529
        %v3564 = vld [vmem:[%s3206] sm:$0xf]
        %v3565 = vld [vmem:[%s3206 + $0x4] sm:$0xf]
        %v3566 = vld [vmem:[%s3206 + $0x8] sm:$0x1]
        %v3567 = vld [vmem:[%s3206 + $0xc] sm:$0xf]
        %v3568 = vld [vmem:[%s3206 + $0x10] sm:$0xf]
        %v3569 = vld [vmem:[%s3206 + $0x14] sm:$0x1]
        %v3570 = vld [vmem:[%s3206 + $0x18] sm:$0xf]
        %v3571 = vld [vmem:[%s3206 + $0x1c] sm:$0xf]
        %v3572 = vld [vmem:[%s3206 + $0x20] sm:$0x1]
        %v3573 = vld [vmem:[%s3206 + $0x24] sm:$0xf]
        %v3574 = vld [vmem:[%s3206 + $0x28] sm:$0xf]
        %v3575 = vld [vmem:[%s3206 + $0x2c] sm:$0x1]
        %v3576 = vld [vmem:[%s3206 + $0x30] sm:$0xf]
        %v3577 = vld [vmem:[%s3206 + $0x34] sm:$0xf]
        %v3578 = vld [vmem:[%s3206 + $0x38] sm:$0x1]
        %v3579 = vld [vmem:[%s3206 + $0x3c] sm:$0xf]
        %v3580 = vld [vmem:[%s3206 + $0x40] sm:$0xf]
        %v3581 = vld [vmem:[%s3206 + $0x44] sm:$0x1]
        %v3582 = vld [vmem:[%s3206 + $0x48] sm:$0xf]
        %v3583 = vld [vmem:[%s3206 + $0x4c] sm:$0xf]
        %v3584 = vld [vmem:[%s3206 + $0x50] sm:$0x1]
        %v3585 = vld [vmem:[%s3206 + $0x54] sm:$0xf]
        %v3586 = vld [vmem:[%s3206 + $0x58] sm:$0xf]
        %v3587 = vld [vmem:[%s3206 + $0x5c] sm:$0x1]
        %v3588 = vld [vmem:[%s3206 + $0x60] sm:$0xf]
        %v3589 = vld [vmem:[%s3206 + $0x64] sm:$0xf]
        %v3590 = vld [vmem:[%s3206 + $0x68] sm:$0x1]
        %v3591 = vld [vmem:[%s3206 + $0x6c] sm:$0xf]
        %v3592 = vld [vmem:[%s3206 + $0x70] sm:$0xf]
        %v3593 = vld [vmem:[%s3206 + $0x74] sm:$0x1]
        %v3594 = vld [vmem:[%s3206 + $0x78] sm:$0xf]
        %v3595 = vld [vmem:[%s3206 + $0x7c] sm:$0xf]
        %v3596 = vld [vmem:[%s3206 + $0x80] sm:$0x1]
        %v3597 = vld [vmem:[%s3206 + $0x84] sm:$0xf]
        %v3598 = vld [vmem:[%s3206 + $0x88] sm:$0xf]
        %v3599 = vld [vmem:[%s3206 + $0x8c] sm:$0x1]
        %v3600 = vld [vmem:[%s3206 + $0x90] sm:$0xf]
        %v3601 = vld [vmem:[%s3206 + $0x94] sm:$0xf]
        %v3602 = vld [vmem:[%s3206 + $0x98] sm:$0x1]
        %v3603 = vld [vmem:[%s3206 + $0x9c] sm:$0xf]
        %v3604 = vld [vmem:[%s3206 + $0xa0] sm:$0xf]
        %v3605 = vld [vmem:[%s3206 + $0xa4] sm:$0x1]
        %v3606 = vld [vmem:[%s3206 + $0xa8] sm:$0xf]
        %v3607 = vld [vmem:[%s3206 + $0xac] sm:$0xf]
        %v3608 = vld [vmem:[%s3206 + $0xb0] sm:$0x1]
        %v3609 = vld [vmem:[%s3206 + $0xb4] sm:$0xf]
        %v3610 = vld [vmem:[%s3206 + $0xb8] sm:$0xf]
        %v3611 = vld [vmem:[%s3206 + $0xbc] sm:$0x1]
        %v3612 = vld [vmem:[%s1 + $0xc] sm:$0xc]
        %v3614 = vshrl.u32 %v3564, 16
        %v3616 = vrot.slane %v3614, 4
        %v3617 = vshll.u32 %v3564, 16
        %v3619 = vrot.slane %v3617, 5
        %v3620 = vor.u32 %v3616, %v3619
        %v3621 = vrot.slane %v3620, 4
        %v3623 = vshll.u32 %v3565, 16
        %v3625 = vrot.slane %v3623, 5
        %v3626 = vsel %vm241, %v3621, %v3625
        %v3627 = vshrl.u32 %v3565, 16
        %v3629 = vrot.slane %v3627, 4
        %v3630 = vor.u32 %v3629, %v3625
        %v3631 = vrot.slane %v3630, 4
        %v3633 = vshll.u32 %v3566, 16
        %v3635 = vrot.slane %v3633, 5
        %v3636 = vsel %vm241, %v3631, %v3635
        %v3638 = vshrl.u32 %v3567, 16
        %v3640 = vrot.slane %v3638, 4
        %v3641 = vshll.u32 %v3567, 16
        %v3643 = vrot.slane %v3641, 5
        %v3644 = vor.u32 %v3640, %v3643
        %v3645 = vrot.slane %v3644, 4
        %v3647 = vshll.u32 %v3568, 16
        %v3649 = vrot.slane %v3647, 5
        %v3650 = vsel %vm241, %v3645, %v3649
        %v3651 = vshrl.u32 %v3568, 16
        %v3653 = vrot.slane %v3651, 4
        %v3654 = vor.u32 %v3653, %v3649
        %v3655 = vrot.slane %v3654, 4
        %v3657 = vshll.u32 %v3569, 16
        %v3659 = vrot.slane %v3657, 5
        %v3660 = vsel %vm241, %v3655, %v3659
        %v3662 = vshrl.u32 %v3570, 16
        %v3664 = vrot.slane %v3662, 4
        %v3665 = vshll.u32 %v3570, 16
        %v3667 = vrot.slane %v3665, 5
        %v3668 = vor.u32 %v3664, %v3667
        %v3669 = vrot.slane %v3668, 4
        %v3671 = vshll.u32 %v3571, 16
        %v3673 = vrot.slane %v3671, 5
        %v3674 = vsel %vm241, %v3669, %v3673
        %v3675 = vshrl.u32 %v3571, 16
        %v3677 = vrot.slane %v3675, 4
        %v3678 = vor.u32 %v3677, %v3673
        %v3679 = vrot.slane %v3678, 4
        %v3681 = vshll.u32 %v3572, 16
        %v3683 = vrot.slane %v3681, 5
        %v3684 = vsel %vm241, %v3679, %v3683
        %v3686 = vshrl.u32 %v3573, 16
        %v3688 = vrot.slane %v3686, 4
        %v3689 = vshll.u32 %v3573, 16
        %v3691 = vrot.slane %v3689, 5
        %v3692 = vor.u32 %v3688, %v3691
        %v3693 = vrot.slane %v3692, 4
        %v3695 = vshll.u32 %v3574, 16
        %v3697 = vrot.slane %v3695, 5
        %v3698 = vsel %vm241, %v3693, %v3697
        %v3699 = vshrl.u32 %v3574, 16
        %v3701 = vrot.slane %v3699, 4
        %v3702 = vor.u32 %v3701, %v3697
        %v3703 = vrot.slane %v3702, 4
        %v3705 = vshll.u32 %v3575, 16
        %v3707 = vrot.slane %v3705, 5
        %v3708 = vsel %vm241, %v3703, %v3707
        %v3710 = vshrl.u32 %v3576, 16
        %v3712 = vrot.slane %v3710, 4
        %v3713 = vshll.u32 %v3576, 16
        %v3715 = vrot.slane %v3713, 5
        %v3716 = vor.u32 %v3712, %v3715
        %v3717 = vrot.slane %v3716, 4
        %v3719 = vshll.u32 %v3577, 16
        %v3721 = vrot.slane %v3719, 5
        %v3722 = vsel %vm241, %v3717, %v3721
        %v3723 = vshrl.u32 %v3577, 16
        %v3725 = vrot.slane %v3723, 4
        %v3726 = vor.u32 %v3725, %v3721
        %v3727 = vrot.slane %v3726, 4
        %v3729 = vshll.u32 %v3578, 16
        %v3731 = vrot.slane %v3729, 5
        %v3732 = vsel %vm241, %v3727, %v3731
        %v3734 = vshrl.u32 %v3579, 16
        %v3736 = vrot.slane %v3734, 4
        %v3737 = vshll.u32 %v3579, 16
        %v3739 = vrot.slane %v3737, 5
        %v3740 = vor.u32 %v3736, %v3739
        %v3741 = vrot.slane %v3740, 4
        %v3743 = vshll.u32 %v3580, 16
        %v3745 = vrot.slane %v3743, 5
        %v3746 = vsel %vm241, %v3741, %v3745
        %v3747 = vshrl.u32 %v3580, 16
        %v3749 = vrot.slane %v3747, 4
        %v3750 = vor.u32 %v3749, %v3745
        %v3751 = vrot.slane %v3750, 4
        %v3753 = vshll.u32 %v3581, 16
        %v3755 = vrot.slane %v3753, 5
        %v3756 = vsel %vm241, %v3751, %v3755
        %v3758 = vshrl.u32 %v3582, 16
        %v3760 = vrot.slane %v3758, 4
        %v3761 = vshll.u32 %v3582, 16
        %v3763 = vrot.slane %v3761, 5
        %v3764 = vor.u32 %v3760, %v3763
        %v3765 = vrot.slane %v3764, 4
        %v3767 = vshll.u32 %v3583, 16
        %v3769 = vrot.slane %v3767, 5
        %v3770 = vsel %vm241, %v3765, %v3769
        %v3771 = vshrl.u32 %v3583, 16
        %v3773 = vrot.slane %v3771, 4
        %v3774 = vor.u32 %v3773, %v3769
        %v3775 = vrot.slane %v3774, 4
        %v3777 = vshll.u32 %v3584, 16
        %v3779 = vrot.slane %v3777, 5
        %v3780 = vsel %vm241, %v3775, %v3779
        %v3782 = vshrl.u32 %v3585, 16
        %v3784 = vrot.slane %v3782, 4
        %v3785 = vshll.u32 %v3585, 16
        %v3787 = vrot.slane %v3785, 5
        %v3788 = vor.u32 %v3784, %v3787
        %v3789 = vrot.slane %v3788, 4
        %v3791 = vshll.u32 %v3586, 16
        %v3793 = vrot.slane %v3791, 5
        %v3794 = vsel %vm241, %v3789, %v3793
        %v3795 = vshrl.u32 %v3586, 16
        %v3797 = vrot.slane %v3795, 4
        %v3798 = vor.u32 %v3797, %v3793
        %v3799 = vrot.slane %v3798, 4
        %v3801 = vshll.u32 %v3587, 16
        %v3803 = vrot.slane %v3801, 5
        %v3804 = vsel %vm241, %v3799, %v3803
        %v3806 = vshrl.u32 %v3588, 16
        %v3808 = vrot.slane %v3806, 4
        %v3809 = vshll.u32 %v3588, 16
        %v3811 = vrot.slane %v3809, 5
        %v3812 = vor.u32 %v3808, %v3811
        %v3813 = vrot.slane %v3812, 4
        %v3815 = vshll.u32 %v3589, 16
        %v3817 = vrot.slane %v3815, 5
        %v3818 = vsel %vm241, %v3813, %v3817
        %v3819 = vshrl.u32 %v3589, 16
        %v3821 = vrot.slane %v3819, 4
        %v3822 = vor.u32 %v3821, %v3817
        %v3823 = vrot.slane %v3822, 4
        %v3825 = vshll.u32 %v3590, 16
        %v3827 = vrot.slane %v3825, 5
        %v3828 = vsel %vm241, %v3823, %v3827
        %v3830 = vshrl.u32 %v3591, 16
        %v3832 = vrot.slane %v3830, 4
        %v3833 = vshll.u32 %v3591, 16
        %v3835 = vrot.slane %v3833, 5
        %v3836 = vor.u32 %v3832, %v3835
        %v3837 = vrot.slane %v3836, 4
        %v3839 = vshll.u32 %v3592, 16
        %v3841 = vrot.slane %v3839, 5
        %v3842 = vsel %vm241, %v3837, %v3841
        %v3843 = vshrl.u32 %v3592, 16
        %v3845 = vrot.slane %v3843, 4
        %v3846 = vor.u32 %v3845, %v3841
        %v3847 = vrot.slane %v3846, 4
        %v3849 = vshll.u32 %v3593, 16
        %v3851 = vrot.slane %v3849, 5
        %v3852 = vsel %vm241, %v3847, %v3851
        %v3854 = vshrl.u32 %v3594, 16
        %v3856 = vrot.slane %v3854, 4
        %v3857 = vshll.u32 %v3594, 16
        %v3859 = vrot.slane %v3857, 5
        %v3860 = vor.u32 %v3856, %v3859
        %v3861 = vrot.slane %v3860, 4
        %v3863 = vshll.u32 %v3595, 16
        %v3865 = vrot.slane %v3863, 5
        %v3866 = vsel %vm241, %v3861, %v3865
        %v3867 = vshrl.u32 %v3595, 16
        %v3869 = vrot.slane %v3867, 4
        %v3870 = vor.u32 %v3869, %v3865
        %v3871 = vrot.slane %v3870, 4
        %v3873 = vshll.u32 %v3596, 16
        %v3875 = vrot.slane %v3873, 5
        %v3876 = vsel %vm241, %v3871, %v3875
        %v3878 = vshrl.u32 %v3597, 16
        %v3880 = vrot.slane %v3878, 4
        %v3881 = vshll.u32 %v3597, 16
        %v3883 = vrot.slane %v3881, 5
        %v3884 = vor.u32 %v3880, %v3883
        %v3885 = vrot.slane %v3884, 4
        %v3887 = vshll.u32 %v3598, 16
        %v3889 = vrot.slane %v3887, 5
        %v3890 = vsel %vm241, %v3885, %v3889
        %v3891 = vshrl.u32 %v3598, 16
        %v3893 = vrot.slane %v3891, 4
        %v3894 = vor.u32 %v3893, %v3889
        %v3895 = vrot.slane %v3894, 4
        %v3897 = vshll.u32 %v3599, 16
        %v3899 = vrot.slane %v3897, 5
        %v3900 = vsel %vm241, %v3895, %v3899
        %v3902 = vshrl.u32 %v3600, 16
        %v3904 = vrot.slane %v3902, 4
        %v3905 = vshll.u32 %v3600, 16
        %v3907 = vrot.slane %v3905, 5
        %v3908 = vor.u32 %v3904, %v3907
        %v3909 = vrot.slane %v3908, 4
        %v3911 = vshll.u32 %v3601, 16
        %v3913 = vrot.slane %v3911, 5
        %v3914 = vsel %vm241, %v3909, %v3913
        %v3915 = vshrl.u32 %v3601, 16
        %v3917 = vrot.slane %v3915, 4
        %v3918 = vor.u32 %v3917, %v3913
        %v3919 = vrot.slane %v3918, 4
        %v3921 = vshll.u32 %v3602, 16
        %v3923 = vrot.slane %v3921, 5
        %v3924 = vsel %vm241, %v3919, %v3923
        %v3926 = vshrl.u32 %v3603, 16
        %v3928 = vrot.slane %v3926, 4
        %v3929 = vshll.u32 %v3603, 16
        %v3931 = vrot.slane %v3929, 5
        %v3932 = vor.u32 %v3928, %v3931
        %v3933 = vrot.slane %v3932, 4
        %v3935 = vshll.u32 %v3604, 16
        %v3937 = vrot.slane %v3935, 5
        %v3938 = vsel %vm241, %v3933, %v3937
        %v3939 = vshrl.u32 %v3604, 16
        %v3941 = vrot.slane %v3939, 4
        %v3942 = vor.u32 %v3941, %v3937
        %v3943 = vrot.slane %v3942, 4
        %v3945 = vshll.u32 %v3605, 16
        %v3947 = vrot.slane %v3945, 5
        %v3948 = vsel %vm241, %v3943, %v3947
        %v3950 = vshrl.u32 %v3606, 16
        %v3952 = vrot.slane %v3950, 4
        %v3953 = vshll.u32 %v3606, 16
        %v3955 = vrot.slane %v3953, 5
        %v3956 = vor.u32 %v3952, %v3955
        %v3957 = vrot.slane %v3956, 4
        %v3959 = vshll.u32 %v3607, 16
        %v3961 = vrot.slane %v3959, 5
        %v3962 = vsel %vm241, %v3957, %v3961
        %v3963 = vshrl.u32 %v3607, 16
        %v3965 = vrot.slane %v3963, 4
        %v3966 = vor.u32 %v3965, %v3961
        %v3967 = vrot.slane %v3966, 4
        %v3969 = vshll.u32 %v3608, 16
        %v3971 = vrot.slane %v3969, 5
        %v3972 = vsel %vm241, %v3967, %v3971
        %v3974 = vshrl.u32 %v3609, 16
        %v3976 = vrot.slane %v3974, 4
        %v3977 = vshll.u32 %v3609, 16
        %v3979 = vrot.slane %v3977, 5
        %v3980 = vor.u32 %v3976, %v3979
        %v3981 = vrot.slane %v3980, 4
        %v3983 = vshll.u32 %v3610, 16
        %v3985 = vrot.slane %v3983, 5
        %v3986 = vsel %vm241, %v3981, %v3985
        %v3987 = vshrl.u32 %v3610, 16
        %v3989 = vrot.slane %v3987, 4
        %v3990 = vor.u32 %v3989, %v3985
        %v3991 = vrot.slane %v3990, 4
        %v3993 = vshll.u32 %v3611, 16
        %v3995 = vrot.slane %v3993, 5
        %v3996 = vsel %vm241, %v3991, %v3995
        %v3997 = vunpack.c.l.b16 %v3626
        %v3998 = vunpack.c.l.b16 %v3636
        %v3999 = vunpack.c.l.b16 %v3650
        %v4000 = vunpack.c.l.b16 %v3660
        %v4001 = vunpack.c.l.b16 %v3674
        %v4002 = vunpack.c.l.b16 %v3684
        %v4003 = vunpack.c.l.b16 %v3698
        %v4004 = vunpack.c.l.b16 %v3708
        %v4005 = vunpack.c.l.b16 %v3722
        %v4006 = vunpack.c.l.b16 %v3732
        %v4007 = vunpack.c.l.b16 %v3746
        %v4008 = vunpack.c.l.b16 %v3756
        %v4009 = vunpack.c.l.b16 %v3770
        %v4010 = vunpack.c.l.b16 %v3780
        %v4011 = vunpack.c.l.b16 %v3794
        %v4012 = vunpack.c.l.b16 %v3804
        %v4013 = vunpack.c.l.b16 %v3818
        %v4014 = vunpack.c.l.b16 %v3828
        %v4015 = vunpack.c.l.b16 %v3842
        %v4016 = vunpack.c.l.b16 %v3852
        %v4017 = vunpack.c.l.b16 %v3866
        %v4018 = vunpack.c.l.b16 %v3876
        %v4019 = vunpack.c.l.b16 %v3890
        %v4020 = vunpack.c.l.b16 %v3900
        %v4021 = vunpack.c.l.b16 %v3914
        %v4022 = vunpack.c.l.b16 %v3924
        %v4023 = vunpack.c.l.b16 %v3938
        %v4024 = vunpack.c.l.b16 %v3948
        %v4025 = vunpack.c.l.b16 %v3962
        %v4026 = vunpack.c.l.b16 %v3972
        %v4027 = vunpack.c.l.b16 %v3986
        %v4028 = vunpack.c.l.b16 %v3996
        %v4029 = vpack.c.b16 %v3998, %v3997
        %v4030 = vpack.c.b16 %v4000, %v3999
        %v4031 = vpack.c.b16 %v4002, %v4001
        %v4032 = vpack.c.b16 %v4004, %v4003
        %v4033 = vpack.c.b16 %v4006, %v4005
        %v4034 = vpack.c.b16 %v4008, %v4007
        %v4035 = vpack.c.b16 %v4010, %v4009
        %v4036 = vpack.c.b16 %v4012, %v4011
        %v4037 = vpack.c.b16 %v4014, %v4013
        %v4038 = vpack.c.b16 %v4016, %v4015
        %v4039 = vpack.c.b16 %v4018, %v4017
        %v4040 = vpack.c.b16 %v4020, %v4019
        %v4041 = vpack.c.b16 %v4022, %v4021
        %v4042 = vpack.c.b16 %v4024, %v4023
        %v4043 = vpack.c.b16 %v4026, %v4025
        %v4044 = vpack.c.b16 %v4028, %v4027
        %v4046 = vunpack.c.l.b16 %v3612
        %v4047 = vpack.c.b16 %v4046, %v4046
        %v4048 = vrot.slane %v4047, 2
        %v4050 = vsel %vm678, %v4029, 0
        %v4053 = vsel %vm678, %v4030, 0
        %v4056 = vsel %vm678, %v4031, 0
        %v4059 = vsel %vm678, %v4032, 0
        %v4062 = vsel %vm678, %v4033, 0
        %v4065 = vsel %vm678, %v4034, 0
        %v4068 = vsel %vm678, %v4035, 0
        %v4071 = vsel %vm678, %v4036, 0
        %v4074 = vsel %vm678, %v4037, 0
        %v4077 = vsel %vm678, %v4038, 0
        %v4080 = vsel %vm678, %v4039, 0
        %v4083 = vsel %vm678, %v4040, 0
        %v4086 = vsel %vm678, %v4041, 0
        %v4089 = vsel %vm678, %v4042, 0
        %v4092 = vsel %vm678, %v4043, 0
        %v4095 = vsel %vm678, %v4044, 0
        %v4098 = vsel %vm727, %v4048, 0
        %4100 = vmatprep.subr.bf16.mxu0 0
        %4101 = vmatpush1.bf16.msra.mxu0 %v4098
        %4102 = vmatprep.subr.bf16.mxu0 0
        %4103 = vmatpush1.bf16.msra.mxu0 0
        %4104 = vmatprep.subr.bf16.mxu0 0
        %4105 = vmatpush1.bf16.msra.mxu0 0
        %4106 = vmatprep.subr.bf16.mxu0 0
        %4107 = vmatpush1.bf16.msra.mxu0 0
        %4108 = vmatprep.subr.bf16.mxu0 0
        %4109 = vmatpush1.bf16.msra.mxu0 0
        %4110 = vmatprep.subr.bf16.mxu0 0
        %4111 = vmatpush1.bf16.msra.mxu0 0
        %4112 = vmatprep.subr.bf16.mxu0 0
        %4113 = vmatpush1.bf16.msra.mxu0 0
        %4114 = vmatprep.subr.bf16.mxu0 0
        %4115 = vmatpush1.bf16.msra.mxu0 0
        %4116 = vmatprep.subr.bf16.mxu0 0
        %4117 = vmatpush1.bf16.msra.mxu0 0
        %4118 = vmatprep.subr.bf16.mxu0 0
        %4119 = vmatpush1.bf16.msra.mxu0 0
        %4120 = vmatprep.subr.bf16.mxu0 0
        %4121 = vmatpush1.bf16.msra.mxu0 0
        %4122 = vmatprep.subr.bf16.mxu0 0
        %4123 = vmatpush1.bf16.msra.mxu0 0
        %4124 = vmatprep.subr.bf16.mxu0 0
        %4125 = vmatpush1.bf16.msra.mxu0 0
        %4126 = vmatprep.subr.bf16.mxu0 0
        %4127 = vmatpush1.bf16.msra.mxu0 0
        %4128 = vmatprep.subr.bf16.mxu0 0
        %4129 = vmatpush1.bf16.msra.mxu0 0
        %4130 = vmatprep.subr.bf16.mxu0 0
        %4131 = vmatpush1.bf16.msra.mxu0 0
        %4132 = vmatprep.mubr.bf16.mxu0 0
        %4133 = vmatmul.mubr.bf16.gmra.mrb[0].mxu0 %v4050
        %v4134 = vpop.f32.mrb[0].mxu0
        %v4135 = vadd.f32 0.0, %v4134
        %v4136 = vpop.f32.mrb[0].mxu0
        %v4137 = vpop.f32.mrb[0].mxu0
        %v4138 = vadd.f32 0.0, %v4137
        %v4139 = vpop.f32.mrb[0].mxu0
        %4140 = vmatprep.mubr.bf16.mxu0 0
        %4141 = vmatmul.mubr.bf16.gmra.mrb[0].mxu0 %v4053
        %v4142 = vpop.f32.mrb[0].mxu0
        %v4143 = vadd.f32 0.0, %v4142
        %v4144 = vpop.f32.mrb[0].mxu0
        %v4145 = vpop.f32.mrb[0].mxu0
        %v4146 = vadd.f32 0.0, %v4145
        %v4147 = vpop.f32.mrb[0].mxu0
        %4148 = vmatprep.mubr.bf16.mxu0 0
        %4149 = vmatmul.mubr.bf16.gmra.mrb[0].mxu0 %v4056
        %v4150 = vpop.f32.mrb[0].mxu0
        %v4151 = vadd.f32 0.0, %v4150
        %v4152 = vpop.f32.mrb[0].mxu0
        %v4153 = vpop.f32.mrb[0].mxu0
        %v4154 = vadd.f32 0.0, %v4153
        %v4155 = vpop.f32.mrb[0].mxu0
        %4156 = vmatprep.mubr.bf16.mxu0 0
        %4157 = vmatmul.mubr.bf16.gmra.mrb[0].mxu0 %v4059
        %v4158 = vpop.f32.mrb[0].mxu0
        %v4159 = vadd.f32 0.0, %v4158
        %v4160 = vpop.f32.mrb[0].mxu0
        %v4161 = vpop.f32.mrb[0].mxu0
        %v4162 = vadd.f32 0.0, %v4161
        %v4163 = vpop.f32.mrb[0].mxu0
        %4164 = vmatprep.mubr.bf16.mxu0 0
        %4165 = vmatmul.mubr.bf16.gmra.mrb[0].mxu0 %v4062
        %v4166 = vpop.f32.mrb[0].mxu0
        %v4167 = vadd.f32 0.0, %v4166
        %v4168 = vpop.f32.mrb[0].mxu0
        %v4169 = vpop.f32.mrb[0].mxu0
        %v4170 = vadd.f32 0.0, %v4169
        %v4171 = vpop.f32.mrb[0].mxu0
        %4172 = vmatprep.mubr.bf16.mxu0 0
        %4173 = vmatmul.mubr.bf16.gmra.mrb[0].mxu0 %v4065
        %v4174 = vpop.f32.mrb[0].mxu0
        %v4175 = vadd.f32 0.0, %v4174
        %v4176 = vpop.f32.mrb[0].mxu0
        %v4177 = vpop.f32.mrb[0].mxu0
        %v4178 = vadd.f32 0.0, %v4177
        %v4179 = vpop.f32.mrb[0].mxu0
        %4180 = vmatprep.mubr.bf16.mxu0 0
        %4181 = vmatmul.mubr.bf16.gmra.mrb[0].mxu0 %v4068
        %v4182 = vpop.f32.mrb[0].mxu0
        %v4183 = vadd.f32 0.0, %v4182
        %v4184 = vpop.f32.mrb[0].mxu0
        %v4185 = vpop.f32.mrb[0].mxu0
        %v4186 = vadd.f32 0.0, %v4185
        %v4187 = vpop.f32.mrb[0].mxu0
        %4188 = vmatprep.mubr.bf16.mxu0 0
        %4189 = vmatmul.mubr.bf16.gmra.mrb[0].mxu0 %v4071
        %v4190 = vpop.f32.mrb[0].mxu0
        %v4191 = vadd.f32 0.0, %v4190
        %v4192 = vpop.f32.mrb[0].mxu0
        %v4193 = vpop.f32.mrb[0].mxu0
        %v4194 = vadd.f32 0.0, %v4193
        %v4195 = vpop.f32.mrb[0].mxu0
        %4196 = vmatprep.mubr.bf16.mxu0 0
        %4197 = vmatmul.mubr.bf16.gmra.mrb[0].mxu0 %v4074
        %v4198 = vpop.f32.mrb[0].mxu0
        %v4199 = vadd.f32 0.0, %v4198
        %v4200 = vpop.f32.mrb[0].mxu0
        %v4201 = vpop.f32.mrb[0].mxu0
        %v4202 = vadd.f32 0.0, %v4201
        %v4203 = vpop.f32.mrb[0].mxu0
        %4204 = vmatprep.mubr.bf16.mxu0 0
        %4205 = vmatmul.mubr.bf16.gmra.mrb[0].mxu0 %v4077
        %v4206 = vpop.f32.mrb[0].mxu0
        %v4207 = vadd.f32 0.0, %v4206
        %v4208 = vpop.f32.mrb[0].mxu0
        %v4209 = vpop.f32.mrb[0].mxu0
        %v4210 = vadd.f32 0.0, %v4209
        %v4211 = vpop.f32.mrb[0].mxu0
        %4212 = vmatprep.mubr.bf16.mxu0 0
        %4213 = vmatmul.mubr.bf16.gmra.mrb[0].mxu0 %v4080
        %v4214 = vpop.f32.mrb[0].mxu0
        %v4215 = vadd.f32 0.0, %v4214
        %v4216 = vpop.f32.mrb[0].mxu0
        %v4217 = vpop.f32.mrb[0].mxu0
        %v4218 = vadd.f32 0.0, %v4217
        %v4219 = vpop.f32.mrb[0].mxu0
        %4220 = vmatprep.mubr.bf16.mxu0 0
        %4221 = vmatmul.mubr.bf16.gmra.mrb[0].mxu0 %v4083
        %v4222 = vpop.f32.mrb[0].mxu0
        %v4223 = vadd.f32 0.0, %v4222
        %v4224 = vpop.f32.mrb[0].mxu0
        %v4225 = vpop.f32.mrb[0].mxu0
        %v4226 = vadd.f32 0.0, %v4225
        %v4227 = vpop.f32.mrb[0].mxu0
        %4228 = vmatprep.mubr.bf16.mxu0 0
        %4229 = vmatmul.mubr.bf16.gmra.mrb[0].mxu0 %v4086
        %v4230 = vpop.f32.mrb[0].mxu0
        %v4231 = vadd.f32 0.0, %v4230
        %v4232 = vpop.f32.mrb[0].mxu0
        %v4233 = vpop.f32.mrb[0].mxu0
        %v4234 = vadd.f32 0.0, %v4233
        %v4235 = vpop.f32.mrb[0].mxu0
        %4236 = vmatprep.mubr.bf16.mxu0 0
        %4237 = vmatmul.mubr.bf16.gmra.mrb[0].mxu0 %v4089
        %v4238 = vpop.f32.mrb[0].mxu0
        %v4239 = vadd.f32 0.0, %v4238
        %v4240 = vpop.f32.mrb[0].mxu0
        %v4241 = vpop.f32.mrb[0].mxu0
        %v4242 = vadd.f32 0.0, %v4241
        %v4243 = vpop.f32.mrb[0].mxu0
        %4244 = vmatprep.mubr.bf16.mxu0 0
        %4245 = vmatmul.mubr.bf16.gmra.mrb[0].mxu0 %v4092
        %v4246 = vpop.f32.mrb[0].mxu0
        %v4247 = vadd.f32 0.0, %v4246
        %v4248 = vpop.f32.mrb[0].mxu0
        %v4249 = vpop.f32.mrb[0].mxu0
        %v4250 = vadd.f32 0.0, %v4249
        %v4251 = vpop.f32.mrb[0].mxu0
        %4252 = vmatprep.mubr.bf16.mxu0 0
        %4253 = vmatmul.mubr.bf16.gmra.mrb[0].mxu0 %v4095
        %v4254 = vpop.f32.mrb[0].mxu0
        %v4255 = vadd.f32 0.0, %v4254
        %v4256 = vpop.f32.mrb[0].mxu0
        %v4257 = vpop.f32.mrb[0].mxu0
        %v4258 = vadd.f32 0.0, %v4257
        %v4259 = vpop.f32.mrb[0].mxu0
        %4260 = vdwg.mxu0
        %v4261 = vadd.f32 %v3532, %v4135
        %v4262 = vadd.f32 %v3533, %v4138
        %v4263 = vadd.f32 %v3534, %v4143
        %v4264 = vadd.f32 %v3535, %v4146
        %v4265 = vadd.f32 %v3536, %v4151
        %v4266 = vadd.f32 %v3537, %v4154
        %v4267 = vadd.f32 %v3538, %v4159
        %v4268 = vadd.f32 %v3539, %v4162
        %v4269 = vadd.f32 %v3540, %v4167
        %v4270 = vadd.f32 %v3541, %v4170
        %v4271 = vadd.f32 %v3542, %v4175
        %v4272 = vadd.f32 %v3543, %v4178
        %v4273 = vadd.f32 %v3544, %v4183
        %v4274 = vadd.f32 %v3545, %v4186
        %v4275 = vadd.f32 %v3546, %v4191
        %v4276 = vadd.f32 %v3547, %v4194
        %v4277 = vadd.f32 %v3548, %v4199
        %v4278 = vadd.f32 %v3549, %v4202
        %v4279 = vadd.f32 %v3550, %v4207
        %v4280 = vadd.f32 %v3551, %v4210
        %v4281 = vadd.f32 %v3552, %v4215
        %v4282 = vadd.f32 %v3553, %v4218
        %v4283 = vadd.f32 %v3554, %v4223
        %v4284 = vadd.f32 %v3555, %v4226
        %v4285 = vadd.f32 %v3556, %v4231
        %v4286 = vadd.f32 %v3557, %v4234
        %v4287 = vadd.f32 %v3558, %v4239
        %v4288 = vadd.f32 %v3559, %v4242
        %v4289 = vadd.f32 %v3560, %v4247
        %v4290 = vadd.f32 %v3561, %v4250
        %v4291 = vadd.f32 %v3562, %v4255
        %v4292 = vadd.f32 %v3563, %v4258
        %v4293 = vld [vmem:[%s3206] sm:$0xe]
        %v4294 = vld [vmem:[%s3206 + $0xc] sm:$0xe]
        %v4295 = vld [vmem:[%s3206 + $0x18] sm:$0xe]
        %v4296 = vld [vmem:[%s3206 + $0x24] sm:$0xe]
        %v4297 = vld [vmem:[%s3206 + $0x30] sm:$0xe]
        %v4298 = vld [vmem:[%s3206 + $0x3c] sm:$0xe]
        %v4299 = vld [vmem:[%s3206 + $0x48] sm:$0xe]
        %v4300 = vld [vmem:[%s3206 + $0x54] sm:$0xe]
        %v4301 = vld [vmem:[%s3206 + $0x60] sm:$0xe]
        %v4302 = vld [vmem:[%s3206 + $0x6c] sm:$0xe]
        %v4303 = vld [vmem:[%s3206 + $0x78] sm:$0xe]
        %v4304 = vld [vmem:[%s3206 + $0x84] sm:$0xe]
        %v4305 = vld [vmem:[%s3206 + $0x90] sm:$0xe]
        %v4306 = vld [vmem:[%s3206 + $0x9c] sm:$0xe]
        %v4307 = vld [vmem:[%s3206 + $0xa8] sm:$0xe]
        %v4308 = vld [vmem:[%s3206 + $0xb4] sm:$0xe]
        %v4309 = vld [vmem:[%s1 + $0x10] sm:$0x3]
        %v4358 = vrot.slane %v4293, 5
        %v4359 = vrot.slane %v4358, 4
        %v4360 = vrot.slane %v3565, 5
        %v4361 = vsel %vm1235, %v4359, %v4360
        %v4362 = vrot.slane %v4360, 4
        %v4363 = vrot.slane %v3566, 5
        %v4364 = vsel %vm1235, %v4362, %v4363
        %v4365 = vrot.slane %v4294, 5
        %v4366 = vrot.slane %v4365, 4
        %v4367 = vrot.slane %v3568, 5
        %v4368 = vsel %vm1235, %v4366, %v4367
        %v4369 = vrot.slane %v4367, 4
        %v4370 = vrot.slane %v3569, 5
        %v4371 = vsel %vm1235, %v4369, %v4370
        %v4372 = vrot.slane %v4295, 5
        %v4373 = vrot.slane %v4372, 4
        %v4374 = vrot.slane %v3571, 5
        %v4375 = vsel %vm1235, %v4373, %v4374
        %v4376 = vrot.slane %v4374, 4
        %v4377 = vrot.slane %v3572, 5
        %v4378 = vsel %vm1235, %v4376, %v4377
        %v4379 = vrot.slane %v4296, 5
        %v4380 = vrot.slane %v4379, 4
        %v4381 = vrot.slane %v3574, 5
        %v4382 = vsel %vm1235, %v4380, %v4381
        %v4383 = vrot.slane %v4381, 4
        %v4384 = vrot.slane %v3575, 5
        %v4385 = vsel %vm1235, %v4383, %v4384
        %v4386 = vrot.slane %v4297, 5
        %v4387 = vrot.slane %v4386, 4
        %v4388 = vrot.slane %v3577, 5
        %v4389 = vsel %vm1235, %v4387, %v4388
        %v4390 = vrot.slane %v4388, 4
        %v4391 = vrot.slane %v3578, 5
        %v4392 = vsel %vm1235, %v4390, %v4391
        %v4393 = vrot.slane %v4298, 5
        %v4394 = vrot.slane %v4393, 4
        %v4395 = vrot.slane %v3580, 5
        %v4396 = vsel %vm1235, %v4394, %v4395
        %v4397 = vrot.slane %v4395, 4
        %v4398 = vrot.slane %v3581, 5
        %v4399 = vsel %vm1235, %v4397, %v4398
        %v4400 = vrot.slane %v4299, 5
        %v4401 = vrot.slane %v4400, 4
        %v4402 = vrot.slane %v3583, 5
        %v4403 = vsel %vm1235, %v4401, %v4402
        %v4404 = vrot.slane %v4402, 4
        %v4405 = vrot.slane %v3584, 5
        %v4406 = vsel %vm1235, %v4404, %v4405
        %v4407 = vrot.slane %v4300, 5
        %v4408 = vrot.slane %v4407, 4
        %v4409 = vrot.slane %v3586, 5
        %v4410 = vsel %vm1235, %v4408, %v4409
        %v4411 = vrot.slane %v4409, 4
        %v4412 = vrot.slane %v3587, 5
        %v4413 = vsel %vm1235, %v4411, %v4412
        %v4414 = vrot.slane %v4301, 5
        %v4415 = vrot.slane %v4414, 4
        %v4416 = vrot.slane %v3589, 5
        %v4417 = vsel %vm1235, %v4415, %v4416
        %v4418 = vrot.slane %v4416, 4
        %v4419 = vrot.slane %v3590, 5
        %v4420 = vsel %vm1235, %v4418, %v4419
        %v4421 = vrot.slane %v4302, 5
        %v4422 = vrot.slane %v4421, 4
        %v4423 = vrot.slane %v3592, 5
        %v4424 = vsel %vm1235, %v4422, %v4423
        %v4425 = vrot.slane %v4423, 4
        %v4426 = vrot.slane %v3593, 5
        %v4427 = vsel %vm1235, %v4425, %v4426
        %v4428 = vrot.slane %v4303, 5
        %v4429 = vrot.slane %v4428, 4
        %v4430 = vrot.slane %v3595, 5
        %v4431 = vsel %vm1235, %v4429, %v4430
        %v4432 = vrot.slane %v4430, 4
        %v4433 = vrot.slane %v3596, 5
        %v4434 = vsel %vm1235, %v4432, %v4433
        %v4435 = vrot.slane %v4304, 5
        %v4436 = vrot.slane %v4435, 4
        %v4437 = vrot.slane %v3598, 5
        %v4438 = vsel %vm1235, %v4436, %v4437
        %v4439 = vrot.slane %v4437, 4
        %v4440 = vrot.slane %v3599, 5
        %v4441 = vsel %vm1235, %v4439, %v4440
        %v4442 = vrot.slane %v4305, 5
        %v4443 = vrot.slane %v4442, 4
        %v4444 = vrot.slane %v3601, 5
        %v4445 = vsel %vm1235, %v4443, %v4444
        %v4446 = vrot.slane %v4444, 4
        %v4447 = vrot.slane %v3602, 5
        %v4448 = vsel %vm1235, %v4446, %v4447
        %v4449 = vrot.slane %v4306, 5
        %v4450 = vrot.slane %v4449, 4
        %v4451 = vrot.slane %v3604, 5
        %v4452 = vsel %vm1235, %v4450, %v4451
        %v4453 = vrot.slane %v4451, 4
        %v4454 = vrot.slane %v3605, 5
        %v4455 = vsel %vm1235, %v4453, %v4454
        %v4456 = vrot.slane %v4307, 5
        %v4457 = vrot.slane %v4456, 4
        %v4458 = vrot.slane %v3607, 5
        %v4459 = vsel %vm1235, %v4457, %v4458
        %v4460 = vrot.slane %v4458, 4
        %v4461 = vrot.slane %v3608, 5
        %v4462 = vsel %vm1235, %v4460, %v4461
        %v4463 = vrot.slane %v4308, 5
        %v4464 = vrot.slane %v4463, 4
        %v4465 = vrot.slane %v3610, 5
        %v4466 = vsel %vm1235, %v4464, %v4465
        %v4467 = vrot.slane %v4465, 4
        %v4468 = vrot.slane %v3611, 5
        %v4469 = vsel %vm1235, %v4467, %v4468
        %v4470 = vunpack.c.l.b16 %v4361
        %v4471 = vunpack.c.l.b16 %v4364
        %v4472 = vunpack.c.l.b16 %v4368
        %v4473 = vunpack.c.l.b16 %v4371
        %v4474 = vunpack.c.l.b16 %v4375
        %v4475 = vunpack.c.l.b16 %v4378
        %v4476 = vunpack.c.l.b16 %v4382
        %v4477 = vunpack.c.l.b16 %v4385
        %v4478 = vunpack.c.l.b16 %v4389
        %v4479 = vunpack.c.l.b16 %v4392
        %v4480 = vunpack.c.l.b16 %v4396
        %v4481 = vunpack.c.l.b16 %v4399
        %v4482 = vunpack.c.l.b16 %v4403
        %v4483 = vunpack.c.l.b16 %v4406
        %v4484 = vunpack.c.l.b16 %v4410
        %v4485 = vunpack.c.l.b16 %v4413
        %v4486 = vunpack.c.l.b16 %v4417
        %v4487 = vunpack.c.l.b16 %v4420
        %v4488 = vunpack.c.l.b16 %v4424
        %v4489 = vunpack.c.l.b16 %v4427
        %v4490 = vunpack.c.l.b16 %v4431
        %v4491 = vunpack.c.l.b16 %v4434
        %v4492 = vunpack.c.l.b16 %v4438
        %v4493 = vunpack.c.l.b16 %v4441
        %v4494 = vunpack.c.l.b16 %v4445
        %v4495 = vunpack.c.l.b16 %v4448
        %v4496 = vunpack.c.l.b16 %v4452
        %v4497 = vunpack.c.l.b16 %v4455
        %v4498 = vunpack.c.l.b16 %v4459
        %v4499 = vunpack.c.l.b16 %v4462
        %v4500 = vunpack.c.l.b16 %v4466
        %v4501 = vunpack.c.l.b16 %v4469
        %v4502 = vpack.c.b16 %v4471, %v4470
        %v4503 = vpack.c.b16 %v4473, %v4472
        %v4504 = vpack.c.b16 %v4475, %v4474
        %v4505 = vpack.c.b16 %v4477, %v4476
        %v4506 = vpack.c.b16 %v4479, %v4478
        %v4507 = vpack.c.b16 %v4481, %v4480
        %v4508 = vpack.c.b16 %v4483, %v4482
        %v4509 = vpack.c.b16 %v4485, %v4484
        %v4510 = vpack.c.b16 %v4487, %v4486
        %v4511 = vpack.c.b16 %v4489, %v4488
        %v4512 = vpack.c.b16 %v4491, %v4490
        %v4513 = vpack.c.b16 %v4493, %v4492
        %v4514 = vpack.c.b16 %v4495, %v4494
        %v4515 = vpack.c.b16 %v4497, %v4496
        %v4516 = vpack.c.b16 %v4499, %v4498
        %v4517 = vpack.c.b16 %v4501, %v4500
        %v4519 = vsel %vm678, %v4502, 0
        %v4522 = vsel %vm678, %v4503, 0
        %v4525 = vsel %vm678, %v4504, 0
        %v4528 = vsel %vm678, %v4505, 0
        %v4531 = vsel %vm678, %v4506, 0
        %v4534 = vsel %vm678, %v4507, 0
        %v4537 = vsel %vm678, %v4508, 0
        %v4540 = vsel %vm678, %v4509, 0
        %v4543 = vsel %vm678, %v4510, 0
        %v4546 = vsel %vm678, %v4511, 0
        %v4549 = vsel %vm678, %v4512, 0
        %v4552 = vsel %vm678, %v4513, 0
        %v4555 = vsel %vm678, %v4514, 0
        %v4558 = vsel %vm678, %v4515, 0
        %v4561 = vsel %vm678, %v4516, 0
        %v4564 = vsel %vm678, %v4517, 0
        %v4567 = vsel %vm727, %v4309, 0
        %4569 = vmatprep.subr.bf16.mxu0 0
        %4570 = vmatpush1.bf16.msra.mxu0 %v4567
        %4571 = vmatprep.subr.bf16.mxu0 0
        %4572 = vmatpush1.bf16.msra.mxu0 0
        %4573 = vmatprep.subr.bf16.mxu0 0
        %4574 = vmatpush1.bf16.msra.mxu0 0
        %4575 = vmatprep.subr.bf16.mxu0 0
        %4576 = vmatpush1.bf16.msra.mxu0 0
        %4577 = vmatprep.subr.bf16.mxu0 0
        %4578 = vmatpush1.bf16.msra.mxu0 0
        %4579 = vmatprep.subr.bf16.mxu0 0
        %4580 = vmatpush1.bf16.msra.mxu0 0
        %4581 = vmatprep.subr.bf16.mxu0 0
        %4582 = vmatpush1.bf16.msra.mxu0 0
        %4583 = vmatprep.subr.bf16.mxu0 0
        %4584 = vmatpush1.bf16.msra.mxu0 0
        %4585 = vmatprep.subr.bf16.mxu0 0
        %4586 = vmatpush1.bf16.msra.mxu0 0
        %4587 = vmatprep.subr.bf16.mxu0 0
        %4588 = vmatpush1.bf16.msra.mxu0 0
        %4589 = vmatprep.subr.bf16.mxu0 0
        %4590 = vmatpush1.bf16.msra.mxu0 0
        %4591 = vmatprep.subr.bf16.mxu0 0
        %4592 = vmatpush1.bf16.msra.mxu0 0
        %4593 = vmatprep.subr.bf16.mxu0 0
        %4594 = vmatpush1.bf16.msra.mxu0 0
        %4595 = vmatprep.subr.bf16.mxu0 0
        %4596 = vmatpush1.bf16.msra.mxu0 0
        %4597 = vmatprep.subr.bf16.mxu0 0
        %4598 = vmatpush1.bf16.msra.mxu0 0
        %4599 = vmatprep.subr.bf16.mxu0 0
        %4600 = vmatpush1.bf16.msra.mxu0 0
        %4601 = vmatprep.mubr.bf16.mxu0 0
        %4602 = vmatmul.mubr.bf16.gmra.mrb[0].mxu0 %v4519
        %v4603 = vpop.f32.mrb[0].mxu0
        %v4604 = vadd.f32 0.0, %v4603
        %v4605 = vpop.f32.mrb[0].mxu0
        %v4606 = vpop.f32.mrb[0].mxu0
        %v4607 = vadd.f32 0.0, %v4606
        %v4608 = vpop.f32.mrb[0].mxu0
        %4609 = vmatprep.mubr.bf16.mxu0 0
        %4610 = vmatmul.mubr.bf16.gmra.mrb[0].mxu0 %v4522
        %v4611 = vpop.f32.mrb[0].mxu0
        %v4612 = vadd.f32 0.0, %v4611
        %v4613 = vpop.f32.mrb[0].mxu0
        %v4614 = vpop.f32.mrb[0].mxu0
        %v4615 = vadd.f32 0.0, %v4614
        %v4616 = vpop.f32.mrb[0].mxu0
        %4617 = vmatprep.mubr.bf16.mxu0 0
        %4618 = vmatmul.mubr.bf16.gmra.mrb[0].mxu0 %v4525
        %v4619 = vpop.f32.mrb[0].mxu0
        %v4620 = vadd.f32 0.0, %v4619
        %v4621 = vpop.f32.mrb[0].mxu0
        %v4622 = vpop.f32.mrb[0].mxu0
        %v4623 = vadd.f32 0.0, %v4622
        %v4624 = vpop.f32.mrb[0].mxu0
        %4625 = vmatprep.mubr.bf16.mxu0 0
        %4626 = vmatmul.mubr.bf16.gmra.mrb[0].mxu0 %v4528
        %v4627 = vpop.f32.mrb[0].mxu0
        %v4628 = vadd.f32 0.0, %v4627
        %v4629 = vpop.f32.mrb[0].mxu0
        %v4630 = vpop.f32.mrb[0].mxu0
        %v4631 = vadd.f32 0.0, %v4630
        %v4632 = vpop.f32.mrb[0].mxu0
        %4633 = vmatprep.mubr.bf16.mxu0 0
        %4634 = vmatmul.mubr.bf16.gmra.mrb[0].mxu0 %v4531
        %v4635 = vpop.f32.mrb[0].mxu0
        %v4636 = vadd.f32 0.0, %v4635
        %v4637 = vpop.f32.mrb[0].mxu0
        %v4638 = vpop.f32.mrb[0].mxu0
        %v4639 = vadd.f32 0.0, %v4638
        %v4640 = vpop.f32.mrb[0].mxu0
        %4641 = vmatprep.mubr.bf16.mxu0 0
        %4642 = vmatmul.mubr.bf16.gmra.mrb[0].mxu0 %v4534
        %v4643 = vpop.f32.mrb[0].mxu0
        %v4644 = vadd.f32 0.0, %v4643
        %v4645 = vpop.f32.mrb[0].mxu0
        %v4646 = vpop.f32.mrb[0].mxu0
        %v4647 = vadd.f32 0.0, %v4646
        %v4648 = vpop.f32.mrb[0].mxu0
        %4649 = vmatprep.mubr.bf16.mxu0 0
        %4650 = vmatmul.mubr.bf16.gmra.mrb[0].mxu0 %v4537
        %v4651 = vpop.f32.mrb[0].mxu0
        %v4652 = vadd.f32 0.0, %v4651
        %v4653 = vpop.f32.mrb[0].mxu0
        %v4654 = vpop.f32.mrb[0].mxu0
        %v4655 = vadd.f32 0.0, %v4654
        %v4656 = vpop.f32.mrb[0].mxu0
        %4657 = vmatprep.mubr.bf16.mxu0 0
        %4658 = vmatmul.mubr.bf16.gmra.mrb[0].mxu0 %v4540
        %v4659 = vpop.f32.mrb[0].mxu0
        %v4660 = vadd.f32 0.0, %v4659
        %v4661 = vpop.f32.mrb[0].mxu0
        %v4662 = vpop.f32.mrb[0].mxu0
        %v4663 = vadd.f32 0.0, %v4662
        %v4664 = vpop.f32.mrb[0].mxu0
        %4665 = vmatprep.mubr.bf16.mxu0 0
        %4666 = vmatmul.mubr.bf16.gmra.mrb[0].mxu0 %v4543
        %v4667 = vpop.f32.mrb[0].mxu0
        %v4668 = vadd.f32 0.0, %v4667
        %v4669 = vpop.f32.mrb[0].mxu0
        %v4670 = vpop.f32.mrb[0].mxu0
        %v4671 = vadd.f32 0.0, %v4670
        %v4672 = vpop.f32.mrb[0].mxu0
        %4673 = vmatprep.mubr.bf16.mxu0 0
        %4674 = vmatmul.mubr.bf16.gmra.mrb[0].mxu0 %v4546
        %v4675 = vpop.f32.mrb[0].mxu0
        %v4676 = vadd.f32 0.0, %v4675
        %v4677 = vpop.f32.mrb[0].mxu0
        %v4678 = vpop.f32.mrb[0].mxu0
        %v4679 = vadd.f32 0.0, %v4678
        %v4680 = vpop.f32.mrb[0].mxu0
        %4681 = vmatprep.mubr.bf16.mxu0 0
        %4682 = vmatmul.mubr.bf16.gmra.mrb[0].mxu0 %v4549
        %v4683 = vpop.f32.mrb[0].mxu0
        %v4684 = vadd.f32 0.0, %v4683
        %v4685 = vpop.f32.mrb[0].mxu0
        %v4686 = vpop.f32.mrb[0].mxu0
        %v4687 = vadd.f32 0.0, %v4686
        %v4688 = vpop.f32.mrb[0].mxu0
        %4689 = vmatprep.mubr.bf16.mxu0 0
        %4690 = vmatmul.mubr.bf16.gmra.mrb[0].mxu0 %v4552
        %v4691 = vpop.f32.mrb[0].mxu0
        %v4692 = vadd.f32 0.0, %v4691
        %v4693 = vpop.f32.mrb[0].mxu0
        %v4694 = vpop.f32.mrb[0].mxu0
        %v4695 = vadd.f32 0.0, %v4694
        %v4696 = vpop.f32.mrb[0].mxu0
        %4697 = vmatprep.mubr.bf16.mxu0 0
        %4698 = vmatmul.mubr.bf16.gmra.mrb[0].mxu0 %v4555
        %v4699 = vpop.f32.mrb[0].mxu0
        %v4700 = vadd.f32 0.0, %v4699
        %v4701 = vpop.f32.mrb[0].mxu0
        %v4702 = vpop.f32.mrb[0].mxu0
        %v4703 = vadd.f32 0.0, %v4702
        %v4704 = vpop.f32.mrb[0].mxu0
        %4705 = vmatprep.mubr.bf16.mxu0 0
        %4706 = vmatmul.mubr.bf16.gmra.mrb[0].mxu0 %v4558
        %v4707 = vpop.f32.mrb[0].mxu0
        %v4708 = vadd.f32 0.0, %v4707
        %v4709 = vpop.f32.mrb[0].mxu0
        %v4710 = vpop.f32.mrb[0].mxu0
        %v4711 = vadd.f32 0.0, %v4710
        %v4712 = vpop.f32.mrb[0].mxu0
        %4713 = vmatprep.mubr.bf16.mxu0 0
        %4714 = vmatmul.mubr.bf16.gmra.mrb[0].mxu0 %v4561
        %v4715 = vpop.f32.mrb[0].mxu0
        %v4716 = vadd.f32 0.0, %v4715
        %v4717 = vpop.f32.mrb[0].mxu0
        %v4718 = vpop.f32.mrb[0].mxu0
        %v4719 = vadd.f32 0.0, %v4718
        %v4720 = vpop.f32.mrb[0].mxu0
        %4721 = vmatprep.mubr.bf16.mxu0 0
        %4722 = vmatmul.mubr.bf16.gmra.mrb[0].mxu0 %v4564
        %v4723 = vpop.f32.mrb[0].mxu0
        %v4724 = vadd.f32 0.0, %v4723
        %v4725 = vpop.f32.mrb[0].mxu0
        %v4726 = vpop.f32.mrb[0].mxu0
        %v4727 = vadd.f32 0.0, %v4726
        %v4728 = vpop.f32.mrb[0].mxu0
        %4729 = vdwg.mxu0
        %v4730 = vadd.f32 %v4261, %v4604
        %v4731 = vadd.f32 %v4262, %v4607
        %v4732 = vadd.f32 %v4263, %v4612
        %v4733 = vadd.f32 %v4264, %v4615
        %v4734 = vadd.f32 %v4265, %v4620
        %v4735 = vadd.f32 %v4266, %v4623
        %v4736 = vadd.f32 %v4267, %v4628
        %v4737 = vadd.f32 %v4268, %v4631
        %v4738 = vadd.f32 %v4269, %v4636
        %v4739 = vadd.f32 %v4270, %v4639
        %v4740 = vadd.f32 %v4271, %v4644
        %v4741 = vadd.f32 %v4272, %v4647
        %v4742 = vadd.f32 %v4273, %v4652
        %v4743 = vadd.f32 %v4274, %v4655
        %v4744 = vadd.f32 %v4275, %v4660
        %v4745 = vadd.f32 %v4276, %v4663
        %v4746 = vadd.f32 %v4277, %v4668
        %v4747 = vadd.f32 %v4278, %v4671
        %v4748 = vadd.f32 %v4279, %v4676
        %v4749 = vadd.f32 %v4280, %v4679
        %v4750 = vadd.f32 %v4281, %v4684
        %v4751 = vadd.f32 %v4282, %v4687
        %v4752 = vadd.f32 %v4283, %v4692
        %v4753 = vadd.f32 %v4284, %v4695
        %v4754 = vadd.f32 %v4285, %v4700
        %v4755 = vadd.f32 %v4286, %v4703
        %v4756 = vadd.f32 %v4287, %v4708
        %v4757 = vadd.f32 %v4288, %v4711
        %v4758 = vadd.f32 %v4289, %v4716
        %v4759 = vadd.f32 %v4290, %v4719
        %v4760 = vadd.f32 %v4291, %v4724
        %v4761 = vadd.f32 %v4292, %v4727
        %v4762 = vld [vmem:[%s2] sm:$0x1]
        %v4764 = vlaneseq
        %v4765 = vshrl.u32 %v4764, 7
        %v4766 = vsub.s32 0, %v4765
        %v4767 = vrot.slane %v4762, %v4766
        %v4769 = vadd.f32 %v4730, %v4767
        %v4770 = vadd.f32 %v4731, %v4767
        %v4771 = vadd.f32 %v4732, %v4767
        %v4772 = vadd.f32 %v4733, %v4767
        %v4773 = vadd.f32 %v4734, %v4767
        %v4774 = vadd.f32 %v4735, %v4767
        %v4775 = vadd.f32 %v4736, %v4767
        %v4776 = vadd.f32 %v4737, %v4767
        %v4777 = vadd.f32 %v4738, %v4767
        %v4778 = vadd.f32 %v4739, %v4767
        %v4779 = vadd.f32 %v4740, %v4767
        %v4780 = vadd.f32 %v4741, %v4767
        %v4781 = vadd.f32 %v4742, %v4767
        %v4782 = vadd.f32 %v4743, %v4767
        %v4783 = vadd.f32 %v4744, %v4767
        %v4784 = vadd.f32 %v4745, %v4767
        %v4785 = vadd.f32 %v4746, %v4767
        %v4786 = vadd.f32 %v4747, %v4767
        %v4787 = vadd.f32 %v4748, %v4767
        %v4788 = vadd.f32 %v4749, %v4767
        %v4789 = vadd.f32 %v4750, %v4767
        %v4790 = vadd.f32 %v4751, %v4767
        %v4791 = vadd.f32 %v4752, %v4767
        %v4792 = vadd.f32 %v4753, %v4767
        %v4793 = vadd.f32 %v4754, %v4767
        %v4794 = vadd.f32 %v4755, %v4767
        %v4795 = vadd.f32 %v4756, %v4767
        %v4796 = vadd.f32 %v4757, %v4767
        %v4797 = vadd.f32 %v4758, %v4767
        %v4798 = vadd.f32 %v4759, %v4767
        %v4799 = vadd.f32 %v4760, %v4767
        %v4800 = vadd.f32 %v4761, %v4767
        %v4801 = vmax.f32 %v4769, 0.0
        %v4802 = vmax.f32 %v4770, 0.0
        %v4803 = vmax.f32 %v4771, 0.0
        %v4804 = vmax.f32 %v4772, 0.0
        %v4805 = vmax.f32 %v4773, 0.0
        %v4806 = vmax.f32 %v4774, 0.0
        %v4807 = vmax.f32 %v4775, 0.0
        %v4808 = vmax.f32 %v4776, 0.0
        %v4809 = vmax.f32 %v4777, 0.0
        %v4810 = vmax.f32 %v4778, 0.0
        %v4811 = vmax.f32 %v4779, 0.0
        %v4812 = vmax.f32 %v4780, 0.0
        %v4813 = vmax.f32 %v4781, 0.0
        %v4814 = vmax.f32 %v4782, 0.0
        %v4815 = vmax.f32 %v4783, 0.0
        %v4816 = vmax.f32 %v4784, 0.0
        %v4817 = vmax.f32 %v4785, 0.0
        %v4818 = vmax.f32 %v4786, 0.0
        %v4819 = vmax.f32 %v4787, 0.0
        %v4820 = vmax.f32 %v4788, 0.0
        %v4821 = vmax.f32 %v4789, 0.0
        %v4822 = vmax.f32 %v4790, 0.0
        %v4823 = vmax.f32 %v4791, 0.0
        %v4824 = vmax.f32 %v4792, 0.0
        %v4825 = vmax.f32 %v4793, 0.0
        %v4826 = vmax.f32 %v4794, 0.0
        %v4827 = vmax.f32 %v4795, 0.0
        %v4828 = vmax.f32 %v4796, 0.0
        %v4829 = vmax.f32 %v4797, 0.0
        %v4830 = vmax.f32 %v4798, 0.0
        %v4831 = vmax.f32 %v4799, 0.0
        %v4832 = vmax.f32 %v4800, 0.0
        %vm4833 = vcmask 261120
        %4834 = vst.msk [vmem:[%s177] sm:$0xff] %vm4833, %v4801
        %4835 = vst.msk [vmem:[%s177 + $0x8] sm:$0xff] %vm4833, %v4802
        %4836 = vst.msk [vmem:[%s177 + $0x10] sm:$0xff] %vm4833, %v4803
        %4837 = vst.msk [vmem:[%s177 + $0x18] sm:$0xff] %vm4833, %v4804
        %4838 = vst.msk [vmem:[%s177 + $0x20] sm:$0xff] %vm4833, %v4805
        %4839 = vst.msk [vmem:[%s177 + $0x28] sm:$0xff] %vm4833, %v4806
        %4840 = vst.msk [vmem:[%s177 + $0x30] sm:$0xff] %vm4833, %v4807
        %4841 = vst.msk [vmem:[%s177 + $0x38] sm:$0xff] %vm4833, %v4808
        %4842 = vst.msk [vmem:[%s177 + $0x40] sm:$0xff] %vm4833, %v4809
        %4843 = vst.msk [vmem:[%s177 + $0x48] sm:$0xff] %vm4833, %v4810
        %4844 = vst.msk [vmem:[%s177 + $0x50] sm:$0xff] %vm4833, %v4811
        %4845 = vst.msk [vmem:[%s177 + $0x58] sm:$0xff] %vm4833, %v4812
        %4846 = vst.msk [vmem:[%s177 + $0x60] sm:$0xff] %vm4833, %v4813
        %4847 = vst.msk [vmem:[%s177 + $0x68] sm:$0xff] %vm4833, %v4814
        %4848 = vst.msk [vmem:[%s177 + $0x70] sm:$0xff] %vm4833, %v4815
        %4849 = vst.msk [vmem:[%s177 + $0x78] sm:$0xff] %vm4833, %v4816
        %4850 = vst.msk [vmem:[%s177 + $0x80] sm:$0xff] %vm4833, %v4817
        %4851 = vst.msk [vmem:[%s177 + $0x88] sm:$0xff] %vm4833, %v4818
        %4852 = vst.msk [vmem:[%s177 + $0x90] sm:$0xff] %vm4833, %v4819
        %4853 = vst.msk [vmem:[%s177 + $0x98] sm:$0xff] %vm4833, %v4820
        %4854 = vst.msk [vmem:[%s177 + $0xa0] sm:$0xff] %vm4833, %v4821
        %4855 = vst.msk [vmem:[%s177 + $0xa8] sm:$0xff] %vm4833, %v4822
        %4856 = vst.msk [vmem:[%s177 + $0xb0] sm:$0xff] %vm4833, %v4823
        %4857 = vst.msk [vmem:[%s177 + $0xb8] sm:$0xff] %vm4833, %v4824
        %4858 = vst.msk [vmem:[%s177 + $0xc0] sm:$0xff] %vm4833, %v4825
        %4859 = vst.msk [vmem:[%s177 + $0xc8] sm:$0xff] %vm4833, %v4826
        %4860 = vst.msk [vmem:[%s177 + $0xd0] sm:$0xff] %vm4833, %v4827
        %4861 = vst.msk [vmem:[%s177 + $0xd8] sm:$0xff] %vm4833, %v4828
        %4862 = vst.msk [vmem:[%s177 + $0xe0] sm:$0xff] %vm4833, %v4829
        %4863 = vst.msk [vmem:[%s177 + $0xe8] sm:$0xff] %vm4833, %v4830
        %4864 = vst.msk [vmem:[%s177 + $0xf0] sm:$0xff] %vm4833, %v4831
        %4865 = vst.msk [vmem:[%s177 + $0xf8] sm:$0xff] %vm4833, %v4832
        %s4866 = sand.u32 %s107, 1
        %s4867 = scalar_lea.sflag [#allocation3], %s4866
        %s4868 = sand.u32 %s107, 1
        %s4869 = smul.addr %s4868, 256
        %s4870 = scalar_lea.vmem [#allocation2], %s4869
        // Predicated region
        $region33: #{tpu_custom_call.1} parent=31 // pred_check
          %p4871 = pneg %p117
        $region34: #{tpu_custom_call.1} parent=31 // pred_check_branch
          %4873 = sbr.rel (%p4871) target = $region36
        $region35: #{tpu_custom_call.1} parent=31 // pred_region
          %s4874 = smul.u32 16, %s22
          %s4876 = ssub.s32 4096, 4096
          %4877 = vsyncadd %s4867, %s4876
          %s4878 = smul.addr %s4874, 2
          %s4879 = smul.addr %s21, 32
          %s4880 = sadd.s32 %s4878, %s4879
          %s4881 = smul.addr %s4880, 128
          %s4882 = scalar_lea.hbm %s3, %s4881
          %s4883 = sshll.u32 %s4870, 4
          %s4884 = int_to_ptr.vmem [resolvable:$true] %s4883
          %4889 = dma.vmem_to_hbm [thread:$0]  %s4884, 4096, %s4882, %s4867, 128, 128, 8
        $region36: #{tpu_custom_call.1} parent=31 // pred_fallthru
          _
      $region32: #{tpu_custom_call.1} parent=5 // pred_fallthru
        _
      %p4890 = scmp.le.s32.totalorder 2, %s12
      // Predicated region
      $region37: #{tpu_custom_call.1} parent=5 // pred_check
        %p4891 = pneg %p4890
      $region38: #{tpu_custom_call.1} parent=5 // pred_check_branch
        %4893 = sbr.rel (%p4891) target = $region40
      $region39: #{tpu_custom_call.1} parent=5 // pred_region
        %s4894 = ssub.s32 %s12, 2
        // Predicated region
        $region41: #{tpu_custom_call.1} parent=39 // pred_check
          %p4895 = pneg %p123
        $region42: #{tpu_custom_call.1} parent=39 // pred_check_branch
          %4897 = sbr.rel (%p4895) target = $region44
        $region43: #{tpu_custom_call.1} parent=39 // pred_region
          %s4898 = sand.u32 %s108, 1
          %s4899 = scalar_lea.sflag [#allocation3], %s4898
          %s4900 = sand.u32 %s108, 1
          %s4901 = smul.addr %s4900, 256
          %s4902 = scalar_lea.vmem [#allocation2], %s4901
          %4903 = dma.done %s4899, 4096
        $region44: #{tpu_custom_call.1} parent=39 // pred_fallthru
          _
      $region40: #{tpu_custom_call.1} parent=5 // pred_fallthru
        _
    $region6: #{tpu_custom_call.1} parent=1 // loop_footer
      %s16 = sadd.s32 1, %s12
    $region7: #{tpu_custom_call.1} parent=1 // loop_footer_branch
      %11 = sbr.rel target = $region3
    $region8: #{tpu_custom_call.1} parent=1 // loop_exit
      _
    %4904 = vsyncpa [#allocation3], 1
    %s4905 = scalar_lea.sflag [#allocation3], 1
    %4906 = vsyncpa %s4905, 1

</llo_original>
